<compile_context>
chip_gen: v5e
topology: v5e:2x2
jax: 0.10.0
libtpu: 0.0.40
codegen_flags: <defaults>
</compile_context>

<pallas_src>
import jax
import jax.numpy as jnp
from jax import lax
from jax.scipy.special import erf
from jax.experimental import pallas as pl
from jax.experimental.pallas import tpu as pltpu

# --------------------------------------------------------------------------------------
# 3-21G basis for hydrogen (exponent, contraction-coefficient) pairs per shell.
# --------------------------------------------------------------------------------------
H_321G = (
    ((5.4471780, 0.1562850), (0.8245470, 0.9046910)),
    ((0.1831920, 1.0000000),),
)
MAXP = 2               # max primitives per contracted function (padded)
NB = 4                 # contracted basis functions: 2 H atoms x 2 shells (3-21G)
N_SWEEPS = 8           # cyclic-Jacobi sweeps (a 4x4 converges in <5; 8 = safety margin)
JACOBI_PAIRS = tuple((p, q) for p in range(NB) for q in range(p + 1, NB))


def _build_basis(atom_position):
    """Return (exps, coefs, centers) arrays of shape (N, MAXP), (N, MAXP), (N, 3)."""
    # TODO(synk): only hydrogen 3-21G shells are tabulated (module uses atomzs = [1, 1]).
    exps, coefs, centers = [], [], []
    for ia in range(atom_position.shape[0]):
        for shell in H_321G:
            e = jnp.array([p[0] for p in shell], jnp.float32)
            c = jnp.array([p[1] for p in shell], jnp.float32)
            d = c * (2.0 * e / jnp.pi) ** 0.75           # primitive normalization
            ss = jnp.sum(d[:, None] * d[None, :] *
                         (jnp.pi / (e[:, None] + e[None, :])) ** 1.5)
            d = d / jnp.sqrt(ss)                          # contracted normalization
            pad = MAXP - e.shape[0]
            exps.append(jnp.pad(e, (0, pad), constant_values=1.0))
            coefs.append(jnp.pad(d, (0, pad), constant_values=0.0))
            centers.append(atom_position[ia])
    return jnp.stack(exps), jnp.stack(coefs), jnp.stack(centers)


def _boys0(t):
    tsafe = jnp.where(t < 1e-11, 1.0, t)
    small = 1.0 - t / 3.0
    big = 0.5 * jnp.sqrt(jnp.pi / tsafe) * erf(jnp.sqrt(tsafe))
    return jnp.where(t < 1e-11, small, big)


def _one_electron(al, co, ce, charges, nuc_pos):
    """Overlap S, kinetic T, nuclear-attraction V over contracted s Gaussians."""
    a = al[:, None, :, None]
    b = al[None, :, None, :]
    da = co[:, None, :, None]
    db = co[None, :, None, :]
    A = ce[:, None, None, None, :]
    B = ce[None, :, None, None, :]
    p = a + b
    mu = a * b / p
    AB2 = jnp.sum((A - B) ** 2, axis=-1)                       # (N,N,1,1)
    Sp = (jnp.pi / p) ** 1.5 * jnp.exp(-mu * AB2)
    Tp = mu * (3.0 - 2.0 * mu * AB2) * Sp
    Pc = (a[..., None] * A + b[..., None] * B) / p[..., None]  # (N,N,P,P,3)
    Vp = jnp.zeros_like(Sp)
    for k in range(nuc_pos.shape[0]):
        PC2 = jnp.sum((Pc - nuc_pos[k]) ** 2, axis=-1)
        Vp = Vp - charges[k] * (2.0 * jnp.pi / p) * jnp.exp(-mu * AB2) * _boys0(p * PC2)
    dd = da * db
    return (jnp.sum(dd * Sp, axis=(2, 3)),
            jnp.sum(dd * Tp, axis=(2, 3)),
            jnp.sum(dd * Vp, axis=(2, 3)))


def _two_electron(al, co, ce):
    """(mu nu | la si) 4-index ERI tensor over contracted s Gaussians."""
    N, P = al.shape

    def rs(x, pos):
        shp = [1] * 8
        shp[pos] = N
        shp[pos + 4] = P
        return x.reshape(shp)

    def rc(pos):
        shp = [1] * 8 + [3]
        shp[pos] = N
        return ce.reshape(shp)

    a, b, c, d = (rs(al, i) for i in range(4))
    da, db, dc, dd = (rs(co, i) for i in range(4))
    A, B, C, D = (rc(i) for i in range(4))
    p = a + b
    q = c + d
    AB2 = jnp.sum((A - B) ** 2, axis=-1)
    CD2 = jnp.sum((C - D) ** 2, axis=-1)
    Pc = (a[..., None] * A + b[..., None] * B) / p[..., None]
    Qc = (c[..., None] * C + d[..., None] * D) / q[..., None]
    PQ2 = jnp.sum((Pc - Qc) ** 2, axis=-1)
    pref = 2.0 * jnp.pi ** 2.5 / (p * q * jnp.sqrt(p + q))
    eprim = (pref * jnp.exp(-a * b / p * AB2) * jnp.exp(-c * d / q * CD2)
             * _boys0(p * q / (p + q) * PQ2))
    coef = da * db * dc * dd
    return jnp.sum(coef * eprim, axis=(4, 5, 6, 7))             # (N,N,N,N)


# --------------------------------------------------------------------------------------
# The single fused SCF Pallas kernel
#   inputs : W2 (NB*NB, NB, NB)  combined two-electron Fock weights (VMEM)
#            H  (NB, NB)         core Hamiltonian                    (VMEM)
#            X  (NB, NB)         symmetric S^{-1/2}                  (VMEM)
#   output : electronic energy   (1, 1) scalar                       (SMEM)
# --------------------------------------------------------------------------------------
def _make_scf_kernel(n_occ, n_iter):
    f32 = jnp.float32

    def kernel(w2_ref, h_ref, x_ref, e_ref):
        H = h_ref[...]
        X = x_ref[...]

        row_i = lax.broadcasted_iota(jnp.int32, (NB, NB), 0)
        col_i = lax.broadcasted_iota(jnp.int32, (NB, NB), 1)
        eye = (row_i == col_i).astype(f32)

        def mm(a, b):
            # (NB,NB) @ (NB,NB) as an unrolled sum of rank-1 outer products (VPU only).
            acc = a[:, 0:1] * b[0:1, :]
            for k in range(1, NB):
                acc = acc + a[:, k:k + 1] * b[k:k + 1, :]
            return acc

        def fock_g(D):
            # G[m,n] = sum_{l,s} D[l,s] * W2[l*NB+s, m, n]
            g = D[0:1, 0:1] * w2_ref[0]
            for l in range(NB):
                for s in range(NB):
                    if l == 0 and s == 0:
                        continue
                    g = g + D[l:l + 1, s:s + 1] * w2_ref[l * NB + s]
            return g

        def jacobi_sweep(_, carry):
            # One cyclic sweep over all off-diagonal (p,q) pairs of a symmetric 4x4.
            A, V, VT = carry
            for (p, q) in JACOBI_PAIRS:
                app = A[p:p + 1, p:p + 1]
                aqq = A[q:q + 1, q:q + 1]
                apq = A[p:p + 1, q:q + 1]
                small = jnp.abs(apq) < 1e-12
                apq_s = jnp.where(small, 1.0, apq)
                tau = (aqq - app) / (2.0 * apq_s)
                sgn = jnp.where(tau >= 0.0, 1.0, -1.0)
                t = sgn / (jnp.abs(tau) + jnp.sqrt(1.0 + tau * tau))
                c = lax.rsqrt(1.0 + t * t)
                s = t * c
                c = jnp.where(small, 1.0, c)
                s = jnp.where(small, 0.0, s)
                # Rotation J (and its transpose) built from elementary index masks.
                dpp = ((row_i == p) & (col_i == p)).astype(f32)
                dqq = ((row_i == q) & (col_i == q)).astype(f32)
                dpq = ((row_i == p) & (col_i == q)).astype(f32)
                dqp = ((row_i == q) & (col_i == p)).astype(f32)
                J = eye + (c - 1.0) * (dpp + dqq) + s * dpq - s * dqp
                JT = eye + (c - 1.0) * (dpp + dqq) - s * dpq + s * dqp
                A = mm(JT, mm(A, J))
                V = mm(V, J)       # eigenvector columns
                VT = mm(JT, VT)    # V^T, tracked explicitly to avoid in-kernel transposes
            return (A, V, VT)

        def scf_iter(_, D):
            F = H + fock_g(D)
            Fp = mm(X, mm(F, X))                                   # X == X^T (symmetrized)
            A, V, VT = lax.fori_loop(0, N_SWEEPS, jacobi_sweep, (Fp, eye, eye))
            # Eigenvalues sit on diag(A); rank them to occupy the n_occ lowest orbitals.
            iota_r = lax.broadcasted_iota(jnp.int32, (1, NB), 1)
            e_row = A[0:1, 0:1] * (iota_r == 0).astype(f32)
            for k in range(1, NB):
                e_row = e_row + A[k:k + 1, k:k + 1] * (iota_r == k).astype(f32)
            rank = jnp.zeros_like(e_row)
            for j in range(NB):
                ej = A[j:j + 1, j:j + 1]
                rank = rank + (ej < e_row).astype(f32)
                rank = rank + ((ej == e_row) & (j < iota_r)).astype(f32)
            w_occ = 2.0 * (rank < float(n_occ)).astype(f32)        # (1,NB) occupations
            C = mm(X, V)                                           # AO-basis MO coeffs
            CT = mm(VT, X)                                         # == C^T
            return mm(C * w_occ, CT)                               # new density matrix

        D = lax.fori_loop(0, n_iter, scf_iter, jnp.zeros((NB, NB), f32))

        # Rebuild F from the converged density so E uses a consistent (D, F) pair.
        F = H + fock_g(D)
        e_ref[0, 0] = 0.5 * jnp.sum(D * (H + F))

    return kernel


def run_scf(W2, Hcore, X, n_occ, n_iter):
    vmem = pl.BlockSpec(memory_space=pltpu.MemorySpace.VMEM)
    e = pl.pallas_call(
        _make_scf_kernel(n_occ, n_iter),
        out_shape=jax.ShapeDtypeStruct((1, 1), jnp.float32),
        in_specs=[vmem, vmem, vmem],
        out_specs=pl.BlockSpec(memory_space=pltpu.MemorySpace.SMEM),
        compiler_params=pltpu.CompilerParams(vmem_limit_bytes=16 * 1024 * 1024),
    )(W2, Hcore, X)
    return e[0, 0]


# --------------------------------------------------------------------------------------
# Restricted Hartree-Fock driver (equivalent of dqc.HF(mol).run().energy())
# --------------------------------------------------------------------------------------
def hf_energy(atom_position, charges, n_occ, n_iter=40):
    al, co, ce = _build_basis(atom_position)
    assert al.shape[0] == NB

    S, T, V = _one_electron(al, co, ce, charges, atom_position)
    eri = _two_electron(al, co, ce)
    Hcore = (T + V).astype(jnp.float32)

    # Combined two-electron Fock weights: W2[l,s,m,n] = (mn|ls) - 0.5*(ml|ns)
    W2 = (jnp.einsum('mnls->lsmn', eri) - 0.5 * jnp.einsum('mlns->lsmn', eri))
    W2 = W2.reshape(NB * NB, NB, NB).astype(jnp.float32)

    # symmetric orthogonalization X = S^{-1/2}
    # TODO(synk): one-time dense symmetric eigensolver kept in XLA (no Pallas equivalent).
    s_val, s_vec = jnp.linalg.eigh(S)
    X = (s_vec * (1.0 / jnp.sqrt(s_val))[None, :]) @ s_vec.T
    X = (0.5 * (X + X.T)).astype(jnp.float32)        # exactly symmetric

    e_elec = run_scf(W2, Hcore, X, n_occ, n_iter)

    # nuclear-nuclear repulsion
    diff = atom_position[:, None, :] - atom_position[None, :, :]
    r = jnp.sqrt(jnp.sum(diff ** 2, axis=-1) + jnp.eye(atom_position.shape[0]))
    e_nuc = jnp.sum(jnp.triu(charges[:, None] * charges[None, :] / r, k=1))

    return e_elec + e_nuc


hf_energy_jit = jax.jit(hf_energy, static_argnames=("n_occ", "n_iter"))


if __name__ == "__main__":
    # The module's forward() takes no inputs; its parameters are fixed in __init__.
    # PRNGKey(0) only adds a (zero-scaled) deterministic perturbation.
    key = jax.random.PRNGKey(0)
    atomz_list = [1, 1]
    atom_position = jnp.array([[1.0, 0.0, 0.0], [-1.0, 0.0, 0.0]], jnp.float32)
    atom_position = atom_position + 0.0 * jax.random.normal(
        key, atom_position.shape, jnp.float32)
    charges = jnp.array(atomz_list, jnp.float32)
    n_occ = sum(atomz_list) // 2

    energy = hf_energy_jit(atom_position, charges, n_occ=n_occ, n_iter=40)
    energy = jax.block_until_ready(energy)

    e = float(energy)
    assert jnp.isfinite(energy) and (-2.0 < e < 0.0), f"unexpected HF energy {e}"
    print("KERNEL_OK")
</pallas_src>

<mosaic_0001>
module attributes {stable_mosaic.version = 11 : i64} {
  func.func @kernel(%arg0: memref<16x4x4xf32, #tpu.memory_space<vmem>>, %arg1: memref<4x4xf32, #tpu.memory_space<vmem>>, %arg2: memref<4x4xf32, #tpu.memory_space<vmem>>, %arg3: memref<1x1xf32, #tpu.memory_space<smem>>) attributes {dimension_semantics = [], scalar_prefetch = 0 : i64, scratch_operands = 0 : i64, tpu.core_type = #tpu.core_type<tc>} {
    %c0 = arith.constant 0 : index
    %c0_0 = arith.constant 0 : index
    %0 = vector.load %arg1[%c0, %c0_0] : memref<4x4xf32, #tpu.memory_space<vmem>>, vector<4x4xf32>
    %c0_1 = arith.constant 0 : index
    %c0_2 = arith.constant 0 : index
    %1 = vector.load %arg2[%c0_1, %c0_2] : memref<4x4xf32, #tpu.memory_space<vmem>>, vector<4x4xf32>
    %2 = tpu.iota {dimensions = array<i32: 0>} : vector<4x4xi32>
    %3 = tpu.iota {dimensions = array<i32: 1>} : vector<4x4xi32>
    %4 = arith.cmpi eq, %2, %3 : vector<4x4xi32>
    %5 = arith.extui %4 : vector<4x4xi1> to vector<4x4xi32>
    %6 = arith.sitofp %5 : vector<4x4xi32> to vector<4x4xf32>
    %cst = arith.constant 0.000000e+00 : f32
    %7 = vector.broadcast %cst : f32 to vector<4x4xf32>
    %c0_i32 = arith.constant 0 : i32
    %c40_i32 = arith.constant 40 : i32
    %8 = arith.addi %c0_i32, %c40_i32 : i32
    %c1_i32 = arith.constant 1 : i32
    %9 = scf.for %arg4 = %c0_i32 to %8 step %c1_i32 iter_args(%arg5 = %7) -> (vector<4x4xf32>)  : i32 {
      %114 = vector.extract_strided_slice %arg5 {offsets = [0, 0], sizes = [1, 1], strides = [1, 1]} : vector<4x4xf32> to vector<1x1xf32>
      %c0_40 = arith.constant 0 : index
      %c0_41 = arith.constant 0 : index
      %c0_42 = arith.constant 0 : index
      %115 = vector.load %arg0[%c0_40, %c0_41, %c0_42] : memref<16x4x4xf32, #tpu.memory_space<vmem>>, vector<1x4x4xf32>
      %116 = vector.shape_cast %115 : vector<1x4x4xf32> to vector<4x4xf32>
      %117 = vector.broadcast %114 : vector<1x1xf32> to vector<4x4xf32>
      %118 = arith.mulf %117, %116 : vector<4x4xf32>
      %119 = vector.extract_strided_slice %arg5 {offsets = [0, 1], sizes = [1, 1], strides = [1, 1]} : vector<4x4xf32> to vector<1x1xf32>
      %c1_43 = arith.constant 1 : index
      %c0_44 = arith.constant 0 : index
      %c0_45 = arith.constant 0 : index
      %120 = vector.load %arg0[%c1_43, %c0_44, %c0_45] : memref<16x4x4xf32, #tpu.memory_space<vmem>>, vector<1x4x4xf32>
      %121 = vector.shape_cast %120 : vector<1x4x4xf32> to vector<4x4xf32>
      %122 = vector.broadcast %119 : vector<1x1xf32> to vector<4x4xf32>
      %123 = arith.mulf %122, %121 : vector<4x4xf32>
      %124 = arith.addf %118, %123 : vector<4x4xf32>
      %125 = vector.extract_strided_slice %arg5 {offsets = [0, 2], sizes = [1, 1], strides = [1, 1]} : vector<4x4xf32> to vector<1x1xf32>
      %c2_46 = arith.constant 2 : index
      %c0_47 = arith.constant 0 : index
      %c0_48 = arith.constant 0 : index
      %126 = vector.load %arg0[%c2_46, %c0_47, %c0_48] : memref<16x4x4xf32, #tpu.memory_space<vmem>>, vector<1x4x4xf32>
      %127 = vector.shape_cast %126 : vector<1x4x4xf32> to vector<4x4xf32>
      %128 = vector.broadcast %125 : vector<1x1xf32> to vector<4x4xf32>
      %129 = arith.mulf %128, %127 : vector<4x4xf32>
      %130 = arith.addf %124, %129 : vector<4x4xf32>
      %131 = vector.extract_strided_slice %arg5 {offsets = [0, 3], sizes = [1, 1], strides = [1, 1]} : vector<4x4xf32> to vector<1x1xf32>
      %c3_49 = arith.constant 3 : index
      %c0_50 = arith.constant 0 : index
      %c0_51 = arith.constant 0 : index
      %132 = vector.load %arg0[%c3_49, %c0_50, %c0_51] : memref<16x4x4xf32, #tpu.memory_space<vmem>>, vector<1x4x4xf32>
      %133 = vector.shape_cast %132 : vector<1x4x4xf32> to vector<4x4xf32>
      %134 = vector.broadcast %131 : vector<1x1xf32> to vector<4x4xf32>
      %135 = arith.mulf %134, %133 : vector<4x4xf32>
      %136 = arith.addf %130, %135 : vector<4x4xf32>
      %137 = vector.extract_strided_slice %arg5 {offsets = [1, 0], sizes = [1, 1], strides = [1, 1]} : vector<4x4xf32> to vector<1x1xf32>
      %c4_52 = arith.constant 4 : index
      %c0_53 = arith.constant 0 : index
      %c0_54 = arith.constant 0 : index
      %138 = vector.load %arg0[%c4_52, %c0_53, %c0_54] : memref<16x4x4xf32, #tpu.memory_space<vmem>>, vector<1x4x4xf32>
      %139 = vector.shape_cast %138 : vector<1x4x4xf32> to vector<4x4xf32>
      %140 = vector.broadcast %137 : vector<1x1xf32> to vector<4x4xf32>
      %141 = arith.mulf %140, %139 : vector<4x4xf32>
      %142 = arith.addf %136, %141 : vector<4x4xf32>
      %143 = vector.extract_strided_slice %arg5 {offsets = [1, 1], sizes = [1, 1], strides = [1, 1]} : vector<4x4xf32> to vector<1x1xf32>
      %c5_55 = arith.constant 5 : index
      %c0_56 = arith.constant 0 : index
      %c0_57 = arith.constant 0 : index
      %144 = vector.load %arg0[%c5_55, %c0_56, %c0_57] : memref<16x4x4xf32, #tpu.memory_space<vmem>>, vector<1x4x4xf32>
      %145 = vector.shape_cast %144 : vector<1x4x4xf32> to vector<4x4xf32>
      %146 = vector.broadcast %143 : vector<1x1xf32> to vector<4x4xf32>
      %147 = arith.mulf %146, %145 : vector<4x4xf32>
      %148 = arith.addf %142, %147 : vector<4x4xf32>
      %149 = vector.extract_strided_slice %arg5 {offsets = [1, 2], sizes = [1, 1], strides = [1, 1]} : vector<4x4xf32> to vector<1x1xf32>
      %c6_58 = arith.constant 6 : index
      %c0_59 = arith.constant 0 : index
      %c0_60 = arith.constant 0 : index
      %150 = vector.load %arg0[%c6_58, %c0_59, %c0_60] : memref<16x4x4xf32, #tpu.memory_space<vmem>>, vector<1x4x4xf32>
      %151 = vector.shape_cast %150 : vector<1x4x4xf32> to vector<4x4xf32>
      %152 = vector.broadcast %149 : vector<1x1xf32> to vector<4x4xf32>
      %153 = arith.mulf %152, %151 : vector<4x4xf32>
      %154 = arith.addf %148, %153 : vector<4x4xf32>
      %155 = vector.extract_strided_slice %arg5 {offsets = [1, 3], sizes = [1, 1], strides = [1, 1]} : vector<4x4xf32> to vector<1x1xf32>
      %c7_61 = arith.constant 7 : index
      %c0_62 = arith.constant 0 : index
      %c0_63 = arith.constant 0 : index
      %156 = vector.load %arg0[%c7_61, %c0_62, %c0_63] : memref<16x4x4xf32, #tpu.memory_space<vmem>>, vector<1x4x4xf32>
      %157 = vector.shape_cast %156 : vector<1x4x4xf32> to vector<4x4xf32>
      %158 = vector.broadcast %155 : vector<1x1xf32> to vector<4x4xf32>
      %159 = arith.mulf %158, %157 : vector<4x4xf32>
      %160 = arith.addf %154, %159 : vector<4x4xf32>
      %161 = vector.extract_strided_slice %arg5 {offsets = [2, 0], sizes = [1, 1], strides = [1, 1]} : vector<4x4xf32> to vector<1x1xf32>
      %c8_64 = arith.constant 8 : index
      %c0_65 = arith.constant 0 : index
      %c0_66 = arith.constant 0 : index
      %162 = vector.load %arg0[%c8_64, %c0_65, %c0_66] : memref<16x4x4xf32, #tpu.memory_space<vmem>>, vector<1x4x4xf32>
      %163 = vector.shape_cast %162 : vector<1x4x4xf32> to vector<4x4xf32>
      %164 = vector.broadcast %161 : vector<1x1xf32> to vector<4x4xf32>
      %165 = arith.mulf %164, %163 : vector<4x4xf32>
      %166 = arith.addf %160, %165 : vector<4x4xf32>
      %167 = vector.extract_strided_slice %arg5 {offsets = [2, 1], sizes = [1, 1], strides = [1, 1]} : vector<4x4xf32> to vector<1x1xf32>
      %c9_67 = arith.constant 9 : index
      %c0_68 = arith.constant 0 : index
      %c0_69 = arith.constant 0 : index
      %168 = vector.load %arg0[%c9_67, %c0_68, %c0_69] : memref<16x4x4xf32, #tpu.memory_space<vmem>>, vector<1x4x4xf32>
      %169 = vector.shape_cast %168 : vector<1x4x4xf32> to vector<4x4xf32>
      %170 = vector.broadcast %167 : vector<1x1xf32> to vector<4x4xf32>
      %171 = arith.mulf %170, %169 : vector<4x4xf32>
      %172 = arith.addf %166, %171 : vector<4x4xf32>
      %173 = vector.extract_strided_slice %arg5 {offsets = [2, 2], sizes = [1, 1], strides = [1, 1]} : vector<4x4xf32> to vector<1x1xf32>
      %c10_70 = arith.constant 10 : index
      %c0_71 = arith.constant 0 : index
      %c0_72 = arith.constant 0 : index
      %174 = vector.load %arg0[%c10_70, %c0_71, %c0_72] : memref<16x4x4xf32, #tpu.memory_space<vmem>>, vector<1x4x4xf32>
      %175 = vector.shape_cast %174 : vector<1x4x4xf32> to vector<4x4xf32>
      %176 = vector.broadcast %173 : vector<1x1xf32> to vector<4x4xf32>
      %177 = arith.mulf %176, %175 : vector<4x4xf32>
      %178 = arith.addf %172, %177 : vector<4x4xf32>
      %179 = vector.extract_strided_slice %arg5 {offsets = [2, 3], sizes = [1, 1], strides = [1, 1]} : vector<4x4xf32> to vector<1x1xf32>
      %c11_73 = arith.constant 11 : index
      %c0_74 = arith.constant 0 : index
      %c0_75 = arith.constant 0 : index
      %180 = vector.load %arg0[%c11_73, %c0_74, %c0_75] : memref<16x4x4xf32, #tpu.memory_space<vmem>>, vector<1x4x4xf32>
      %181 = vector.shape_cast %180 : vector<1x4x4xf32> to vector<4x4xf32>
      %182 = vector.broadcast %179 : vector<1x1xf32> to vector<4x4xf32>
      %183 = arith.mulf %182, %181 : vector<4x4xf32>
      %184 = arith.addf %178, %183 : vector<4x4xf32>
      %185 = vector.extract_strided_slice %arg5 {offsets = [3, 0], sizes = [1, 1], strides = [1, 1]} : vector<4x4xf32> to vector<1x1xf32>
      %c12_76 = arith.constant 12 : index
      %c0_77 = arith.constant 0 : index
      %c0_78 = arith.constant 0 : index
      %186 = vector.load %arg0[%c12_76, %c0_77, %c0_78] : memref<16x4x4xf32, #tpu.memory_space<vmem>>, vector<1x4x4xf32>
      %187 = vector.shape_cast %186 : vector<1x4x4xf32> to vector<4x4xf32>
      %188 = vector.broadcast %185 : vector<1x1xf32> to vector<4x4xf32>
      %189 = arith.mulf %188, %187 : vector<4x4xf32>
      %190 = arith.addf %184, %189 : vector<4x4xf32>
      %191 = vector.extract_strided_slice %arg5 {offsets = [3, 1], sizes = [1, 1], strides = [1, 1]} : vector<4x4xf32> to vector<1x1xf32>
      %c13_79 = arith.constant 13 : index
      %c0_80 = arith.constant 0 : index
      %c0_81 = arith.constant 0 : index
      %192 = vector.load %arg0[%c13_79, %c0_80, %c0_81] : memref<16x4x4xf32, #tpu.memory_space<vmem>>, vector<1x4x4xf32>
      %193 = vector.shape_cast %192 : vector<1x4x4xf32> to vector<4x4xf32>
      %194 = vector.broadcast %191 : vector<1x1xf32> to vector<4x4xf32>
      %195 = arith.mulf %194, %193 : vector<4x4xf32>
      %196 = arith.addf %190, %195 : vector<4x4xf32>
      %197 = vector.extract_strided_slice %arg5 {offsets = [3, 2], sizes = [1, 1], strides = [1, 1]} : vector<4x4xf32> to vector<1x1xf32>
      %c14_82 = arith.constant 14 : index
      %c0_83 = arith.constant 0 : index
      %c0_84 = arith.constant 0 : index
      %198 = vector.load %arg0[%c14_82, %c0_83, %c0_84] : memref<16x4x4xf32, #tpu.memory_space<vmem>>, vector<1x4x4xf32>
      %199 = vector.shape_cast %198 : vector<1x4x4xf32> to vector<4x4xf32>
      %200 = vector.broadcast %197 : vector<1x1xf32> to vector<4x4xf32>
      %201 = arith.mulf %200, %199 : vector<4x4xf32>
      %202 = arith.addf %196, %201 : vector<4x4xf32>
      %203 = vector.extract_strided_slice %arg5 {offsets = [3, 3], sizes = [1, 1], strides = [1, 1]} : vector<4x4xf32> to vector<1x1xf32>
      %c15_85 = arith.constant 15 : index
      %c0_86 = arith.constant 0 : index
      %c0_87 = arith.constant 0 : index
      %204 = vector.load %arg0[%c15_85, %c0_86, %c0_87] : memref<16x4x4xf32, #tpu.memory_space<vmem>>, vector<1x4x4xf32>
      %205 = vector.shape_cast %204 : vector<1x4x4xf32> to vector<4x4xf32>
      %206 = vector.broadcast %203 : vector<1x1xf32> to vector<4x4xf32>
      %207 = arith.mulf %206, %205 : vector<4x4xf32>
      %208 = arith.addf %202, %207 : vector<4x4xf32>
      %209 = arith.addf %0, %208 : vector<4x4xf32>
      %210 = vector.extract_strided_slice %209 {offsets = [0, 0], sizes = [4, 1], strides = [1, 1]} : vector<4x4xf32> to vector<4x1xf32>
      %211 = vector.extract_strided_slice %1 {offsets = [0, 0], sizes = [1, 4], strides = [1, 1]} : vector<4x4xf32> to vector<1x4xf32>
      %212 = vector.broadcast %210 : vector<4x1xf32> to vector<4x4xf32>
      %213 = vector.broadcast %211 : vector<1x4xf32> to vector<4x4xf32>
      %214 = arith.mulf %212, %213 : vector<4x4xf32>
      %215 = vector.extract_strided_slice %209 {offsets = [0, 1], sizes = [4, 1], strides = [1, 1]} : vector<4x4xf32> to vector<4x1xf32>
      %216 = vector.extract_strided_slice %1 {offsets = [1, 0], sizes = [1, 4], strides = [1, 1]} : vector<4x4xf32> to vector<1x4xf32>
      %217 = vector.broadcast %215 : vector<4x1xf32> to vector<4x4xf32>
      %218 = vector.broadcast %216 : vector<1x4xf32> to vector<4x4xf32>
      %219 = arith.mulf %217, %218 : vector<4x4xf32>
      %220 = arith.addf %214, %219 : vector<4x4xf32>
      %221 = vector.extract_strided_slice %209 {offsets = [0, 2], sizes = [4, 1], strides = [1, 1]} : vector<4x4xf32> to vector<4x1xf32>
      %222 = vector.extract_strided_slice %1 {offsets = [2, 0], sizes = [1, 4], strides = [1, 1]} : vector<4x4xf32> to vector<1x4xf32>
      %223 = vector.broadcast %221 : vector<4x1xf32> to vector<4x4xf32>
      %224 = vector.broadcast %222 : vector<1x4xf32> to vector<4x4xf32>
      %225 = arith.mulf %223, %224 : vector<4x4xf32>
      %226 = arith.addf %220, %225 : vector<4x4xf32>
      %227 = vector.extract_strided_slice %209 {offsets = [0, 3], sizes = [4, 1], strides = [1, 1]} : vector<4x4xf32> to vector<4x1xf32>
      %228 = vector.extract_strided_slice %1 {offsets = [3, 0], sizes = [1, 4], strides = [1, 1]} : vector<4x4xf32> to vector<1x4xf32>
      %229 = vector.broadcast %227 : vector<4x1xf32> to vector<4x4xf32>
      %230 = vector.broadcast %228 : vector<1x4xf32> to vector<4x4xf32>
      %231 = arith.mulf %229, %230 : vector<4x4xf32>
      %232 = arith.addf %226, %231 : vector<4x4xf32>
      %233 = vector.extract_strided_slice %1 {offsets = [0, 0], sizes = [4, 1], strides = [1, 1]} : vector<4x4xf32> to vector<4x1xf32>
      %234 = vector.extract_strided_slice %232 {offsets = [0, 0], sizes = [1, 4], strides = [1, 1]} : vector<4x4xf32> to vector<1x4xf32>
      %235 = vector.broadcast %233 : vector<4x1xf32> to vector<4x4xf32>
      %236 = vector.broadcast %234 : vector<1x4xf32> to vector<4x4xf32>
      %237 = arith.mulf %235, %236 : vector<4x4xf32>
      %238 = vector.extract_strided_slice %1 {offsets = [0, 1], sizes = [4, 1], strides = [1, 1]} : vector<4x4xf32> to vector<4x1xf32>
      %239 = vector.extract_strided_slice %232 {offsets = [1, 0], sizes = [1, 4], strides = [1, 1]} : vector<4x4xf32> to vector<1x4xf32>
      %240 = vector.broadcast %238 : vector<4x1xf32> to vector<4x4xf32>
      %241 = vector.broadcast %239 : vector<1x4xf32> to vector<4x4xf32>
      %242 = arith.mulf %240, %241 : vector<4x4xf32>
      %243 = arith.addf %237, %242 : vector<4x4xf32>
      %244 = vector.extract_strided_slice %1 {offsets = [0, 2], sizes = [4, 1], strides = [1, 1]} : vector<4x4xf32> to vector<4x1xf32>
      %245 = vector.extract_strided_slice %232 {offsets = [2, 0], sizes = [1, 4], strides = [1, 1]} : vector<4x4xf32> to vector<1x4xf32>
      %246 = vector.broadcast %244 : vector<4x1xf32> to vector<4x4xf32>
      %247 = vector.broadcast %245 : vector<1x4xf32> to vector<4x4xf32>
      %248 = arith.mulf %246, %247 : vector<4x4xf32>
      %249 = arith.addf %243, %248 : vector<4x4xf32>
      %250 = vector.extract_strided_slice %1 {offsets = [0, 3], sizes = [4, 1], strides = [1, 1]} : vector<4x4xf32> to vector<4x1xf32>
      %251 = vector.extract_strided_slice %232 {offsets = [3, 0], sizes = [1, 4], strides = [1, 1]} : vector<4x4xf32> to vector<1x4xf32>
      %252 = vector.broadcast %250 : vector<4x1xf32> to vector<4x4xf32>
      %253 = vector.broadcast %251 : vector<1x4xf32> to vector<4x4xf32>
      %254 = arith.mulf %252, %253 : vector<4x4xf32>
      %255 = arith.addf %249, %254 : vector<4x4xf32>
      %c0_i32_88 = arith.constant 0 : i32
      %c8_i32 = arith.constant 8 : i32
      %256 = arith.addi %c0_i32_88, %c8_i32 : i32
      %c1_i32_89 = arith.constant 1 : i32
      %257:3 = scf.for %arg6 = %c0_i32_88 to %256 step %c1_i32_89 iter_args(%arg7 = %255, %arg8 = %6, %arg9 = %6) -> (vector<4x4xf32>, vector<4x4xf32>, vector<4x4xf32>)  : i32 {
        %424 = vector.extract_strided_slice %arg7 {offsets = [0, 0], sizes = [1, 1], strides = [1, 1]} : vector<4x4xf32> to vector<1x1xf32>
        %425 = vector.extract_strided_slice %arg7 {offsets = [1, 1], sizes = [1, 1], strides = [1, 1]} : vector<4x4xf32> to vector<1x1xf32>
        %426 = vector.extract_strided_slice %arg7 {offsets = [0, 1], sizes = [1, 1], strides = [1, 1]} : vector<4x4xf32> to vector<1x1xf32>
        %427 = math.absf %426 : vector<1x1xf32>
        %cst_99 = arith.constant 9.99999996E-13 : f32
        %428 = vector.broadcast %cst_99 : f32 to vector<1x1xf32>
        %429 = arith.cmpf olt, %427, %428 : vector<1x1xf32>
        %cst_100 = arith.constant 1.000000e+00 : f32
        %430 = vector.broadcast %cst_100 : f32 to vector<1x1xf32>
        %431 = arith.select %429, %430, %426 : vector<1x1xi1>, vector<1x1xf32>
        %432 = arith.subf %425, %424 : vector<1x1xf32>
        %cst_101 = arith.constant 2.000000e+00 : f32
        %433 = vector.broadcast %cst_101 : f32 to vector<1x1xf32>
        %434 = arith.mulf %433, %431 : vector<1x1xf32>
        %435 = arith.divf %432, %434 : vector<1x1xf32>
        %cst_102 = arith.constant 0.000000e+00 : f32
        %436 = vector.broadcast %cst_102 : f32 to vector<1x1xf32>
        %437 = arith.cmpf oge, %435, %436 : vector<1x1xf32>
        %cst_103 = arith.constant 1.000000e+00 : f32
        %cst_104 = arith.constant -1.000000e+00 : f32
        %438 = vector.broadcast %cst_103 : f32 to vector<1x1xf32>
        %439 = vector.broadcast %cst_104 : f32 to vector<1x1xf32>
        %440 = arith.select %437, %438, %439 : vector<1x1xi1>, vector<1x1xf32>
        %441 = math.absf %435 : vector<1x1xf32>
        %442 = arith.mulf %435, %435 : vector<1x1xf32>
        %cst_105 = arith.constant 1.000000e+00 : f32
        %443 = vector.broadcast %cst_105 : f32 to vector<1x1xf32>
        %444 = arith.addf %443, %442 : vector<1x1xf32>
        %445 = math.sqrt %444 : vector<1x1xf32>
        %446 = arith.addf %441, %445 : vector<1x1xf32>
        %447 = arith.divf %440, %446 : vector<1x1xf32>
        %448 = arith.mulf %447, %447 : vector<1x1xf32>
        %cst_106 = arith.constant 1.000000e+00 : f32
        %449 = vector.broadcast %cst_106 : f32 to vector<1x1xf32>
        %450 = arith.addf %449, %448 : vector<1x1xf32>
        %451 = math.rsqrt %450 : vector<1x1xf32>
        %452 = arith.mulf %447, %451 : vector<1x1xf32>
        %cst_107 = arith.constant 1.000000e+00 : f32
        %453 = vector.broadcast %cst_107 : f32 to vector<1x1xf32>
        %454 = arith.select %429, %453, %451 : vector<1x1xi1>, vector<1x1xf32>
        %cst_108 = arith.constant 0.000000e+00 : f32
        %455 = vector.broadcast %cst_108 : f32 to vector<1x1xf32>
        %456 = arith.select %429, %455, %452 : vector<1x1xi1>, vector<1x1xf32>
        %c0_i32_109 = arith.constant 0 : i32
        %457 = vector.broadcast %c0_i32_109 : i32 to vector<4x4xi32>
        %458 = arith.cmpi eq, %2, %457 : vector<4x4xi32>
        %c0_i32_110 = arith.constant 0 : i32
        %459 = vector.broadcast %c0_i32_110 : i32 to vector<4x4xi32>
        %460 = arith.cmpi eq, %3, %459 : vector<4x4xi32>
        %461 = arith.andi %458, %460 : vector<4x4xi1>
        %462 = arith.extui %461 : vector<4x4xi1> to vector<4x4xi32>
        %463 = arith.sitofp %462 : vector<4x4xi32> to vector<4x4xf32>
        %c1_i32_111 = arith.constant 1 : i32
        %464 = vector.broadcast %c1_i32_111 : i32 to vector<4x4xi32>
        %465 = arith.cmpi eq, %2, %464 : vector<4x4xi32>
        %c1_i32_112 = arith.constant 1 : i32
        %466 = vector.broadcast %c1_i32_112 : i32 to vector<4x4xi32>
        %467 = arith.cmpi eq, %3, %466 : vector<4x4xi32>
        %468 = arith.andi %465, %467 : vector<4x4xi1>
        %469 = arith.extui %468 : vector<4x4xi1> to vector<4x4xi32>
        %470 = arith.sitofp %469 : vector<4x4xi32> to vector<4x4xf32>
        %c0_i32_113 = arith.constant 0 : i32
        %471 = vector.broadcast %c0_i32_113 : i32 to vector<4x4xi32>
        %472 = arith.cmpi eq, %2, %471 : vector<4x4xi32>
        %c1_i32_114 = arith.constant 1 : i32
        %473 = vector.broadcast %c1_i32_114 : i32 to vector<4x4xi32>
        %474 = arith.cmpi eq, %3, %473 : vector<4x4xi32>
        %475 = arith.andi %472, %474 : vector<4x4xi1>
        %476 = arith.extui %475 : vector<4x4xi1> to vector<4x4xi32>
        %477 = arith.sitofp %476 : vector<4x4xi32> to vector<4x4xf32>
        %c1_i32_115 = arith.constant 1 : i32
        %478 = vector.broadcast %c1_i32_115 : i32 to vector<4x4xi32>
        %479 = arith.cmpi eq, %2, %478 : vector<4x4xi32>
        %c0_i32_116 = arith.constant 0 : i32
        %480 = vector.broadcast %c0_i32_116 : i32 to vector<4x4xi32>
        %481 = arith.cmpi eq, %3, %480 : vector<4x4xi32>
        %482 = arith.andi %479, %481 : vector<4x4xi1>
        %483 = arith.extui %482 : vector<4x4xi1> to vector<4x4xi32>
        %484 = arith.sitofp %483 : vector<4x4xi32> to vector<4x4xf32>
        %cst_117 = arith.constant 1.000000e+00 : f32
        %485 = vector.broadcast %cst_117 : f32 to vector<1x1xf32>
        %486 = arith.subf %454, %485 : vector<1x1xf32>
        %487 = arith.addf %463, %470 : vector<4x4xf32>
        %488 = vector.broadcast %486 : vector<1x1xf32> to vector<4x4xf32>
        %489 = arith.mulf %488, %487 : vector<4x4xf32>
        %490 = arith.addf %6, %489 : vector<4x4xf32>
        %491 = vector.broadcast %456 : vector<1x1xf32> to vector<4x4xf32>
        %492 = arith.mulf %491, %477 : vector<4x4xf32>
        %493 = arith.addf %490, %492 : vector<4x4xf32>
        %494 = vector.broadcast %456 : vector<1x1xf32> to vector<4x4xf32>
        %495 = arith.mulf %494, %484 : vector<4x4xf32>
        %496 = arith.subf %493, %495 : vector<4x4xf32>
        %cst_118 = arith.constant 1.000000e+00 : f32
        %497 = vector.broadcast %cst_118 : f32 to vector<1x1xf32>
        %498 = arith.subf %454, %497 : vector<1x1xf32>
        %499 = arith.addf %463, %470 : vector<4x4xf32>
        %500 = vector.broadcast %498 : vector<1x1xf32> to vector<4x4xf32>
        %501 = arith.mulf %500, %499 : vector<4x4xf32>
        %502 = arith.addf %6, %501 : vector<4x4xf32>
        %503 = vector.broadcast %456 : vector<1x1xf32> to vector<4x4xf32>
        %504 = arith.mulf %503, %477 : vector<4x4xf32>
        %505 = arith.subf %502, %504 : vector<4x4xf32>
        %506 = vector.broadcast %456 : vector<1x1xf32> to vector<4x4xf32>
        %507 = arith.mulf %506, %484 : vector<4x4xf32>
        %508 = arith.addf %505, %507 : vector<4x4xf32>
        %509 = vector.extract_strided_slice %arg7 {offsets = [0, 0], sizes = [4, 1], strides = [1, 1]} : vector<4x4xf32> to vector<4x1xf32>
        %510 = vector.extract_strided_slice %496 {offsets = [0, 0], sizes = [1, 4], strides = [1, 1]} : vector<4x4xf32> to vector<1x4xf32>
        %511 = vector.broadcast %509 : vector<4x1xf32> to vector<4x4xf32>
        %512 = vector.broadcast %510 : vector<1x4xf32> to vector<4x4xf32>
        %513 = arith.mulf %511, %512 : vector<4x4xf32>
        %514 = vector.extract_strided_slice %arg7 {offsets = [0, 1], sizes = [4, 1], strides = [1, 1]} : vector<4x4xf32> to vector<4x1xf32>
        %515 = vector.extract_strided_slice %496 {offsets = [1, 0], sizes = [1, 4], strides = [1, 1]} : vector<4x4xf32> to vector<1x4xf32>
        %516 = vector.broadcast %514 : vector<4x1xf32> to vector<4x4xf32>
        %517 = vector.broadcast %515 : vector<1x4xf32> to vector<4x4xf32>
        %518 = arith.mulf %516, %517 : vector<4x4xf32>
        %519 = arith.addf %513, %518 : vector<4x4xf32>
        %520 = vector.extract_strided_slice %arg7 {offsets = [0, 2], sizes = [4, 1], strides = [1, 1]} : vector<4x4xf32> to vector<4x1xf32>
        %521 = vector.extract_strided_slice %496 {offsets = [2, 0], sizes = [1, 4], strides = [1, 1]} : vector<4x4xf32> to vector<1x4xf32>
        %522 = vector.broadcast %520 : vector<4x1xf32> to vector<4x4xf32>
        %523 = vector.broadcast %521 : vector<1x4xf32> to vector<4x4xf32>
        %524 = arith.mulf %522, %523 : vector<4x4xf32>
        %525 = arith.addf %519, %524 : vector<4x4xf32>
        %526 = vector.extract_strided_slice %arg7 {offsets = [0, 3], sizes = [4, 1], strides = [1, 1]} : vector<4x4xf32> to vector<4x1xf32>
        %527 = vector.extract_strided_slice %496 {offsets = [3, 0], sizes = [1, 4], strides = [1, 1]} : vector<4x4xf32> to vector<1x4xf32>
        %528 = vector.broadcast %526 : vector<4x1xf32> to vector<4x4xf32>
        %529 = vector.broadcast %527 : vector<1x4xf32> to vector<4x4xf32>
        %530 = arith.mulf %528, %529 : vector<4x4xf32>
        %531 = arith.addf %525, %530 : vector<4x4xf32>
        %532 = vector.extract_strided_slice %508 {offsets = [0, 0], sizes = [4, 1], strides = [1, 1]} : vector<4x4xf32> to vector<4x1xf32>
        %533 = vector.extract_strided_slice %531 {offsets = [0, 0], sizes = [1, 4], strides = [1, 1]} : vector<4x4xf32> to vector<1x4xf32>
        %534 = vector.broadcast %532 : vector<4x1xf32> to vector<4x4xf32>
        %535 = vector.broadcast %533 : vector<1x4xf32> to vector<4x4xf32>
        %536 = arith.mulf %534, %535 : vector<4x4xf32>
        %537 = vector.extract_strided_slice %508 {offsets = [0, 1], sizes = [4, 1], strides = [1, 1]} : vector<4x4xf32> to vector<4x1xf32>
        %538 = vector.extract_strided_slice %531 {offsets = [1, 0], sizes = [1, 4], strides = [1, 1]} : vector<4x4xf32> to vector<1x4xf32>
        %539 = vector.broadcast %537 : vector<4x1xf32> to vector<4x4xf32>
        %540 = vector.broadcast %538 : vector<1x4xf32> to vector<4x4xf32>
        %541 = arith.mulf %539, %540 : vector<4x4xf32>
        %542 = arith.addf %536, %541 : vector<4x4xf32>
        %543 = vector.extract_strided_slice %508 {offsets = [0, 2], sizes = [4, 1], strides = [1, 1]} : vector<4x4xf32> to vector<4x1xf32>
        %544 = vector.extract_strided_slice %531 {offsets = [2, 0], sizes = [1, 4], strides = [1, 1]} : vector<4x4xf32> to vector<1x4xf32>
        %545 = vector.broadcast %543 : vector<4x1xf32> to vector<4x4xf32>
        %546 = vector.broadcast %544 : vector<1x4xf32> to vector<4x4xf32>
        %547 = arith.mulf %545, %546 : vector<4x4xf32>
        %548 = arith.addf %542, %547 : vector<4x4xf32>
        %549 = vector.extract_strided_slice %508 {offsets = [0, 3], sizes = [4, 1], strides = [1, 1]} : vector<4x4xf32> to vector<4x1xf32>
        %550 = vector.extract_strided_slice %531 {offsets = [3, 0], sizes = [1, 4], strides = [1, 1]} : vector<4x4xf32> to vector<1x4xf32>
        %551 = vector.broadcast %549 : vector<4x1xf32> to vector<4x4xf32>
        %552 = vector.broadcast %550 : vector<1x4xf32> to vector<4x4xf32>
        %553 = arith.mulf %551, %552 : vector<4x4xf32>
        %554 = arith.addf %548, %553 : vector<4x4xf32>
        %555 = vector.extract_strided_slice %arg8 {offsets = [0, 0], sizes = [4, 1], strides = [1, 1]} : vector<4x4xf32> to vector<4x1xf32>
        %556 = vector.extract_strided_slice %496 {offsets = [0, 0], sizes = [1, 4], strides = [1, 1]} : vector<4x4xf32> to vector<1x4xf32>
        %557 = vector.broadcast %555 : vector<4x1xf32> to vector<4x4xf32>
        %558 = vector.broadcast %556 : vector<1x4xf32> to vector<4x4xf32>
        %559 = arith.mulf %557, %558 : vector<4x4xf32>
        %560 = vector.extract_strided_slice %arg8 {offsets = [0, 1], sizes = [4, 1], strides = [1, 1]} : vector<4x4xf32> to vector<4x1xf32>
        %561 = vector.extract_strided_slice %496 {offsets = [1, 0], sizes = [1, 4], strides = [1, 1]} : vector<4x4xf32> to vector<1x4xf32>
        %562 = vector.broadcast %560 : vector<4x1xf32> to vector<4x4xf32>
        %563 = vector.broadcast %561 : vector<1x4xf32> to vector<4x4xf32>
        %564 = arith.mulf %562, %563 : vector<4x4xf32>
        %565 = arith.addf %559, %564 : vector<4x4xf32>
        %566 = vector.extract_strided_slice %arg8 {offsets = [0, 2], sizes = [4, 1], strides = [1, 1]} : vector<4x4xf32> to vector<4x1xf32>
        %567 = vector.extract_strided_slice %496 {offsets = [2, 0], sizes = [1, 4], strides = [1, 1]} : vector<4x4xf32> to vector<1x4xf32>
        %568 = vector.broadcast %566 : vector<4x1xf32> to vector<4x4xf32>
        %569 = vector.broadcast %567 : vector<1x4xf32> to vector<4x4xf32>
        %570 = arith.mulf %568, %569 : vector<4x4xf32>
        %571 = arith.addf %565, %570 : vector<4x4xf32>
        %572 = vector.extract_strided_slice %arg8 {offsets = [0, 3], sizes = [4, 1], strides = [1, 1]} : vector<4x4xf32> to vector<4x1xf32>
        %573 = vector.extract_strided_slice %496 {offsets = [3, 0], sizes = [1, 4], strides = [1, 1]} : vector<4x4xf32> to vector<1x4xf32>
        %574 = vector.broadcast %572 : vector<4x1xf32> to vector<4x4xf32>
        %575 = vector.broadcast %573 : vector<1x4xf32> to vector<4x4xf32>
        %576 = arith.mulf %574, %575 : vector<4x4xf32>
        %577 = arith.addf %571, %576 : vector<4x4xf32>
        %578 = vector.extract_strided_slice %508 {offsets = [0, 0], sizes = [4, 1], strides = [1, 1]} : vector<4x4xf32> to vector<4x1xf32>
        %579 = vector.extract_strided_slice %arg9 {offsets = [0, 0], sizes = [1, 4], strides = [1, 1]} : vector<4x4xf32> to vector<1x4xf32>
        %580 = vector.broadcast %578 : vector<4x1xf32> to vector<4x4xf32>
        %581 = vector.broadcast %579 : vector<1x4xf32> to vector<4x4xf32>
        %582 = arith.mulf %580, %581 : vector<4x4xf32>
        %583 = vector.extract_strided_slice %508 {offsets = [0, 1], sizes = [4, 1], strides = [1, 1]} : vector<4x4xf32> to vector<4x1xf32>
        %584 = vector.extract_strided_slice %arg9 {offsets = [1, 0], sizes = [1, 4], strides = [1, 1]} : vector<4x4xf32> to vector<1x4xf32>
        %585 = vector.broadcast %583 : vector<4x1xf32> to vector<4x4xf32>
        %586 = vector.broadcast %584 : vector<1x4xf32> to vector<4x4xf32>
        %587 = arith.mulf %585, %586 : vector<4x4xf32>
        %588 = arith.addf %582, %587 : vector<4x4xf32>
        %589 = vector.extract_strided_slice %508 {offsets = [0, 2], sizes = [4, 1], strides = [1, 1]} : vector<4x4xf32> to vector<4x1xf32>
        %590 = vector.extract_strided_slice %arg9 {offsets = [2, 0], sizes = [1, 4], strides = [1, 1]} : vector<4x4xf32> to vector<1x4xf32>
        %591 = vector.broadcast %589 : vector<4x1xf32> to vector<4x4xf32>
        %592 = vector.broadcast %590 : vector<1x4xf32> to vector<4x4xf32>
        %593 = arith.mulf %591, %592 : vector<4x4xf32>
        %594 = arith.addf %588, %593 : vector<4x4xf32>
        %595 = vector.extract_strided_slice %508 {offsets = [0, 3], sizes = [4, 1], strides = [1, 1]} : vector<4x4xf32> to vector<4x1xf32>
        %596 = vector.extract_strided_slice %arg9 {offsets = [3, 0], sizes = [1, 4], strides = [1, 1]} : vector<4x4xf32> to vector<1x4xf32>
        %597 = vector.broadcast %595 : vector<4x1xf32> to vector<4x4xf32>
        %598 = vector.broadcast %596 : vector<1x4xf32> to vector<4x4xf32>
        %599 = arith.mulf %597, %598 : vector<4x4xf32>
        %600 = arith.addf %594, %599 : vector<4x4xf32>
        %601 = vector.extract_strided_slice %554 {offsets = [0, 0], sizes = [1, 1], strides = [1, 1]} : vector<4x4xf32> to vector<1x1xf32>
        %602 = vector.extract_strided_slice %554 {offsets = [2, 2], sizes = [1, 1], strides = [1, 1]} : vector<4x4xf32> to vector<1x1xf32>
        %603 = vector.extract_strided_slice %554 {offsets = [0, 2], sizes = [1, 1], strides = [1, 1]} : vector<4x4xf32> to vector<1x1xf32>
        %604 = math.absf %603 : vector<1x1xf32>
        %cst_119 = arith.constant 9.99999996E-13 : f32
        %605 = vector.broadcast %cst_119 : f32 to vector<1x1xf32>
        %606 = arith.cmpf olt, %604, %605 : vector<1x1xf32>
        %cst_120 = arith.constant 1.000000e+00 : f32
        %607 = vector.broadcast %cst_120 : f32 to vector<1x1xf32>
        %608 = arith.select %606, %607, %603 : vector<1x1xi1>, vector<1x1xf32>
        %609 = arith.subf %602, %601 : vector<1x1xf32>
        %cst_121 = arith.constant 2.000000e+00 : f32
        %610 = vector.broadcast %cst_121 : f32 to vector<1x1xf32>
        %611 = arith.mulf %610, %608 : vector<1x1xf32>
        %612 = arith.divf %609, %611 : vector<1x1xf32>
        %cst_122 = arith.constant 0.000000e+00 : f32
        %613 = vector.broadcast %cst_122 : f32 to vector<1x1xf32>
        %614 = arith.cmpf oge, %612, %613 : vector<1x1xf32>
        %cst_123 = arith.constant 1.000000e+00 : f32
        %cst_124 = arith.constant -1.000000e+00 : f32
        %615 = vector.broadcast %cst_123 : f32 to vector<1x1xf32>
        %616 = vector.broadcast %cst_124 : f32 to vector<1x1xf32>
        %617 = arith.select %614, %615, %616 : vector<1x1xi1>, vector<1x1xf32>
        %618 = math.absf %612 : vector<1x1xf32>
        %619 = arith.mulf %612, %612 : vector<1x1xf32>
        %cst_125 = arith.constant 1.000000e+00 : f32
        %620 = vector.broadcast %cst_125 : f32 to vector<1x1xf32>
        %621 = arith.addf %620, %619 : vector<1x1xf32>
        %622 = math.sqrt %621 : vector<1x1xf32>
        %623 = arith.addf %618, %622 : vector<1x1xf32>
        %624 = arith.divf %617, %623 : vector<1x1xf32>
        %625 = arith.mulf %624, %624 : vector<1x1xf32>
        %cst_126 = arith.constant 1.000000e+00 : f32
        %626 = vector.broadcast %cst_126 : f32 to vector<1x1xf32>
        %627 = arith.addf %626, %625 : vector<1x1xf32>
        %628 = math.rsqrt %627 : vector<1x1xf32>
        %629 = arith.mulf %624, %628 : vector<1x1xf32>
        %cst_127 = arith.constant 1.000000e+00 : f32
        %630 = vector.broadcast %cst_127 : f32 to vector<1x1xf32>
        %631 = arith.select %606, %630, %628 : vector<1x1xi1>, vector<1x1xf32>
        %cst_128 = arith.constant 0.000000e+00 : f32
        %632 = vector.broadcast %cst_128 : f32 to vector<1x1xf32>
        %633 = arith.select %606, %632, %629 : vector<1x1xi1>, vector<1x1xf32>
        %c0_i32_129 = arith.constant 0 : i32
        %634 = vector.broadcast %c0_i32_129 : i32 to vector<4x4xi32>
        %635 = arith.cmpi eq, %2, %634 : vector<4x4xi32>
        %c0_i32_130 = arith.constant 0 : i32
        %636 = vector.broadcast %c0_i32_130 : i32 to vector<4x4xi32>
        %637 = arith.cmpi eq, %3, %636 : vector<4x4xi32>
        %638 = arith.andi %635, %637 : vector<4x4xi1>
        %639 = arith.extui %638 : vector<4x4xi1> to vector<4x4xi32>
        %640 = arith.sitofp %639 : vector<4x4xi32> to vector<4x4xf32>
        %c2_i32_131 = arith.constant 2 : i32
        %641 = vector.broadcast %c2_i32_131 : i32 to vector<4x4xi32>
        %642 = arith.cmpi eq, %2, %641 : vector<4x4xi32>
        %c2_i32_132 = arith.constant 2 : i32
        %643 = vector.broadcast %c2_i32_132 : i32 to vector<4x4xi32>
        %644 = arith.cmpi eq, %3, %643 : vector<4x4xi32>
        %645 = arith.andi %642, %644 : vector<4x4xi1>
        %646 = arith.extui %645 : vector<4x4xi1> to vector<4x4xi32>
        %647 = arith.sitofp %646 : vector<4x4xi32> to vector<4x4xf32>
        %c0_i32_133 = arith.constant 0 : i32
        %648 = vector.broadcast %c0_i32_133 : i32 to vector<4x4xi32>
        %649 = arith.cmpi eq, %2, %648 : vector<4x4xi32>
        %c2_i32_134 = arith.constant 2 : i32
        %650 = vector.broadcast %c2_i32_134 : i32 to vector<4x4xi32>
        %651 = arith.cmpi eq, %3, %650 : vector<4x4xi32>
        %652 = arith.andi %649, %651 : vector<4x4xi1>
        %653 = arith.extui %652 : vector<4x4xi1> to vector<4x4xi32>
        %654 = arith.sitofp %653 : vector<4x4xi32> to vector<4x4xf32>
        %c2_i32_135 = arith.constant 2 : i32
        %655 = vector.broadcast %c2_i32_135 : i32 to vector<4x4xi32>
        %656 = arith.cmpi eq, %2, %655 : vector<4x4xi32>
        %c0_i32_136 = arith.constant 0 : i32
        %657 = vector.broadcast %c0_i32_136 : i32 to vector<4x4xi32>
        %658 = arith.cmpi eq, %3, %657 : vector<4x4xi32>
        %659 = arith.andi %656, %658 : vector<4x4xi1>
        %660 = arith.extui %659 : vector<4x4xi1> to vector<4x4xi32>
        %661 = arith.sitofp %660 : vector<4x4xi32> to vector<4x4xf32>
        %cst_137 = arith.constant 1.000000e+00 : f32
        %662 = vector.broadcast %cst_137 : f32 to vector<1x1xf32>
        %663 = arith.subf %631, %662 : vector<1x1xf32>
        %664 = arith.addf %640, %647 : vector<4x4xf32>
        %665 = vector.broadcast %663 : vector<1x1xf32> to vector<4x4xf32>
        %666 = arith.mulf %665, %664 : vector<4x4xf32>
        %667 = arith.addf %6, %666 : vector<4x4xf32>
        %668 = vector.broadcast %633 : vector<1x1xf32> to vector<4x4xf32>
        %669 = arith.mulf %668, %654 : vector<4x4xf32>
        %670 = arith.addf %667, %669 : vector<4x4xf32>
        %671 = vector.broadcast %633 : vector<1x1xf32> to vector<4x4xf32>
        %672 = arith.mulf %671, %661 : vector<4x4xf32>
        %673 = arith.subf %670, %672 : vector<4x4xf32>
        %cst_138 = arith.constant 1.000000e+00 : f32
        %674 = vector.broadcast %cst_138 : f32 to vector<1x1xf32>
        %675 = arith.subf %631, %674 : vector<1x1xf32>
        %676 = arith.addf %640, %647 : vector<4x4xf32>
        %677 = vector.broadcast %675 : vector<1x1xf32> to vector<4x4xf32>
        %678 = arith.mulf %677, %676 : vector<4x4xf32>
        %679 = arith.addf %6, %678 : vector<4x4xf32>
        %680 = vector.broadcast %633 : vector<1x1xf32> to vector<4x4xf32>
        %681 = arith.mulf %680, %654 : vector<4x4xf32>
        %682 = arith.subf %679, %681 : vector<4x4xf32>
        %683 = vector.broadcast %633 : vector<1x1xf32> to vector<4x4xf32>
        %684 = arith.mulf %683, %661 : vector<4x4xf32>
        %685 = arith.addf %682, %684 : vector<4x4xf32>
        %686 = vector.extract_strided_slice %554 {offsets = [0, 0], sizes = [4, 1], strides = [1, 1]} : vector<4x4xf32> to vector<4x1xf32>
        %687 = vector.extract_strided_slice %673 {offsets = [0, 0], sizes = [1, 4], strides = [1, 1]} : vector<4x4xf32> to vector<1x4xf32>
        %688 = vector.broadcast %686 : vector<4x1xf32> to vector<4x4xf32>
        %689 = vector.broadcast %687 : vector<1x4xf32> to vector<4x4xf32>
        %690 = arith.mulf %688, %689 : vector<4x4xf32>
        %691 = vector.extract_strided_slice %554 {offsets = [0, 1], sizes = [4, 1], strides = [1, 1]} : vector<4x4xf32> to vector<4x1xf32>
        %692 = vector.extract_strided_slice %673 {offsets = [1, 0], sizes = [1, 4], strides = [1, 1]} : vector<4x4xf32> to vector<1x4xf32>
        %693 = vector.broadcast %691 : vector<4x1xf32> to vector<4x4xf32>
        %694 = vector.broadcast %692 : vector<1x4xf32> to vector<4x4xf32>
        %695 = arith.mulf %693, %694 : vector<4x4xf32>
        %696 = arith.addf %690, %695 : vector<4x4xf32>
        %697 = vector.extract_strided_slice %554 {offsets = [0, 2], sizes = [4, 1], strides = [1, 1]} : vector<4x4xf32> to vector<4x1xf32>
        %698 = vector.extract_strided_slice %673 {offsets = [2, 0], sizes = [1, 4], strides = [1, 1]} : vector<4x4xf32> to vector<1x4xf32>
        %699 = vector.broadcast %697 : vector<4x1xf32> to vector<4x4xf32>
        %700 = vector.broadcast %698 : vector<1x4xf32> to vector<4x4xf32>
        %701 = arith.mulf %699, %700 : vector<4x4xf32>
        %702 = arith.addf %696, %701 : vector<4x4xf32>
        %703 = vector.extract_strided_slice %554 {offsets = [0, 3], sizes = [4, 1], strides = [1, 1]} : vector<4x4xf32> to vector<4x1xf32>
        %704 = vector.extract_strided_slice %673 {offsets = [3, 0], sizes = [1, 4], strides = [1, 1]} : vector<4x4xf32> to vector<1x4xf32>
        %705 = vector.broadcast %703 : vector<4x1xf32> to vector<4x4xf32>
        %706 = vector.broadcast %704 : vector<1x4xf32> to vector<4x4xf32>
        %707 = arith.mulf %705, %706 : vector<4x4xf32>
        %708 = arith.addf %702, %707 : vector<4x4xf32>
        %709 = vector.extract_strided_slice %685 {offsets = [0, 0], sizes = [4, 1], strides = [1, 1]} : vector<4x4xf32> to vector<4x1xf32>
        %710 = vector.extract_strided_slice %708 {offsets = [0, 0], sizes = [1, 4], strides = [1, 1]} : vector<4x4xf32> to vector<1x4xf32>
        %711 = vector.broadcast %709 : vector<4x1xf32> to vector<4x4xf32>
        %712 = vector.broadcast %710 : vector<1x4xf32> to vector<4x4xf32>
        %713 = arith.mulf %711, %712 : vector<4x4xf32>
        %714 = vector.extract_strided_slice %685 {offsets = [0, 1], sizes = [4, 1], strides = [1, 1]} : vector<4x4xf32> to vector<4x1xf32>
        %715 = vector.extract_strided_slice %708 {offsets = [1, 0], sizes = [1, 4], strides = [1, 1]} : vector<4x4xf32> to vector<1x4xf32>
        %716 = vector.broadcast %714 : vector<4x1xf32> to vector<4x4xf32>
        %717 = vector.broadcast %715 : vector<1x4xf32> to vector<4x4xf32>
        %718 = arith.mulf %716, %717 : vector<4x4xf32>
        %719 = arith.addf %713, %718 : vector<4x4xf32>
        %720 = vector.extract_strided_slice %685 {offsets = [0, 2], sizes = [4, 1], strides = [1, 1]} : vector<4x4xf32> to vector<4x1xf32>
        %721 = vector.extract_strided_slice %708 {offsets = [2, 0], sizes = [1, 4], strides = [1, 1]} : vector<4x4xf32> to vector<1x4xf32>
        %722 = vector.broadcast %720 : vector<4x1xf32> to vector<4x4xf32>
        %723 = vector.broadcast %721 : vector<1x4xf32> to vector<4x4xf32>
        %724 = arith.mulf %722, %723 : vector<4x4xf32>
        %725 = arith.addf %719, %724 : vector<4x4xf32>
        %726 = vector.extract_strided_slice %685 {offsets = [0, 3], sizes = [4, 1], strides = [1, 1]} : vector<4x4xf32> to vector<4x1xf32>
        %727 = vector.extract_strided_slice %708 {offsets = [3, 0], sizes = [1, 4], strides = [1, 1]} : vector<4x4xf32> to vector<1x4xf32>
        %728 = vector.broadcast %726 : vector<4x1xf32> to vector<4x4xf32>
        %729 = vector.broadcast %727 : vector<1x4xf32> to vector<4x4xf32>
        %730 = arith.mulf %728, %729 : vector<4x4xf32>
        %731 = arith.addf %725, %730 : vector<4x4xf32>
        %732 = vector.extract_strided_slice %577 {offsets = [0, 0], sizes = [4, 1], strides = [1, 1]} : vector<4x4xf32> to vector<4x1xf32>
        %733 = vector.extract_strided_slice %673 {offsets = [0, 0], sizes = [1, 4], strides = [1, 1]} : vector<4x4xf32> to vector<1x4xf32>
        %734 = vector.broadcast %732 : vector<4x1xf32> to vector<4x4xf32>
        %735 = vector.broadcast %733 : vector<1x4xf32> to vector<4x4xf32>
        %736 = arith.mulf %734, %735 : vector<4x4xf32>
        %737 = vector.extract_strided_slice %577 {offsets = [0, 1], sizes = [4, 1], strides = [1, 1]} : vector<4x4xf32> to vector<4x1xf32>
        %738 = vector.extract_strided_slice %673 {offsets = [1, 0], sizes = [1, 4], strides = [1, 1]} : vector<4x4xf32> to vector<1x4xf32>
        %739 = vector.broadcast %737 : vector<4x1xf32> to vector<4x4xf32>
        %740 = vector.broadcast %738 : vector<1x4xf32> to vector<4x4xf32>
        %741 = arith.mulf %739, %740 : vector<4x4xf32>
        %742 = arith.addf %736, %741 : vector<4x4xf32>
        %743 = vector.extract_strided_slice %577 {offsets = [0, 2], sizes = [4, 1], strides = [1, 1]} : vector<4x4xf32> to vector<4x1xf32>
        %744 = vector.extract_strided_slice %673 {offsets = [2, 0], sizes = [1, 4], strides = [1, 1]} : vector<4x4xf32> to vector<1x4xf32>
        %745 = vector.broadcast %743 : vector<4x1xf32> to vector<4x4xf32>
        %746 = vector.broadcast %744 : vector<1x4xf32> to vector<4x4xf32>
        %747 = arith.mulf %745, %746 : vector<4x4xf32>
        %748 = arith.addf %742, %747 : vector<4x4xf32>
        %749 = vector.extract_strided_slice %577 {offsets = [0, 3], sizes = [4, 1], strides = [1, 1]} : vector<4x4xf32> to vector<4x1xf32>
        %750 = vector.extract_strided_slice %673 {offsets = [3, 0], sizes = [1, 4], strides = [1, 1]} : vector<4x4xf32> to vector<1x4xf32>
        %751 = vector.broadcast %749 : vector<4x1xf32> to vector<4x4xf32>
        %752 = vector.broadcast %750 : vector<1x4xf32> to vector<4x4xf32>
        %753 = arith.mulf %751, %752 : vector<4x4xf32>
        %754 = arith.addf %748, %753 : vector<4x4xf32>
        %755 = vector.extract_strided_slice %685 {offsets = [0, 0], sizes = [4, 1], strides = [1, 1]} : vector<4x4xf32> to vector<4x1xf32>
        %756 = vector.extract_strided_slice %600 {offsets = [0, 0], sizes = [1, 4], strides = [1, 1]} : vector<4x4xf32> to vector<1x4xf32>
        %757 = vector.broadcast %755 : vector<4x1xf32> to vector<4x4xf32>
        %758 = vector.broadcast %756 : vector<1x4xf32> to vector<4x4xf32>
        %759 = arith.mulf %757, %758 : vector<4x4xf32>
        %760 = vector.extract_strided_slice %685 {offsets = [0, 1], sizes = [4, 1], strides = [1, 1]} : vector<4x4xf32> to vector<4x1xf32>
        %761 = vector.extract_strided_slice %600 {offsets = [1, 0], sizes = [1, 4], strides = [1, 1]} : vector<4x4xf32> to vector<1x4xf32>
        %762 = vector.broadcast %760 : vector<4x1xf32> to vector<4x4xf32>
        %763 = vector.broadcast %761 : vector<1x4xf32> to vector<4x4xf32>
        %764 = arith.mulf %762, %763 : vector<4x4xf32>
        %765 = arith.addf %759, %764 : vector<4x4xf32>
        %766 = vector.extract_strided_slice %685 {offsets = [0, 2], sizes = [4, 1], strides = [1, 1]} : vector<4x4xf32> to vector<4x1xf32>
        %767 = vector.extract_strided_slice %600 {offsets = [2, 0], sizes = [1, 4], strides = [1, 1]} : vector<4x4xf32> to vector<1x4xf32>
        %768 = vector.broadcast %766 : vector<4x1xf32> to vector<4x4xf32>
        %769 = vector.broadcast %767 : vector<1x4xf32> to vector<4x4xf32>
        %770 = arith.mulf %768, %769 : vector<4x4xf32>
        %771 = arith.addf %765, %770 : vector<4x4xf32>
        %772 = vector.extract_strided_slice %685 {offsets = [0, 3], sizes = [4, 1], strides = [1, 1]} : vector<4x4xf32> to vector<4x1xf32>
        %773 = vector.extract_strided_slice %600 {offsets = [3, 0], sizes = [1, 4], strides = [1, 1]} : vector<4x4xf32> to vector<1x4xf32>
        %774 = vector.broadcast %772 : vector<4x1xf32> to vector<4x4xf32>
        %775 = vector.broadcast %773 : vector<1x4xf32> to vector<4x4xf32>
        %776 = arith.mulf %774, %775 : vector<4x4xf32>
        %777 = arith.addf %771, %776 : vector<4x4xf32>
        %778 = vector.extract_strided_slice %731 {offsets = [0, 0], sizes = [1, 1], strides = [1, 1]} : vector<4x4xf32> to vector<1x1xf32>
        %779 = vector.extract_strided_slice %731 {offsets = [3, 3], sizes = [1, 1], strides = [1, 1]} : vector<4x4xf32> to vector<1x1xf32>
        %780 = vector.extract_strided_slice %731 {offsets = [0, 3], sizes = [1, 1], strides = [1, 1]} : vector<4x4xf32> to vector<1x1xf32>
        %781 = math.absf %780 : vector<1x1xf32>
        %cst_139 = arith.constant 9.99999996E-13 : f32
        %782 = vector.broadcast %cst_139 : f32 to vector<1x1xf32>
        %783 = arith.cmpf olt, %781, %782 : vector<1x1xf32>
        %cst_140 = arith.constant 1.000000e+00 : f32
        %784 = vector.broadcast %cst_140 : f32 to vector<1x1xf32>
        %785 = arith.select %783, %784, %780 : vector<1x1xi1>, vector<1x1xf32>
        %786 = arith.subf %779, %778 : vector<1x1xf32>
        %cst_141 = arith.constant 2.000000e+00 : f32
        %787 = vector.broadcast %cst_141 : f32 to vector<1x1xf32>
        %788 = arith.mulf %787, %785 : vector<1x1xf32>
        %789 = arith.divf %786, %788 : vector<1x1xf32>
        %cst_142 = arith.constant 0.000000e+00 : f32
        %790 = vector.broadcast %cst_142 : f32 to vector<1x1xf32>
        %791 = arith.cmpf oge, %789, %790 : vector<1x1xf32>
        %cst_143 = arith.constant 1.000000e+00 : f32
        %cst_144 = arith.constant -1.000000e+00 : f32
        %792 = vector.broadcast %cst_143 : f32 to vector<1x1xf32>
        %793 = vector.broadcast %cst_144 : f32 to vector<1x1xf32>
        %794 = arith.select %791, %792, %793 : vector<1x1xi1>, vector<1x1xf32>
        %795 = math.absf %789 : vector<1x1xf32>
        %796 = arith.mulf %789, %789 : vector<1x1xf32>
        %cst_145 = arith.constant 1.000000e+00 : f32
        %797 = vector.broadcast %cst_145 : f32 to vector<1x1xf32>
        %798 = arith.addf %797, %796 : vector<1x1xf32>
        %799 = math.sqrt %798 : vector<1x1xf32>
        %800 = arith.addf %795, %799 : vector<1x1xf32>
        %801 = arith.divf %794, %800 : vector<1x1xf32>
        %802 = arith.mulf %801, %801 : vector<1x1xf32>
        %cst_146 = arith.constant 1.000000e+00 : f32
        %803 = vector.broadcast %cst_146 : f32 to vector<1x1xf32>
        %804 = arith.addf %803, %802 : vector<1x1xf32>
        %805 = math.rsqrt %804 : vector<1x1xf32>
        %806 = arith.mulf %801, %805 : vector<1x1xf32>
        %cst_147 = arith.constant 1.000000e+00 : f32
        %807 = vector.broadcast %cst_147 : f32 to vector<1x1xf32>
        %808 = arith.select %783, %807, %805 : vector<1x1xi1>, vector<1x1xf32>
        %cst_148 = arith.constant 0.000000e+00 : f32
        %809 = vector.broadcast %cst_148 : f32 to vector<1x1xf32>
        %810 = arith.select %783, %809, %806 : vector<1x1xi1>, vector<1x1xf32>
        %c0_i32_149 = arith.constant 0 : i32
        %811 = vector.broadcast %c0_i32_149 : i32 to vector<4x4xi32>
        %812 = arith.cmpi eq, %2, %811 : vector<4x4xi32>
        %c0_i32_150 = arith.constant 0 : i32
        %813 = vector.broadcast %c0_i32_150 : i32 to vector<4x4xi32>
        %814 = arith.cmpi eq, %3, %813 : vector<4x4xi32>
        %815 = arith.andi %812, %814 : vector<4x4xi1>
        %816 = arith.extui %815 : vector<4x4xi1> to vector<4x4xi32>
        %817 = arith.sitofp %816 : vector<4x4xi32> to vector<4x4xf32>
        %c3_i32_151 = arith.constant 3 : i32
        %818 = vector.broadcast %c3_i32_151 : i32 to vector<4x4xi32>
        %819 = arith.cmpi eq, %2, %818 : vector<4x4xi32>
        %c3_i32_152 = arith.constant 3 : i32
        %820 = vector.broadcast %c3_i32_152 : i32 to vector<4x4xi32>
        %821 = arith.cmpi eq, %3, %820 : vector<4x4xi32>
        %822 = arith.andi %819, %821 : vector<4x4xi1>
        %823 = arith.extui %822 : vector<4x4xi1> to vector<4x4xi32>
        %824 = arith.sitofp %823 : vector<4x4xi32> to vector<4x4xf32>
        %c0_i32_153 = arith.constant 0 : i32
        %825 = vector.broadcast %c0_i32_153 : i32 to vector<4x4xi32>
        %826 = arith.cmpi eq, %2, %825 : vector<4x4xi32>
        %c3_i32_154 = arith.constant 3 : i32
        %827 = vector.broadcast %c3_i32_154 : i32 to vector<4x4xi32>
        %828 = arith.cmpi eq, %3, %827 : vector<4x4xi32>
        %829 = arith.andi %826, %828 : vector<4x4xi1>
        %830 = arith.extui %829 : vector<4x4xi1> to vector<4x4xi32>
        %831 = arith.sitofp %830 : vector<4x4xi32> to vector<4x4xf32>
        %c3_i32_155 = arith.constant 3 : i32
        %832 = vector.broadcast %c3_i32_155 : i32 to vector<4x4xi32>
        %833 = arith.cmpi eq, %2, %832 : vector<4x4xi32>
        %c0_i32_156 = arith.constant 0 : i32
        %834 = vector.broadcast %c0_i32_156 : i32 to vector<4x4xi32>
        %835 = arith.cmpi eq, %3, %834 : vector<4x4xi32>
        %836 = arith.andi %833, %835 : vector<4x4xi1>
        %837 = arith.extui %836 : vector<4x4xi1> to vector<4x4xi32>
        %838 = arith.sitofp %837 : vector<4x4xi32> to vector<4x4xf32>
        %cst_157 = arith.constant 1.000000e+00 : f32
        %839 = vector.broadcast %cst_157 : f32 to vector<1x1xf32>
        %840 = arith.subf %808, %839 : vector<1x1xf32>
        %841 = arith.addf %817, %824 : vector<4x4xf32>
        %842 = vector.broadcast %840 : vector<1x1xf32> to vector<4x4xf32>
        %843 = arith.mulf %842, %841 : vector<4x4xf32>
        %844 = arith.addf %6, %843 : vector<4x4xf32>
        %845 = vector.broadcast %810 : vector<1x1xf32> to vector<4x4xf32>
        %846 = arith.mulf %845, %831 : vector<4x4xf32>
        %847 = arith.addf %844, %846 : vector<4x4xf32>
        %848 = vector.broadcast %810 : vector<1x1xf32> to vector<4x4xf32>
        %849 = arith.mulf %848, %838 : vector<4x4xf32>
        %850 = arith.subf %847, %849 : vector<4x4xf32>
        %cst_158 = arith.constant 1.000000e+00 : f32
        %851 = vector.broadcast %cst_158 : f32 to vector<1x1xf32>
        %852 = arith.subf %808, %851 : vector<1x1xf32>
        %853 = arith.addf %817, %824 : vector<4x4xf32>
        %854 = vector.broadcast %852 : vector<1x1xf32> to vector<4x4xf32>
        %855 = arith.mulf %854, %853 : vector<4x4xf32>
        %856 = arith.addf %6, %855 : vector<4x4xf32>
        %857 = vector.broadcast %810 : vector<1x1xf32> to vector<4x4xf32>
        %858 = arith.mulf %857, %831 : vector<4x4xf32>
        %859 = arith.subf %856, %858 : vector<4x4xf32>
        %860 = vector.broadcast %810 : vector<1x1xf32> to vector<4x4xf32>
        %861 = arith.mulf %860, %838 : vector<4x4xf32>
        %862 = arith.addf %859, %861 : vector<4x4xf32>
        %863 = vector.extract_strided_slice %731 {offsets = [0, 0], sizes = [4, 1], strides = [1, 1]} : vector<4x4xf32> to vector<4x1xf32>
        %864 = vector.extract_strided_slice %850 {offsets = [0, 0], sizes = [1, 4], strides = [1, 1]} : vector<4x4xf32> to vector<1x4xf32>
        %865 = vector.broadcast %863 : vector<4x1xf32> to vector<4x4xf32>
        %866 = vector.broadcast %864 : vector<1x4xf32> to vector<4x4xf32>
        %867 = arith.mulf %865, %866 : vector<4x4xf32>
        %868 = vector.extract_strided_slice %731 {offsets = [0, 1], sizes = [4, 1], strides = [1, 1]} : vector<4x4xf32> to vector<4x1xf32>
        %869 = vector.extract_strided_slice %850 {offsets = [1, 0], sizes = [1, 4], strides = [1, 1]} : vector<4x4xf32> to vector<1x4xf32>
        %870 = vector.broadcast %868 : vector<4x1xf32> to vector<4x4xf32>
        %871 = vector.broadcast %869 : vector<1x4xf32> to vector<4x4xf32>
        %872 = arith.mulf %870, %871 : vector<4x4xf32>
        %873 = arith.addf %867, %872 : vector<4x4xf32>
        %874 = vector.extract_strided_slice %731 {offsets = [0, 2], sizes = [4, 1], strides = [1, 1]} : vector<4x4xf32> to vector<4x1xf32>
        %875 = vector.extract_strided_slice %850 {offsets = [2, 0], sizes = [1, 4], strides = [1, 1]} : vector<4x4xf32> to vector<1x4xf32>
        %876 = vector.broadcast %874 : vector<4x1xf32> to vector<4x4xf32>
        %877 = vector.broadcast %875 : vector<1x4xf32> to vector<4x4xf32>
        %878 = arith.mulf %876, %877 : vector<4x4xf32>
        %879 = arith.addf %873, %878 : vector<4x4xf32>
        %880 = vector.extract_strided_slice %731 {offsets = [0, 3], sizes = [4, 1], strides = [1, 1]} : vector<4x4xf32> to vector<4x1xf32>
        %881 = vector.extract_strided_slice %850 {offsets = [3, 0], sizes = [1, 4], strides = [1, 1]} : vector<4x4xf32> to vector<1x4xf32>
        %882 = vector.broadcast %880 : vector<4x1xf32> to vector<4x4xf32>
        %883 = vector.broadcast %881 : vector<1x4xf32> to vector<4x4xf32>
        %884 = arith.mulf %882, %883 : vector<4x4xf32>
        %885 = arith.addf %879, %884 : vector<4x4xf32>
        %886 = vector.extract_strided_slice %862 {offsets = [0, 0], sizes = [4, 1], strides = [1, 1]} : vector<4x4xf32> to vector<4x1xf32>
        %887 = vector.extract_strided_slice %885 {offsets = [0, 0], sizes = [1, 4], strides = [1, 1]} : vector<4x4xf32> to vector<1x4xf32>
        %888 = vector.broadcast %886 : vector<4x1xf32> to vector<4x4xf32>
        %889 = vector.broadcast %887 : vector<1x4xf32> to vector<4x4xf32>
        %890 = arith.mulf %888, %889 : vector<4x4xf32>
        %891 = vector.extract_strided_slice %862 {offsets = [0, 1], sizes = [4, 1], strides = [1, 1]} : vector<4x4xf32> to vector<4x1xf32>
        %892 = vector.extract_strided_slice %885 {offsets = [1, 0], sizes = [1, 4], strides = [1, 1]} : vector<4x4xf32> to vector<1x4xf32>
        %893 = vector.broadcast %891 : vector<4x1xf32> to vector<4x4xf32>
        %894 = vector.broadcast %892 : vector<1x4xf32> to vector<4x4xf32>
        %895 = arith.mulf %893, %894 : vector<4x4xf32>
        %896 = arith.addf %890, %895 : vector<4x4xf32>
        %897 = vector.extract_strided_slice %862 {offsets = [0, 2], sizes = [4, 1], strides = [1, 1]} : vector<4x4xf32> to vector<4x1xf32>
        %898 = vector.extract_strided_slice %885 {offsets = [2, 0], sizes = [1, 4], strides = [1, 1]} : vector<4x4xf32> to vector<1x4xf32>
        %899 = vector.broadcast %897 : vector<4x1xf32> to vector<4x4xf32>
        %900 = vector.broadcast %898 : vector<1x4xf32> to vector<4x4xf32>
        %901 = arith.mulf %899, %900 : vector<4x4xf32>
        %902 = arith.addf %896, %901 : vector<4x4xf32>
        %903 = vector.extract_strided_slice %862 {offsets = [0, 3], sizes = [4, 1], strides = [1, 1]} : vector<4x4xf32> to vector<4x1xf32>
        %904 = vector.extract_strided_slice %885 {offsets = [3, 0], sizes = [1, 4], strides = [1, 1]} : vector<4x4xf32> to vector<1x4xf32>
        %905 = vector.broadcast %903 : vector<4x1xf32> to vector<4x4xf32>
        %906 = vector.broadcast %904 : vector<1x4xf32> to vector<4x4xf32>
        %907 = arith.mulf %905, %906 : vector<4x4xf32>
        %908 = arith.addf %902, %907 : vector<4x4xf32>
        %909 = vector.extract_strided_slice %754 {offsets = [0, 0], sizes = [4, 1], strides = [1, 1]} : vector<4x4xf32> to vector<4x1xf32>
        %910 = vector.extract_strided_slice %850 {offsets = [0, 0], sizes = [1, 4], strides = [1, 1]} : vector<4x4xf32> to vector<1x4xf32>
        %911 = vector.broadcast %909 : vector<4x1xf32> to vector<4x4xf32>
        %912 = vector.broadcast %910 : vector<1x4xf32> to vector<4x4xf32>
        %913 = arith.mulf %911, %912 : vector<4x4xf32>
        %914 = vector.extract_strided_slice %754 {offsets = [0, 1], sizes = [4, 1], strides = [1, 1]} : vector<4x4xf32> to vector<4x1xf32>
        %915 = vector.extract_strided_slice %850 {offsets = [1, 0], sizes = [1, 4], strides = [1, 1]} : vector<4x4xf32> to vector<1x4xf32>
        %916 = vector.broadcast %914 : vector<4x1xf32> to vector<4x4xf32>
        %917 = vector.broadcast %915 : vector<1x4xf32> to vector<4x4xf32>
        %918 = arith.mulf %916, %917 : vector<4x4xf32>
        %919 = arith.addf %913, %918 : vector<4x4xf32>
        %920 = vector.extract_strided_slice %754 {offsets = [0, 2], sizes = [4, 1], strides = [1, 1]} : vector<4x4xf32> to vector<4x1xf32>
        %921 = vector.extract_strided_slice %850 {offsets = [2, 0], sizes = [1, 4], strides = [1, 1]} : vector<4x4xf32> to vector<1x4xf32>
        %922 = vector.broadcast %920 : vector<4x1xf32> to vector<4x4xf32>
        %923 = vector.broadcast %921 : vector<1x4xf32> to vector<4x4xf32>
        %924 = arith.mulf %922, %923 : vector<4x4xf32>
        %925 = arith.addf %919, %924 : vector<4x4xf32>
        %926 = vector.extract_strided_slice %754 {offsets = [0, 3], sizes = [4, 1], strides = [1, 1]} : vector<4x4xf32> to vector<4x1xf32>
        %927 = vector.extract_strided_slice %850 {offsets = [3, 0], sizes = [1, 4], strides = [1, 1]} : vector<4x4xf32> to vector<1x4xf32>
        %928 = vector.broadcast %926 : vector<4x1xf32> to vector<4x4xf32>
        %929 = vector.broadcast %927 : vector<1x4xf32> to vector<4x4xf32>
        %930 = arith.mulf %928, %929 : vector<4x4xf32>
        %931 = arith.addf %925, %930 : vector<4x4xf32>
        %932 = vector.extract_strided_slice %862 {offsets = [0, 0], sizes = [4, 1], strides = [1, 1]} : vector<4x4xf32> to vector<4x1xf32>
        %933 = vector.extract_strided_slice %777 {offsets = [0, 0], sizes = [1, 4], strides = [1, 1]} : vector<4x4xf32> to vector<1x4xf32>
        %934 = vector.broadcast %932 : vector<4x1xf32> to vector<4x4xf32>
        %935 = vector.broadcast %933 : vector<1x4xf32> to vector<4x4xf32>
        %936 = arith.mulf %934, %935 : vector<4x4xf32>
        %937 = vector.extract_strided_slice %862 {offsets = [0, 1], sizes = [4, 1], strides = [1, 1]} : vector<4x4xf32> to vector<4x1xf32>
        %938 = vector.extract_strided_slice %777 {offsets = [1, 0], sizes = [1, 4], strides = [1, 1]} : vector<4x4xf32> to vector<1x4xf32>
        %939 = vector.broadcast %937 : vector<4x1xf32> to vector<4x4xf32>
        %940 = vector.broadcast %938 : vector<1x4xf32> to vector<4x4xf32>
        %941 = arith.mulf %939, %940 : vector<4x4xf32>
        %942 = arith.addf %936, %941 : vector<4x4xf32>
        %943 = vector.extract_strided_slice %862 {offsets = [0, 2], sizes = [4, 1], strides = [1, 1]} : vector<4x4xf32> to vector<4x1xf32>
        %944 = vector.extract_strided_slice %777 {offsets = [2, 0], sizes = [1, 4], strides = [1, 1]} : vector<4x4xf32> to vector<1x4xf32>
        %945 = vector.broadcast %943 : vector<4x1xf32> to vector<4x4xf32>
        %946 = vector.broadcast %944 : vector<1x4xf32> to vector<4x4xf32>
        %947 = arith.mulf %945, %946 : vector<4x4xf32>
        %948 = arith.addf %942, %947 : vector<4x4xf32>
        %949 = vector.extract_strided_slice %862 {offsets = [0, 3], sizes = [4, 1], strides = [1, 1]} : vector<4x4xf32> to vector<4x1xf32>
        %950 = vector.extract_strided_slice %777 {offsets = [3, 0], sizes = [1, 4], strides = [1, 1]} : vector<4x4xf32> to vector<1x4xf32>
        %951 = vector.broadcast %949 : vector<4x1xf32> to vector<4x4xf32>
        %952 = vector.broadcast %950 : vector<1x4xf32> to vector<4x4xf32>
        %953 = arith.mulf %951, %952 : vector<4x4xf32>
        %954 = arith.addf %948, %953 : vector<4x4xf32>
        %955 = vector.extract_strided_slice %908 {offsets = [1, 1], sizes = [1, 1], strides = [1, 1]} : vector<4x4xf32> to vector<1x1xf32>
        %956 = vector.extract_strided_slice %908 {offsets = [2, 2], sizes = [1, 1], strides = [1, 1]} : vector<4x4xf32> to vector<1x1xf32>
        %957 = vector.extract_strided_slice %908 {offsets = [1, 2], sizes = [1, 1], strides = [1, 1]} : vector<4x4xf32> to vector<1x1xf32>
        %958 = math.absf %957 : vector<1x1xf32>
        %cst_159 = arith.constant 9.99999996E-13 : f32
        %959 = vector.broadcast %cst_159 : f32 to vector<1x1xf32>
        %960 = arith.cmpf olt, %958, %959 : vector<1x1xf32>
        %cst_160 = arith.constant 1.000000e+00 : f32
        %961 = vector.broadcast %cst_160 : f32 to vector<1x1xf32>
        %962 = arith.select %960, %961, %957 : vector<1x1xi1>, vector<1x1xf32>
        %963 = arith.subf %956, %955 : vector<1x1xf32>
        %cst_161 = arith.constant 2.000000e+00 : f32
        %964 = vector.broadcast %cst_161 : f32 to vector<1x1xf32>
        %965 = arith.mulf %964, %962 : vector<1x1xf32>
        %966 = arith.divf %963, %965 : vector<1x1xf32>
        %cst_162 = arith.constant 0.000000e+00 : f32
        %967 = vector.broadcast %cst_162 : f32 to vector<1x1xf32>
        %968 = arith.cmpf oge, %966, %967 : vector<1x1xf32>
        %cst_163 = arith.constant 1.000000e+00 : f32
        %cst_164 = arith.constant -1.000000e+00 : f32
        %969 = vector.broadcast %cst_163 : f32 to vector<1x1xf32>
        %970 = vector.broadcast %cst_164 : f32 to vector<1x1xf32>
        %971 = arith.select %968, %969, %970 : vector<1x1xi1>, vector<1x1xf32>
        %972 = math.absf %966 : vector<1x1xf32>
        %973 = arith.mulf %966, %966 : vector<1x1xf32>
        %cst_165 = arith.constant 1.000000e+00 : f32
        %974 = vector.broadcast %cst_165 : f32 to vector<1x1xf32>
        %975 = arith.addf %974, %973 : vector<1x1xf32>
        %976 = math.sqrt %975 : vector<1x1xf32>
        %977 = arith.addf %972, %976 : vector<1x1xf32>
        %978 = arith.divf %971, %977 : vector<1x1xf32>
        %979 = arith.mulf %978, %978 : vector<1x1xf32>
        %cst_166 = arith.constant 1.000000e+00 : f32
        %980 = vector.broadcast %cst_166 : f32 to vector<1x1xf32>
        %981 = arith.addf %980, %979 : vector<1x1xf32>
        %982 = math.rsqrt %981 : vector<1x1xf32>
        %983 = arith.mulf %978, %982 : vector<1x1xf32>
        %cst_167 = arith.constant 1.000000e+00 : f32
        %984 = vector.broadcast %cst_167 : f32 to vector<1x1xf32>
        %985 = arith.select %960, %984, %982 : vector<1x1xi1>, vector<1x1xf32>
        %cst_168 = arith.constant 0.000000e+00 : f32
        %986 = vector.broadcast %cst_168 : f32 to vector<1x1xf32>
        %987 = arith.select %960, %986, %983 : vector<1x1xi1>, vector<1x1xf32>
        %c1_i32_169 = arith.constant 1 : i32
        %988 = vector.broadcast %c1_i32_169 : i32 to vector<4x4xi32>
        %989 = arith.cmpi eq, %2, %988 : vector<4x4xi32>
        %c1_i32_170 = arith.constant 1 : i32
        %990 = vector.broadcast %c1_i32_170 : i32 to vector<4x4xi32>
        %991 = arith.cmpi eq, %3, %990 : vector<4x4xi32>
        %992 = arith.andi %989, %991 : vector<4x4xi1>
        %993 = arith.extui %992 : vector<4x4xi1> to vector<4x4xi32>
        %994 = arith.sitofp %993 : vector<4x4xi32> to vector<4x4xf32>
        %c2_i32_171 = arith.constant 2 : i32
        %995 = vector.broadcast %c2_i32_171 : i32 to vector<4x4xi32>
        %996 = arith.cmpi eq, %2, %995 : vector<4x4xi32>
        %c2_i32_172 = arith.constant 2 : i32
        %997 = vector.broadcast %c2_i32_172 : i32 to vector<4x4xi32>
        %998 = arith.cmpi eq, %3, %997 : vector<4x4xi32>
        %999 = arith.andi %996, %998 : vector<4x4xi1>
        %1000 = arith.extui %999 : vector<4x4xi1> to vector<4x4xi32>
        %1001 = arith.sitofp %1000 : vector<4x4xi32> to vector<4x4xf32>
        %c1_i32_173 = arith.constant 1 : i32
        %1002 = vector.broadcast %c1_i32_173 : i32 to vector<4x4xi32>
        %1003 = arith.cmpi eq, %2, %1002 : vector<4x4xi32>
        %c2_i32_174 = arith.constant 2 : i32
        %1004 = vector.broadcast %c2_i32_174 : i32 to vector<4x4xi32>
        %1005 = arith.cmpi eq, %3, %1004 : vector<4x4xi32>
        %1006 = arith.andi %1003, %1005 : vector<4x4xi1>
        %1007 = arith.extui %1006 : vector<4x4xi1> to vector<4x4xi32>
        %1008 = arith.sitofp %1007 : vector<4x4xi32> to vector<4x4xf32>
        %c2_i32_175 = arith.constant 2 : i32
        %1009 = vector.broadcast %c2_i32_175 : i32 to vector<4x4xi32>
        %1010 = arith.cmpi eq, %2, %1009 : vector<4x4xi32>
        %c1_i32_176 = arith.constant 1 : i32
        %1011 = vector.broadcast %c1_i32_176 : i32 to vector<4x4xi32>
        %1012 = arith.cmpi eq, %3, %1011 : vector<4x4xi32>
        %1013 = arith.andi %1010, %1012 : vector<4x4xi1>
        %1014 = arith.extui %1013 : vector<4x4xi1> to vector<4x4xi32>
        %1015 = arith.sitofp %1014 : vector<4x4xi32> to vector<4x4xf32>
        %cst_177 = arith.constant 1.000000e+00 : f32
        %1016 = vector.broadcast %cst_177 : f32 to vector<1x1xf32>
        %1017 = arith.subf %985, %1016 : vector<1x1xf32>
        %1018 = arith.addf %994, %1001 : vector<4x4xf32>
        %1019 = vector.broadcast %1017 : vector<1x1xf32> to vector<4x4xf32>
        %1020 = arith.mulf %1019, %1018 : vector<4x4xf32>
        %1021 = arith.addf %6, %1020 : vector<4x4xf32>
        %1022 = vector.broadcast %987 : vector<1x1xf32> to vector<4x4xf32>
        %1023 = arith.mulf %1022, %1008 : vector<4x4xf32>
        %1024 = arith.addf %1021, %1023 : vector<4x4xf32>
        %1025 = vector.broadcast %987 : vector<1x1xf32> to vector<4x4xf32>
        %1026 = arith.mulf %1025, %1015 : vector<4x4xf32>
        %1027 = arith.subf %1024, %1026 : vector<4x4xf32>
        %cst_178 = arith.constant 1.000000e+00 : f32
        %1028 = vector.broadcast %cst_178 : f32 to vector<1x1xf32>
        %1029 = arith.subf %985, %1028 : vector<1x1xf32>
        %1030 = arith.addf %994, %1001 : vector<4x4xf32>
        %1031 = vector.broadcast %1029 : vector<1x1xf32> to vector<4x4xf32>
        %1032 = arith.mulf %1031, %1030 : vector<4x4xf32>
        %1033 = arith.addf %6, %1032 : vector<4x4xf32>
        %1034 = vector.broadcast %987 : vector<1x1xf32> to vector<4x4xf32>
        %1035 = arith.mulf %1034, %1008 : vector<4x4xf32>
        %1036 = arith.subf %1033, %1035 : vector<4x4xf32>
        %1037 = vector.broadcast %987 : vector<1x1xf32> to vector<4x4xf32>
        %1038 = arith.mulf %1037, %1015 : vector<4x4xf32>
        %1039 = arith.addf %1036, %1038 : vector<4x4xf32>
        %1040 = vector.extract_strided_slice %908 {offsets = [0, 0], sizes = [4, 1], strides = [1, 1]} : vector<4x4xf32> to vector<4x1xf32>
        %1041 = vector.extract_strided_slice %1027 {offsets = [0, 0], sizes = [1, 4], strides = [1, 1]} : vector<4x4xf32> to vector<1x4xf32>
        %1042 = vector.broadcast %1040 : vector<4x1xf32> to vector<4x4xf32>
        %1043 = vector.broadcast %1041 : vector<1x4xf32> to vector<4x4xf32>
        %1044 = arith.mulf %1042, %1043 : vector<4x4xf32>
        %1045 = vector.extract_strided_slice %908 {offsets = [0, 1], sizes = [4, 1], strides = [1, 1]} : vector<4x4xf32> to vector<4x1xf32>
        %1046 = vector.extract_strided_slice %1027 {offsets = [1, 0], sizes = [1, 4], strides = [1, 1]} : vector<4x4xf32> to vector<1x4xf32>
        %1047 = vector.broadcast %1045 : vector<4x1xf32> to vector<4x4xf32>
        %1048 = vector.broadcast %1046 : vector<1x4xf32> to vector<4x4xf32>
        %1049 = arith.mulf %1047, %1048 : vector<4x4xf32>
        %1050 = arith.addf %1044, %1049 : vector<4x4xf32>
        %1051 = vector.extract_strided_slice %908 {offsets = [0, 2], sizes = [4, 1], strides = [1, 1]} : vector<4x4xf32> to vector<4x1xf32>
        %1052 = vector.extract_strided_slice %1027 {offsets = [2, 0], sizes = [1, 4], strides = [1, 1]} : vector<4x4xf32> to vector<1x4xf32>
        %1053 = vector.broadcast %1051 : vector<4x1xf32> to vector<4x4xf32>
        %1054 = vector.broadcast %1052 : vector<1x4xf32> to vector<4x4xf32>
        %1055 = arith.mulf %1053, %1054 : vector<4x4xf32>
        %1056 = arith.addf %1050, %1055 : vector<4x4xf32>
        %1057 = vector.extract_strided_slice %908 {offsets = [0, 3], sizes = [4, 1], strides = [1, 1]} : vector<4x4xf32> to vector<4x1xf32>
        %1058 = vector.extract_strided_slice %1027 {offsets = [3, 0], sizes = [1, 4], strides = [1, 1]} : vector<4x4xf32> to vector<1x4xf32>
        %1059 = vector.broadcast %1057 : vector<4x1xf32> to vector<4x4xf32>
        %1060 = vector.broadcast %1058 : vector<1x4xf32> to vector<4x4xf32>
        %1061 = arith.mulf %1059, %1060 : vector<4x4xf32>
        %1062 = arith.addf %1056, %1061 : vector<4x4xf32>
        %1063 = vector.extract_strided_slice %1039 {offsets = [0, 0], sizes = [4, 1], strides = [1, 1]} : vector<4x4xf32> to vector<4x1xf32>
        %1064 = vector.extract_strided_slice %1062 {offsets = [0, 0], sizes = [1, 4], strides = [1, 1]} : vector<4x4xf32> to vector<1x4xf32>
        %1065 = vector.broadcast %1063 : vector<4x1xf32> to vector<4x4xf32>
        %1066 = vector.broadcast %1064 : vector<1x4xf32> to vector<4x4xf32>
        %1067 = arith.mulf %1065, %1066 : vector<4x4xf32>
        %1068 = vector.extract_strided_slice %1039 {offsets = [0, 1], sizes = [4, 1], strides = [1, 1]} : vector<4x4xf32> to vector<4x1xf32>
        %1069 = vector.extract_strided_slice %1062 {offsets = [1, 0], sizes = [1, 4], strides = [1, 1]} : vector<4x4xf32> to vector<1x4xf32>
        %1070 = vector.broadcast %1068 : vector<4x1xf32> to vector<4x4xf32>
        %1071 = vector.broadcast %1069 : vector<1x4xf32> to vector<4x4xf32>
        %1072 = arith.mulf %1070, %1071 : vector<4x4xf32>
        %1073 = arith.addf %1067, %1072 : vector<4x4xf32>
        %1074 = vector.extract_strided_slice %1039 {offsets = [0, 2], sizes = [4, 1], strides = [1, 1]} : vector<4x4xf32> to vector<4x1xf32>
        %1075 = vector.extract_strided_slice %1062 {offsets = [2, 0], sizes = [1, 4], strides = [1, 1]} : vector<4x4xf32> to vector<1x4xf32>
        %1076 = vector.broadcast %1074 : vector<4x1xf32> to vector<4x4xf32>
        %1077 = vector.broadcast %1075 : vector<1x4xf32> to vector<4x4xf32>
        %1078 = arith.mulf %1076, %1077 : vector<4x4xf32>
        %1079 = arith.addf %1073, %1078 : vector<4x4xf32>
        %1080 = vector.extract_strided_slice %1039 {offsets = [0, 3], sizes = [4, 1], strides = [1, 1]} : vector<4x4xf32> to vector<4x1xf32>
        %1081 = vector.extract_strided_slice %1062 {offsets = [3, 0], sizes = [1, 4], strides = [1, 1]} : vector<4x4xf32> to vector<1x4xf32>
        %1082 = vector.broadcast %1080 : vector<4x1xf32> to vector<4x4xf32>
        %1083 = vector.broadcast %1081 : vector<1x4xf32> to vector<4x4xf32>
        %1084 = arith.mulf %1082, %1083 : vector<4x4xf32>
        %1085 = arith.addf %1079, %1084 : vector<4x4xf32>
        %1086 = vector.extract_strided_slice %931 {offsets = [0, 0], sizes = [4, 1], strides = [1, 1]} : vector<4x4xf32> to vector<4x1xf32>
        %1087 = vector.extract_strided_slice %1027 {offsets = [0, 0], sizes = [1, 4], strides = [1, 1]} : vector<4x4xf32> to vector<1x4xf32>
        %1088 = vector.broadcast %1086 : vector<4x1xf32> to vector<4x4xf32>
        %1089 = vector.broadcast %1087 : vector<1x4xf32> to vector<4x4xf32>
        %1090 = arith.mulf %1088, %1089 : vector<4x4xf32>
        %1091 = vector.extract_strided_slice %931 {offsets = [0, 1], sizes = [4, 1], strides = [1, 1]} : vector<4x4xf32> to vector<4x1xf32>
        %1092 = vector.extract_strided_slice %1027 {offsets = [1, 0], sizes = [1, 4], strides = [1, 1]} : vector<4x4xf32> to vector<1x4xf32>
        %1093 = vector.broadcast %1091 : vector<4x1xf32> to vector<4x4xf32>
        %1094 = vector.broadcast %1092 : vector<1x4xf32> to vector<4x4xf32>
        %1095 = arith.mulf %1093, %1094 : vector<4x4xf32>
        %1096 = arith.addf %1090, %1095 : vector<4x4xf32>
        %1097 = vector.extract_strided_slice %931 {offsets = [0, 2], sizes = [4, 1], strides = [1, 1]} : vector<4x4xf32> to vector<4x1xf32>
        %1098 = vector.extract_strided_slice %1027 {offsets = [2, 0], sizes = [1, 4], strides = [1, 1]} : vector<4x4xf32> to vector<1x4xf32>
        %1099 = vector.broadcast %1097 : vector<4x1xf32> to vector<4x4xf32>
        %1100 = vector.broadcast %1098 : vector<1x4xf32> to vector<4x4xf32>
        %1101 = arith.mulf %1099, %1100 : vector<4x4xf32>
        %1102 = arith.addf %1096, %1101 : vector<4x4xf32>
        %1103 = vector.extract_strided_slice %931 {offsets = [0, 3], sizes = [4, 1], strides = [1, 1]} : vector<4x4xf32> to vector<4x1xf32>
        %1104 = vector.extract_strided_slice %1027 {offsets = [3, 0], sizes = [1, 4], strides = [1, 1]} : vector<4x4xf32> to vector<1x4xf32>
        %1105 = vector.broadcast %1103 : vector<4x1xf32> to vector<4x4xf32>
        %1106 = vector.broadcast %1104 : vector<1x4xf32> to vector<4x4xf32>
        %1107 = arith.mulf %1105, %1106 : vector<4x4xf32>
        %1108 = arith.addf %1102, %1107 : vector<4x4xf32>
        %1109 = vector.extract_strided_slice %1039 {offsets = [0, 0], sizes = [4, 1], strides = [1, 1]} : vector<4x4xf32> to vector<4x1xf32>
        %1110 = vector.extract_strided_slice %954 {offsets = [0, 0], sizes = [1, 4], strides = [1, 1]} : vector<4x4xf32> to vector<1x4xf32>
        %1111 = vector.broadcast %1109 : vector<4x1xf32> to vector<4x4xf32>
        %1112 = vector.broadcast %1110 : vector<1x4xf32> to vector<4x4xf32>
        %1113 = arith.mulf %1111, %1112 : vector<4x4xf32>
        %1114 = vector.extract_strided_slice %1039 {offsets = [0, 1], sizes = [4, 1], strides = [1, 1]} : vector<4x4xf32> to vector<4x1xf32>
        %1115 = vector.extract_strided_slice %954 {offsets = [1, 0], sizes = [1, 4], strides = [1, 1]} : vector<4x4xf32> to vector<1x4xf32>
        %1116 = vector.broadcast %1114 : vector<4x1xf32> to vector<4x4xf32>
        %1117 = vector.broadcast %1115 : vector<1x4xf32> to vector<4x4xf32>
        %1118 = arith.mulf %1116, %1117 : vector<4x4xf32>
        %1119 = arith.addf %1113, %1118 : vector<4x4xf32>
        %1120 = vector.extract_strided_slice %1039 {offsets = [0, 2], sizes = [4, 1], strides = [1, 1]} : vector<4x4xf32> to vector<4x1xf32>
        %1121 = vector.extract_strided_slice %954 {offsets = [2, 0], sizes = [1, 4], strides = [1, 1]} : vector<4x4xf32> to vector<1x4xf32>
        %1122 = vector.broadcast %1120 : vector<4x1xf32> to vector<4x4xf32>
        %1123 = vector.broadcast %1121 : vector<1x4xf32> to vector<4x4xf32>
        %1124 = arith.mulf %1122, %1123 : vector<4x4xf32>
        %1125 = arith.addf %1119, %1124 : vector<4x4xf32>
        %1126 = vector.extract_strided_slice %1039 {offsets = [0, 3], sizes = [4, 1], strides = [1, 1]} : vector<4x4xf32> to vector<4x1xf32>
        %1127 = vector.extract_strided_slice %954 {offsets = [3, 0], sizes = [1, 4], strides = [1, 1]} : vector<4x4xf32> to vector<1x4xf32>
        %1128 = vector.broadcast %1126 : vector<4x1xf32> to vector<4x4xf32>
        %1129 = vector.broadcast %1127 : vector<1x4xf32> to vector<4x4xf32>
        %1130 = arith.mulf %1128, %1129 : vector<4x4xf32>
        %1131 = arith.addf %1125, %1130 : vector<4x4xf32>
        %1132 = vector.extract_strided_slice %1085 {offsets = [1, 1], sizes = [1, 1], strides = [1, 1]} : vector<4x4xf32> to vector<1x1xf32>
        %1133 = vector.extract_strided_slice %1085 {offsets = [3, 3], sizes = [1, 1], strides = [1, 1]} : vector<4x4xf32> to vector<1x1xf32>
        %1134 = vector.extract_strided_slice %1085 {offsets = [1, 3], sizes = [1, 1], strides = [1, 1]} : vector<4x4xf32> to vector<1x1xf32>
        %1135 = math.absf %1134 : vector<1x1xf32>
        %cst_179 = arith.constant 9.99999996E-13 : f32
        %1136 = vector.broadcast %cst_179 : f32 to vector<1x1xf32>
        %1137 = arith.cmpf olt, %1135, %1136 : vector<1x1xf32>
        %cst_180 = arith.constant 1.000000e+00 : f32
        %1138 = vector.broadcast %cst_180 : f32 to vector<1x1xf32>
        %1139 = arith.select %1137, %1138, %1134 : vector<1x1xi1>, vector<1x1xf32>
        %1140 = arith.subf %1133, %1132 : vector<1x1xf32>
        %cst_181 = arith.constant 2.000000e+00 : f32
        %1141 = vector.broadcast %cst_181 : f32 to vector<1x1xf32>
        %1142 = arith.mulf %1141, %1139 : vector<1x1xf32>
        %1143 = arith.divf %1140, %1142 : vector<1x1xf32>
        %cst_182 = arith.constant 0.000000e+00 : f32
        %1144 = vector.broadcast %cst_182 : f32 to vector<1x1xf32>
        %1145 = arith.cmpf oge, %1143, %1144 : vector<1x1xf32>
        %cst_183 = arith.constant 1.000000e+00 : f32
        %cst_184 = arith.constant -1.000000e+00 : f32
        %1146 = vector.broadcast %cst_183 : f32 to vector<1x1xf32>
        %1147 = vector.broadcast %cst_184 : f32 to vector<1x1xf32>
        %1148 = arith.select %1145, %1146, %1147 : vector<1x1xi1>, vector<1x1xf32>
        %1149 = math.absf %1143 : vector<1x1xf32>
        %1150 = arith.mulf %1143, %1143 : vector<1x1xf32>
        %cst_185 = arith.constant 1.000000e+00 : f32
        %1151 = vector.broadcast %cst_185 : f32 to vector<1x1xf32>
        %1152 = arith.addf %1151, %1150 : vector<1x1xf32>
        %1153 = math.sqrt %1152 : vector<1x1xf32>
        %1154 = arith.addf %1149, %1153 : vector<1x1xf32>
        %1155 = arith.divf %1148, %1154 : vector<1x1xf32>
        %1156 = arith.mulf %1155, %1155 : vector<1x1xf32>
        %cst_186 = arith.constant 1.000000e+00 : f32
        %1157 = vector.broadcast %cst_186 : f32 to vector<1x1xf32>
        %1158 = arith.addf %1157, %1156 : vector<1x1xf32>
        %1159 = math.rsqrt %1158 : vector<1x1xf32>
        %1160 = arith.mulf %1155, %1159 : vector<1x1xf32>
        %cst_187 = arith.constant 1.000000e+00 : f32
        %1161 = vector.broadcast %cst_187 : f32 to vector<1x1xf32>
        %1162 = arith.select %1137, %1161, %1159 : vector<1x1xi1>, vector<1x1xf32>
        %cst_188 = arith.constant 0.000000e+00 : f32
        %1163 = vector.broadcast %cst_188 : f32 to vector<1x1xf32>
        %1164 = arith.select %1137, %1163, %1160 : vector<1x1xi1>, vector<1x1xf32>
        %c1_i32_189 = arith.constant 1 : i32
        %1165 = vector.broadcast %c1_i32_189 : i32 to vector<4x4xi32>
        %1166 = arith.cmpi eq, %2, %1165 : vector<4x4xi32>
        %c1_i32_190 = arith.constant 1 : i32
        %1167 = vector.broadcast %c1_i32_190 : i32 to vector<4x4xi32>
        %1168 = arith.cmpi eq, %3, %1167 : vector<4x4xi32>
        %1169 = arith.andi %1166, %1168 : vector<4x4xi1>
        %1170 = arith.extui %1169 : vector<4x4xi1> to vector<4x4xi32>
        %1171 = arith.sitofp %1170 : vector<4x4xi32> to vector<4x4xf32>
        %c3_i32_191 = arith.constant 3 : i32
        %1172 = vector.broadcast %c3_i32_191 : i32 to vector<4x4xi32>
        %1173 = arith.cmpi eq, %2, %1172 : vector<4x4xi32>
        %c3_i32_192 = arith.constant 3 : i32
        %1174 = vector.broadcast %c3_i32_192 : i32 to vector<4x4xi32>
        %1175 = arith.cmpi eq, %3, %1174 : vector<4x4xi32>
        %1176 = arith.andi %1173, %1175 : vector<4x4xi1>
        %1177 = arith.extui %1176 : vector<4x4xi1> to vector<4x4xi32>
        %1178 = arith.sitofp %1177 : vector<4x4xi32> to vector<4x4xf32>
        %c1_i32_193 = arith.constant 1 : i32
        %1179 = vector.broadcast %c1_i32_193 : i32 to vector<4x4xi32>
        %1180 = arith.cmpi eq, %2, %1179 : vector<4x4xi32>
        %c3_i32_194 = arith.constant 3 : i32
        %1181 = vector.broadcast %c3_i32_194 : i32 to vector<4x4xi32>
        %1182 = arith.cmpi eq, %3, %1181 : vector<4x4xi32>
        %1183 = arith.andi %1180, %1182 : vector<4x4xi1>
        %1184 = arith.extui %1183 : vector<4x4xi1> to vector<4x4xi32>
        %1185 = arith.sitofp %1184 : vector<4x4xi32> to vector<4x4xf32>
        %c3_i32_195 = arith.constant 3 : i32
        %1186 = vector.broadcast %c3_i32_195 : i32 to vector<4x4xi32>
        %1187 = arith.cmpi eq, %2, %1186 : vector<4x4xi32>
        %c1_i32_196 = arith.constant 1 : i32
        %1188 = vector.broadcast %c1_i32_196 : i32 to vector<4x4xi32>
        %1189 = arith.cmpi eq, %3, %1188 : vector<4x4xi32>
        %1190 = arith.andi %1187, %1189 : vector<4x4xi1>
        %1191 = arith.extui %1190 : vector<4x4xi1> to vector<4x4xi32>
        %1192 = arith.sitofp %1191 : vector<4x4xi32> to vector<4x4xf32>
        %cst_197 = arith.constant 1.000000e+00 : f32
        %1193 = vector.broadcast %cst_197 : f32 to vector<1x1xf32>
        %1194 = arith.subf %1162, %1193 : vector<1x1xf32>
        %1195 = arith.addf %1171, %1178 : vector<4x4xf32>
        %1196 = vector.broadcast %1194 : vector<1x1xf32> to vector<4x4xf32>
        %1197 = arith.mulf %1196, %1195 : vector<4x4xf32>
        %1198 = arith.addf %6, %1197 : vector<4x4xf32>
        %1199 = vector.broadcast %1164 : vector<1x1xf32> to vector<4x4xf32>
        %1200 = arith.mulf %1199, %1185 : vector<4x4xf32>
        %1201 = arith.addf %1198, %1200 : vector<4x4xf32>
        %1202 = vector.broadcast %1164 : vector<1x1xf32> to vector<4x4xf32>
        %1203 = arith.mulf %1202, %1192 : vector<4x4xf32>
        %1204 = arith.subf %1201, %1203 : vector<4x4xf32>
        %cst_198 = arith.constant 1.000000e+00 : f32
        %1205 = vector.broadcast %cst_198 : f32 to vector<1x1xf32>
        %1206 = arith.subf %1162, %1205 : vector<1x1xf32>
        %1207 = arith.addf %1171, %1178 : vector<4x4xf32>
        %1208 = vector.broadcast %1206 : vector<1x1xf32> to vector<4x4xf32>
        %1209 = arith.mulf %1208, %1207 : vector<4x4xf32>
        %1210 = arith.addf %6, %1209 : vector<4x4xf32>
        %1211 = vector.broadcast %1164 : vector<1x1xf32> to vector<4x4xf32>
        %1212 = arith.mulf %1211, %1185 : vector<4x4xf32>
        %1213 = arith.subf %1210, %1212 : vector<4x4xf32>
        %1214 = vector.broadcast %1164 : vector<1x1xf32> to vector<4x4xf32>
        %1215 = arith.mulf %1214, %1192 : vector<4x4xf32>
        %1216 = arith.addf %1213, %1215 : vector<4x4xf32>
        %1217 = vector.extract_strided_slice %1085 {offsets = [0, 0], sizes = [4, 1], strides = [1, 1]} : vector<4x4xf32> to vector<4x1xf32>
        %1218 = vector.extract_strided_slice %1204 {offsets = [0, 0], sizes = [1, 4], strides = [1, 1]} : vector<4x4xf32> to vector<1x4xf32>
        %1219 = vector.broadcast %1217 : vector<4x1xf32> to vector<4x4xf32>
        %1220 = vector.broadcast %1218 : vector<1x4xf32> to vector<4x4xf32>
        %1221 = arith.mulf %1219, %1220 : vector<4x4xf32>
        %1222 = vector.extract_strided_slice %1085 {offsets = [0, 1], sizes = [4, 1], strides = [1, 1]} : vector<4x4xf32> to vector<4x1xf32>
        %1223 = vector.extract_strided_slice %1204 {offsets = [1, 0], sizes = [1, 4], strides = [1, 1]} : vector<4x4xf32> to vector<1x4xf32>
        %1224 = vector.broadcast %1222 : vector<4x1xf32> to vector<4x4xf32>
        %1225 = vector.broadcast %1223 : vector<1x4xf32> to vector<4x4xf32>
        %1226 = arith.mulf %1224, %1225 : vector<4x4xf32>
        %1227 = arith.addf %1221, %1226 : vector<4x4xf32>
        %1228 = vector.extract_strided_slice %1085 {offsets = [0, 2], sizes = [4, 1], strides = [1, 1]} : vector<4x4xf32> to vector<4x1xf32>
        %1229 = vector.extract_strided_slice %1204 {offsets = [2, 0], sizes = [1, 4], strides = [1, 1]} : vector<4x4xf32> to vector<1x4xf32>
        %1230 = vector.broadcast %1228 : vector<4x1xf32> to vector<4x4xf32>
        %1231 = vector.broadcast %1229 : vector<1x4xf32> to vector<4x4xf32>
        %1232 = arith.mulf %1230, %1231 : vector<4x4xf32>
        %1233 = arith.addf %1227, %1232 : vector<4x4xf32>
        %1234 = vector.extract_strided_slice %1085 {offsets = [0, 3], sizes = [4, 1], strides = [1, 1]} : vector<4x4xf32> to vector<4x1xf32>
        %1235 = vector.extract_strided_slice %1204 {offsets = [3, 0], sizes = [1, 4], strides = [1, 1]} : vector<4x4xf32> to vector<1x4xf32>
        %1236 = vector.broadcast %1234 : vector<4x1xf32> to vector<4x4xf32>
        %1237 = vector.broadcast %1235 : vector<1x4xf32> to vector<4x4xf32>
        %1238 = arith.mulf %1236, %1237 : vector<4x4xf32>
        %1239 = arith.addf %1233, %1238 : vector<4x4xf32>
        %1240 = vector.extract_strided_slice %1216 {offsets = [0, 0], sizes = [4, 1], strides = [1, 1]} : vector<4x4xf32> to vector<4x1xf32>
        %1241 = vector.extract_strided_slice %1239 {offsets = [0, 0], sizes = [1, 4], strides = [1, 1]} : vector<4x4xf32> to vector<1x4xf32>
        %1242 = vector.broadcast %1240 : vector<4x1xf32> to vector<4x4xf32>
        %1243 = vector.broadcast %1241 : vector<1x4xf32> to vector<4x4xf32>
        %1244 = arith.mulf %1242, %1243 : vector<4x4xf32>
        %1245 = vector.extract_strided_slice %1216 {offsets = [0, 1], sizes = [4, 1], strides = [1, 1]} : vector<4x4xf32> to vector<4x1xf32>
        %1246 = vector.extract_strided_slice %1239 {offsets = [1, 0], sizes = [1, 4], strides = [1, 1]} : vector<4x4xf32> to vector<1x4xf32>
        %1247 = vector.broadcast %1245 : vector<4x1xf32> to vector<4x4xf32>
        %1248 = vector.broadcast %1246 : vector<1x4xf32> to vector<4x4xf32>
        %1249 = arith.mulf %1247, %1248 : vector<4x4xf32>
        %1250 = arith.addf %1244, %1249 : vector<4x4xf32>
        %1251 = vector.extract_strided_slice %1216 {offsets = [0, 2], sizes = [4, 1], strides = [1, 1]} : vector<4x4xf32> to vector<4x1xf32>
        %1252 = vector.extract_strided_slice %1239 {offsets = [2, 0], sizes = [1, 4], strides = [1, 1]} : vector<4x4xf32> to vector<1x4xf32>
        %1253 = vector.broadcast %1251 : vector<4x1xf32> to vector<4x4xf32>
        %1254 = vector.broadcast %1252 : vector<1x4xf32> to vector<4x4xf32>
        %1255 = arith.mulf %1253, %1254 : vector<4x4xf32>
        %1256 = arith.addf %1250, %1255 : vector<4x4xf32>
        %1257 = vector.extract_strided_slice %1216 {offsets = [0, 3], sizes = [4, 1], strides = [1, 1]} : vector<4x4xf32> to vector<4x1xf32>
        %1258 = vector.extract_strided_slice %1239 {offsets = [3, 0], sizes = [1, 4], strides = [1, 1]} : vector<4x4xf32> to vector<1x4xf32>
        %1259 = vector.broadcast %1257 : vector<4x1xf32> to vector<4x4xf32>
        %1260 = vector.broadcast %1258 : vector<1x4xf32> to vector<4x4xf32>
        %1261 = arith.mulf %1259, %1260 : vector<4x4xf32>
        %1262 = arith.addf %1256, %1261 : vector<4x4xf32>
        %1263 = vector.extract_strided_slice %1108 {offsets = [0, 0], sizes = [4, 1], strides = [1, 1]} : vector<4x4xf32> to vector<4x1xf32>
        %1264 = vector.extract_strided_slice %1204 {offsets = [0, 0], sizes = [1, 4], strides = [1, 1]} : vector<4x4xf32> to vector<1x4xf32>
        %1265 = vector.broadcast %1263 : vector<4x1xf32> to vector<4x4xf32>
        %1266 = vector.broadcast %1264 : vector<1x4xf32> to vector<4x4xf32>
        %1267 = arith.mulf %1265, %1266 : vector<4x4xf32>
        %1268 = vector.extract_strided_slice %1108 {offsets = [0, 1], sizes = [4, 1], strides = [1, 1]} : vector<4x4xf32> to vector<4x1xf32>
        %1269 = vector.extract_strided_slice %1204 {offsets = [1, 0], sizes = [1, 4], strides = [1, 1]} : vector<4x4xf32> to vector<1x4xf32>
        %1270 = vector.broadcast %1268 : vector<4x1xf32> to vector<4x4xf32>
        %1271 = vector.broadcast %1269 : vector<1x4xf32> to vector<4x4xf32>
        %1272 = arith.mulf %1270, %1271 : vector<4x4xf32>
        %1273 = arith.addf %1267, %1272 : vector<4x4xf32>
        %1274 = vector.extract_strided_slice %1108 {offsets = [0, 2], sizes = [4, 1], strides = [1, 1]} : vector<4x4xf32> to vector<4x1xf32>
        %1275 = vector.extract_strided_slice %1204 {offsets = [2, 0], sizes = [1, 4], strides = [1, 1]} : vector<4x4xf32> to vector<1x4xf32>
        %1276 = vector.broadcast %1274 : vector<4x1xf32> to vector<4x4xf32>
        %1277 = vector.broadcast %1275 : vector<1x4xf32> to vector<4x4xf32>
        %1278 = arith.mulf %1276, %1277 : vector<4x4xf32>
        %1279 = arith.addf %1273, %1278 : vector<4x4xf32>
        %1280 = vector.extract_strided_slice %1108 {offsets = [0, 3], sizes = [4, 1], strides = [1, 1]} : vector<4x4xf32> to vector<4x1xf32>
        %1281 = vector.extract_strided_slice %1204 {offsets = [3, 0], sizes = [1, 4], strides = [1, 1]} : vector<4x4xf32> to vector<1x4xf32>
        %1282 = vector.broadcast %1280 : vector<4x1xf32> to vector<4x4xf32>
        %1283 = vector.broadcast %1281 : vector<1x4xf32> to vector<4x4xf32>
        %1284 = arith.mulf %1282, %1283 : vector<4x4xf32>
        %1285 = arith.addf %1279, %1284 : vector<4x4xf32>
        %1286 = vector.extract_strided_slice %1216 {offsets = [0, 0], sizes = [4, 1], strides = [1, 1]} : vector<4x4xf32> to vector<4x1xf32>
        %1287 = vector.extract_strided_slice %1131 {offsets = [0, 0], sizes = [1, 4], strides = [1, 1]} : vector<4x4xf32> to vector<1x4xf32>
        %1288 = vector.broadcast %1286 : vector<4x1xf32> to vector<4x4xf32>
        %1289 = vector.broadcast %1287 : vector<1x4xf32> to vector<4x4xf32>
        %1290 = arith.mulf %1288, %1289 : vector<4x4xf32>
        %1291 = vector.extract_strided_slice %1216 {offsets = [0, 1], sizes = [4, 1], strides = [1, 1]} : vector<4x4xf32> to vector<4x1xf32>
        %1292 = vector.extract_strided_slice %1131 {offsets = [1, 0], sizes = [1, 4], strides = [1, 1]} : vector<4x4xf32> to vector<1x4xf32>
        %1293 = vector.broadcast %1291 : vector<4x1xf32> to vector<4x4xf32>
        %1294 = vector.broadcast %1292 : vector<1x4xf32> to vector<4x4xf32>
        %1295 = arith.mulf %1293, %1294 : vector<4x4xf32>
        %1296 = arith.addf %1290, %1295 : vector<4x4xf32>
        %1297 = vector.extract_strided_slice %1216 {offsets = [0, 2], sizes = [4, 1], strides = [1, 1]} : vector<4x4xf32> to vector<4x1xf32>
        %1298 = vector.extract_strided_slice %1131 {offsets = [2, 0], sizes = [1, 4], strides = [1, 1]} : vector<4x4xf32> to vector<1x4xf32>
        %1299 = vector.broadcast %1297 : vector<4x1xf32> to vector<4x4xf32>
        %1300 = vector.broadcast %1298 : vector<1x4xf32> to vector<4x4xf32>
        %1301 = arith.mulf %1299, %1300 : vector<4x4xf32>
        %1302 = arith.addf %1296, %1301 : vector<4x4xf32>
        %1303 = vector.extract_strided_slice %1216 {offsets = [0, 3], sizes = [4, 1], strides = [1, 1]} : vector<4x4xf32> to vector<4x1xf32>
        %1304 = vector.extract_strided_slice %1131 {offsets = [3, 0], sizes = [1, 4], strides = [1, 1]} : vector<4x4xf32> to vector<1x4xf32>
        %1305 = vector.broadcast %1303 : vector<4x1xf32> to vector<4x4xf32>
        %1306 = vector.broadcast %1304 : vector<1x4xf32> to vector<4x4xf32>
        %1307 = arith.mulf %1305, %1306 : vector<4x4xf32>
        %1308 = arith.addf %1302, %1307 : vector<4x4xf32>
        %1309 = vector.extract_strided_slice %1262 {offsets = [2, 2], sizes = [1, 1], strides = [1, 1]} : vector<4x4xf32> to vector<1x1xf32>
        %1310 = vector.extract_strided_slice %1262 {offsets = [3, 3], sizes = [1, 1], strides = [1, 1]} : vector<4x4xf32> to vector<1x1xf32>
        %1311 = vector.extract_strided_slice %1262 {offsets = [2, 3], sizes = [1, 1], strides = [1, 1]} : vector<4x4xf32> to vector<1x1xf32>
        %1312 = math.absf %1311 : vector<1x1xf32>
        %cst_199 = arith.constant 9.99999996E-13 : f32
        %1313 = vector.broadcast %cst_199 : f32 to vector<1x1xf32>
        %1314 = arith.cmpf olt, %1312, %1313 : vector<1x1xf32>
        %cst_200 = arith.constant 1.000000e+00 : f32
        %1315 = vector.broadcast %cst_200 : f32 to vector<1x1xf32>
        %1316 = arith.select %1314, %1315, %1311 : vector<1x1xi1>, vector<1x1xf32>
        %1317 = arith.subf %1310, %1309 : vector<1x1xf32>
        %cst_201 = arith.constant 2.000000e+00 : f32
        %1318 = vector.broadcast %cst_201 : f32 to vector<1x1xf32>
        %1319 = arith.mulf %1318, %1316 : vector<1x1xf32>
        %1320 = arith.divf %1317, %1319 : vector<1x1xf32>
        %cst_202 = arith.constant 0.000000e+00 : f32
        %1321 = vector.broadcast %cst_202 : f32 to vector<1x1xf32>
        %1322 = arith.cmpf oge, %1320, %1321 : vector<1x1xf32>
        %cst_203 = arith.constant 1.000000e+00 : f32
        %cst_204 = arith.constant -1.000000e+00 : f32
        %1323 = vector.broadcast %cst_203 : f32 to vector<1x1xf32>
        %1324 = vector.broadcast %cst_204 : f32 to vector<1x1xf32>
        %1325 = arith.select %1322, %1323, %1324 : vector<1x1xi1>, vector<1x1xf32>
        %1326 = math.absf %1320 : vector<1x1xf32>
        %1327 = arith.mulf %1320, %1320 : vector<1x1xf32>
        %cst_205 = arith.constant 1.000000e+00 : f32
        %1328 = vector.broadcast %cst_205 : f32 to vector<1x1xf32>
        %1329 = arith.addf %1328, %1327 : vector<1x1xf32>
        %1330 = math.sqrt %1329 : vector<1x1xf32>
        %1331 = arith.addf %1326, %1330 : vector<1x1xf32>
        %1332 = arith.divf %1325, %1331 : vector<1x1xf32>
        %1333 = arith.mulf %1332, %1332 : vector<1x1xf32>
        %cst_206 = arith.constant 1.000000e+00 : f32
        %1334 = vector.broadcast %cst_206 : f32 to vector<1x1xf32>
        %1335 = arith.addf %1334, %1333 : vector<1x1xf32>
        %1336 = math.rsqrt %1335 : vector<1x1xf32>
        %1337 = arith.mulf %1332, %1336 : vector<1x1xf32>
        %cst_207 = arith.constant 1.000000e+00 : f32
        %1338 = vector.broadcast %cst_207 : f32 to vector<1x1xf32>
        %1339 = arith.select %1314, %1338, %1336 : vector<1x1xi1>, vector<1x1xf32>
        %cst_208 = arith.constant 0.000000e+00 : f32
        %1340 = vector.broadcast %cst_208 : f32 to vector<1x1xf32>
        %1341 = arith.select %1314, %1340, %1337 : vector<1x1xi1>, vector<1x1xf32>
        %c2_i32_209 = arith.constant 2 : i32
        %1342 = vector.broadcast %c2_i32_209 : i32 to vector<4x4xi32>
        %1343 = arith.cmpi eq, %2, %1342 : vector<4x4xi32>
        %c2_i32_210 = arith.constant 2 : i32
        %1344 = vector.broadcast %c2_i32_210 : i32 to vector<4x4xi32>
        %1345 = arith.cmpi eq, %3, %1344 : vector<4x4xi32>
        %1346 = arith.andi %1343, %1345 : vector<4x4xi1>
        %1347 = arith.extui %1346 : vector<4x4xi1> to vector<4x4xi32>
        %1348 = arith.sitofp %1347 : vector<4x4xi32> to vector<4x4xf32>
        %c3_i32_211 = arith.constant 3 : i32
        %1349 = vector.broadcast %c3_i32_211 : i32 to vector<4x4xi32>
        %1350 = arith.cmpi eq, %2, %1349 : vector<4x4xi32>
        %c3_i32_212 = arith.constant 3 : i32
        %1351 = vector.broadcast %c3_i32_212 : i32 to vector<4x4xi32>
        %1352 = arith.cmpi eq, %3, %1351 : vector<4x4xi32>
        %1353 = arith.andi %1350, %1352 : vector<4x4xi1>
        %1354 = arith.extui %1353 : vector<4x4xi1> to vector<4x4xi32>
        %1355 = arith.sitofp %1354 : vector<4x4xi32> to vector<4x4xf32>
        %c2_i32_213 = arith.constant 2 : i32
        %1356 = vector.broadcast %c2_i32_213 : i32 to vector<4x4xi32>
        %1357 = arith.cmpi eq, %2, %1356 : vector<4x4xi32>
        %c3_i32_214 = arith.constant 3 : i32
        %1358 = vector.broadcast %c3_i32_214 : i32 to vector<4x4xi32>
        %1359 = arith.cmpi eq, %3, %1358 : vector<4x4xi32>
        %1360 = arith.andi %1357, %1359 : vector<4x4xi1>
        %1361 = arith.extui %1360 : vector<4x4xi1> to vector<4x4xi32>
        %1362 = arith.sitofp %1361 : vector<4x4xi32> to vector<4x4xf32>
        %c3_i32_215 = arith.constant 3 : i32
        %1363 = vector.broadcast %c3_i32_215 : i32 to vector<4x4xi32>
        %1364 = arith.cmpi eq, %2, %1363 : vector<4x4xi32>
        %c2_i32_216 = arith.constant 2 : i32
        %1365 = vector.broadcast %c2_i32_216 : i32 to vector<4x4xi32>
        %1366 = arith.cmpi eq, %3, %1365 : vector<4x4xi32>
        %1367 = arith.andi %1364, %1366 : vector<4x4xi1>
        %1368 = arith.extui %1367 : vector<4x4xi1> to vector<4x4xi32>
        %1369 = arith.sitofp %1368 : vector<4x4xi32> to vector<4x4xf32>
        %cst_217 = arith.constant 1.000000e+00 : f32
        %1370 = vector.broadcast %cst_217 : f32 to vector<1x1xf32>
        %1371 = arith.subf %1339, %1370 : vector<1x1xf32>
        %1372 = arith.addf %1348, %1355 : vector<4x4xf32>
        %1373 = vector.broadcast %1371 : vector<1x1xf32> to vector<4x4xf32>
        %1374 = arith.mulf %1373, %1372 : vector<4x4xf32>
        %1375 = arith.addf %6, %1374 : vector<4x4xf32>
        %1376 = vector.broadcast %1341 : vector<1x1xf32> to vector<4x4xf32>
        %1377 = arith.mulf %1376, %1362 : vector<4x4xf32>
        %1378 = arith.addf %1375, %1377 : vector<4x4xf32>
        %1379 = vector.broadcast %1341 : vector<1x1xf32> to vector<4x4xf32>
        %1380 = arith.mulf %1379, %1369 : vector<4x4xf32>
        %1381 = arith.subf %1378, %1380 : vector<4x4xf32>
        %cst_218 = arith.constant 1.000000e+00 : f32
        %1382 = vector.broadcast %cst_218 : f32 to vector<1x1xf32>
        %1383 = arith.subf %1339, %1382 : vector<1x1xf32>
        %1384 = arith.addf %1348, %1355 : vector<4x4xf32>
        %1385 = vector.broadcast %1383 : vector<1x1xf32> to vector<4x4xf32>
        %1386 = arith.mulf %1385, %1384 : vector<4x4xf32>
        %1387 = arith.addf %6, %1386 : vector<4x4xf32>
        %1388 = vector.broadcast %1341 : vector<1x1xf32> to vector<4x4xf32>
        %1389 = arith.mulf %1388, %1362 : vector<4x4xf32>
        %1390 = arith.subf %1387, %1389 : vector<4x4xf32>
        %1391 = vector.broadcast %1341 : vector<1x1xf32> to vector<4x4xf32>
        %1392 = arith.mulf %1391, %1369 : vector<4x4xf32>
        %1393 = arith.addf %1390, %1392 : vector<4x4xf32>
        %1394 = vector.extract_strided_slice %1262 {offsets = [0, 0], sizes = [4, 1], strides = [1, 1]} : vector<4x4xf32> to vector<4x1xf32>
        %1395 = vector.extract_strided_slice %1381 {offsets = [0, 0], sizes = [1, 4], strides = [1, 1]} : vector<4x4xf32> to vector<1x4xf32>
        %1396 = vector.broadcast %1394 : vector<4x1xf32> to vector<4x4xf32>
        %1397 = vector.broadcast %1395 : vector<1x4xf32> to vector<4x4xf32>
        %1398 = arith.mulf %1396, %1397 : vector<4x4xf32>
        %1399 = vector.extract_strided_slice %1262 {offsets = [0, 1], sizes = [4, 1], strides = [1, 1]} : vector<4x4xf32> to vector<4x1xf32>
        %1400 = vector.extract_strided_slice %1381 {offsets = [1, 0], sizes = [1, 4], strides = [1, 1]} : vector<4x4xf32> to vector<1x4xf32>
        %1401 = vector.broadcast %1399 : vector<4x1xf32> to vector<4x4xf32>
        %1402 = vector.broadcast %1400 : vector<1x4xf32> to vector<4x4xf32>
        %1403 = arith.mulf %1401, %1402 : vector<4x4xf32>
        %1404 = arith.addf %1398, %1403 : vector<4x4xf32>
        %1405 = vector.extract_strided_slice %1262 {offsets = [0, 2], sizes = [4, 1], strides = [1, 1]} : vector<4x4xf32> to vector<4x1xf32>
        %1406 = vector.extract_strided_slice %1381 {offsets = [2, 0], sizes = [1, 4], strides = [1, 1]} : vector<4x4xf32> to vector<1x4xf32>
        %1407 = vector.broadcast %1405 : vector<4x1xf32> to vector<4x4xf32>
        %1408 = vector.broadcast %1406 : vector<1x4xf32> to vector<4x4xf32>
        %1409 = arith.mulf %1407, %1408 : vector<4x4xf32>
        %1410 = arith.addf %1404, %1409 : vector<4x4xf32>
        %1411 = vector.extract_strided_slice %1262 {offsets = [0, 3], sizes = [4, 1], strides = [1, 1]} : vector<4x4xf32> to vector<4x1xf32>
        %1412 = vector.extract_strided_slice %1381 {offsets = [3, 0], sizes = [1, 4], strides = [1, 1]} : vector<4x4xf32> to vector<1x4xf32>
        %1413 = vector.broadcast %1411 : vector<4x1xf32> to vector<4x4xf32>
        %1414 = vector.broadcast %1412 : vector<1x4xf32> to vector<4x4xf32>
        %1415 = arith.mulf %1413, %1414 : vector<4x4xf32>
        %1416 = arith.addf %1410, %1415 : vector<4x4xf32>
        %1417 = vector.extract_strided_slice %1393 {offsets = [0, 0], sizes = [4, 1], strides = [1, 1]} : vector<4x4xf32> to vector<4x1xf32>
        %1418 = vector.extract_strided_slice %1416 {offsets = [0, 0], sizes = [1, 4], strides = [1, 1]} : vector<4x4xf32> to vector<1x4xf32>
        %1419 = vector.broadcast %1417 : vector<4x1xf32> to vector<4x4xf32>
        %1420 = vector.broadcast %1418 : vector<1x4xf32> to vector<4x4xf32>
        %1421 = arith.mulf %1419, %1420 : vector<4x4xf32>
        %1422 = vector.extract_strided_slice %1393 {offsets = [0, 1], sizes = [4, 1], strides = [1, 1]} : vector<4x4xf32> to vector<4x1xf32>
        %1423 = vector.extract_strided_slice %1416 {offsets = [1, 0], sizes = [1, 4], strides = [1, 1]} : vector<4x4xf32> to vector<1x4xf32>
        %1424 = vector.broadcast %1422 : vector<4x1xf32> to vector<4x4xf32>
        %1425 = vector.broadcast %1423 : vector<1x4xf32> to vector<4x4xf32>
        %1426 = arith.mulf %1424, %1425 : vector<4x4xf32>
        %1427 = arith.addf %1421, %1426 : vector<4x4xf32>
        %1428 = vector.extract_strided_slice %1393 {offsets = [0, 2], sizes = [4, 1], strides = [1, 1]} : vector<4x4xf32> to vector<4x1xf32>
        %1429 = vector.extract_strided_slice %1416 {offsets = [2, 0], sizes = [1, 4], strides = [1, 1]} : vector<4x4xf32> to vector<1x4xf32>
        %1430 = vector.broadcast %1428 : vector<4x1xf32> to vector<4x4xf32>
        %1431 = vector.broadcast %1429 : vector<1x4xf32> to vector<4x4xf32>
        %1432 = arith.mulf %1430, %1431 : vector<4x4xf32>
        %1433 = arith.addf %1427, %1432 : vector<4x4xf32>
        %1434 = vector.extract_strided_slice %1393 {offsets = [0, 3], sizes = [4, 1], strides = [1, 1]} : vector<4x4xf32> to vector<4x1xf32>
        %1435 = vector.extract_strided_slice %1416 {offsets = [3, 0], sizes = [1, 4], strides = [1, 1]} : vector<4x4xf32> to vector<1x4xf32>
        %1436 = vector.broadcast %1434 : vector<4x1xf32> to vector<4x4xf32>
        %1437 = vector.broadcast %1435 : vector<1x4xf32> to vector<4x4xf32>
        %1438 = arith.mulf %1436, %1437 : vector<4x4xf32>
        %1439 = arith.addf %1433, %1438 : vector<4x4xf32>
        %1440 = vector.extract_strided_slice %1285 {offsets = [0, 0], sizes = [4, 1], strides = [1, 1]} : vector<4x4xf32> to vector<4x1xf32>
        %1441 = vector.extract_strided_slice %1381 {offsets = [0, 0], sizes = [1, 4], strides = [1, 1]} : vector<4x4xf32> to vector<1x4xf32>
        %1442 = vector.broadcast %1440 : vector<4x1xf32> to vector<4x4xf32>
        %1443 = vector.broadcast %1441 : vector<1x4xf32> to vector<4x4xf32>
        %1444 = arith.mulf %1442, %1443 : vector<4x4xf32>
        %1445 = vector.extract_strided_slice %1285 {offsets = [0, 1], sizes = [4, 1], strides = [1, 1]} : vector<4x4xf32> to vector<4x1xf32>
        %1446 = vector.extract_strided_slice %1381 {offsets = [1, 0], sizes = [1, 4], strides = [1, 1]} : vector<4x4xf32> to vector<1x4xf32>
        %1447 = vector.broadcast %1445 : vector<4x1xf32> to vector<4x4xf32>
        %1448 = vector.broadcast %1446 : vector<1x4xf32> to vector<4x4xf32>
        %1449 = arith.mulf %1447, %1448 : vector<4x4xf32>
        %1450 = arith.addf %1444, %1449 : vector<4x4xf32>
        %1451 = vector.extract_strided_slice %1285 {offsets = [0, 2], sizes = [4, 1], strides = [1, 1]} : vector<4x4xf32> to vector<4x1xf32>
        %1452 = vector.extract_strided_slice %1381 {offsets = [2, 0], sizes = [1, 4], strides = [1, 1]} : vector<4x4xf32> to vector<1x4xf32>
        %1453 = vector.broadcast %1451 : vector<4x1xf32> to vector<4x4xf32>
        %1454 = vector.broadcast %1452 : vector<1x4xf32> to vector<4x4xf32>
        %1455 = arith.mulf %1453, %1454 : vector<4x4xf32>
        %1456 = arith.addf %1450, %1455 : vector<4x4xf32>
        %1457 = vector.extract_strided_slice %1285 {offsets = [0, 3], sizes = [4, 1], strides = [1, 1]} : vector<4x4xf32> to vector<4x1xf32>
        %1458 = vector.extract_strided_slice %1381 {offsets = [3, 0], sizes = [1, 4], strides = [1, 1]} : vector<4x4xf32> to vector<1x4xf32>
        %1459 = vector.broadcast %1457 : vector<4x1xf32> to vector<4x4xf32>
        %1460 = vector.broadcast %1458 : vector<1x4xf32> to vector<4x4xf32>
        %1461 = arith.mulf %1459, %1460 : vector<4x4xf32>
        %1462 = arith.addf %1456, %1461 : vector<4x4xf32>
        %1463 = vector.extract_strided_slice %1393 {offsets = [0, 0], sizes = [4, 1], strides = [1, 1]} : vector<4x4xf32> to vector<4x1xf32>
        %1464 = vector.extract_strided_slice %1308 {offsets = [0, 0], sizes = [1, 4], strides = [1, 1]} : vector<4x4xf32> to vector<1x4xf32>
        %1465 = vector.broadcast %1463 : vector<4x1xf32> to vector<4x4xf32>
        %1466 = vector.broadcast %1464 : vector<1x4xf32> to vector<4x4xf32>
        %1467 = arith.mulf %1465, %1466 : vector<4x4xf32>
        %1468 = vector.extract_strided_slice %1393 {offsets = [0, 1], sizes = [4, 1], strides = [1, 1]} : vector<4x4xf32> to vector<4x1xf32>
        %1469 = vector.extract_strided_slice %1308 {offsets = [1, 0], sizes = [1, 4], strides = [1, 1]} : vector<4x4xf32> to vector<1x4xf32>
        %1470 = vector.broadcast %1468 : vector<4x1xf32> to vector<4x4xf32>
        %1471 = vector.broadcast %1469 : vector<1x4xf32> to vector<4x4xf32>
        %1472 = arith.mulf %1470, %1471 : vector<4x4xf32>
        %1473 = arith.addf %1467, %1472 : vector<4x4xf32>
        %1474 = vector.extract_strided_slice %1393 {offsets = [0, 2], sizes = [4, 1], strides = [1, 1]} : vector<4x4xf32> to vector<4x1xf32>
        %1475 = vector.extract_strided_slice %1308 {offsets = [2, 0], sizes = [1, 4], strides = [1, 1]} : vector<4x4xf32> to vector<1x4xf32>
        %1476 = vector.broadcast %1474 : vector<4x1xf32> to vector<4x4xf32>
        %1477 = vector.broadcast %1475 : vector<1x4xf32> to vector<4x4xf32>
        %1478 = arith.mulf %1476, %1477 : vector<4x4xf32>
        %1479 = arith.addf %1473, %1478 : vector<4x4xf32>
        %1480 = vector.extract_strided_slice %1393 {offsets = [0, 3], sizes = [4, 1], strides = [1, 1]} : vector<4x4xf32> to vector<4x1xf32>
        %1481 = vector.extract_strided_slice %1308 {offsets = [3, 0], sizes = [1, 4], strides = [1, 1]} : vector<4x4xf32> to vector<1x4xf32>
        %1482 = vector.broadcast %1480 : vector<4x1xf32> to vector<4x4xf32>
        %1483 = vector.broadcast %1481 : vector<1x4xf32> to vector<4x4xf32>
        %1484 = arith.mulf %1482, %1483 : vector<4x4xf32>
        %1485 = arith.addf %1479, %1484 : vector<4x4xf32>
        scf.yield %1439, %1462, %1485 : vector<4x4xf32>, vector<4x4xf32>, vector<4x4xf32>
      }
      %258 = tpu.iota {dimensions = array<i32: 1>} : vector<1x4xi32>
      %259 = vector.extract_strided_slice %257#0 {offsets = [0, 0], sizes = [1, 1], strides = [1, 1]} : vector<4x4xf32> to vector<1x1xf32>
      %c0_i32_90 = arith.constant 0 : i32
      %260 = vector.broadcast %c0_i32_90 : i32 to vector<1x4xi32>
      %261 = arith.cmpi eq, %258, %260 : vector<1x4xi32>
      %262 = arith.extui %261 : vector<1x4xi1> to vector<1x4xi32>
      %263 = arith.sitofp %262 : vector<1x4xi32> to vector<1x4xf32>
      %264 = vector.broadcast %259 : vector<1x1xf32> to vector<1x4xf32>
      %265 = arith.mulf %264, %263 : vector<1x4xf32>
      %266 = vector.extract_strided_slice %257#0 {offsets = [1, 1], sizes = [1, 1], strides = [1, 1]} : vector<4x4xf32> to vector<1x1xf32>
      %c1_i32_91 = arith.constant 1 : i32
      %267 = vector.broadcast %c1_i32_91 : i32 to vector<1x4xi32>
      %268 = arith.cmpi eq, %258, %267 : vector<1x4xi32>
      %269 = arith.extui %268 : vector<1x4xi1> to vector<1x4xi32>
      %270 = arith.sitofp %269 : vector<1x4xi32> to vector<1x4xf32>
      %271 = vector.broadcast %266 : vector<1x1xf32> to vector<1x4xf32>
      %272 = arith.mulf %271, %270 : vector<1x4xf32>
      %273 = arith.addf %265, %272 : vector<1x4xf32>
      %274 = vector.extract_strided_slice %257#0 {offsets = [2, 2], sizes = [1, 1], strides = [1, 1]} : vector<4x4xf32> to vector<1x1xf32>
      %c2_i32 = arith.constant 2 : i32
      %275 = vector.broadcast %c2_i32 : i32 to vector<1x4xi32>
      %276 = arith.cmpi eq, %258, %275 : vector<1x4xi32>
      %277 = arith.extui %276 : vector<1x4xi1> to vector<1x4xi32>
      %278 = arith.sitofp %277 : vector<1x4xi32> to vector<1x4xf32>
      %279 = vector.broadcast %274 : vector<1x1xf32> to vector<1x4xf32>
      %280 = arith.mulf %279, %278 : vector<1x4xf32>
      %281 = arith.addf %273, %280 : vector<1x4xf32>
      %282 = vector.extract_strided_slice %257#0 {offsets = [3, 3], sizes = [1, 1], strides = [1, 1]} : vector<4x4xf32> to vector<1x1xf32>
      %c3_i32 = arith.constant 3 : i32
      %283 = vector.broadcast %c3_i32 : i32 to vector<1x4xi32>
      %284 = arith.cmpi eq, %258, %283 : vector<1x4xi32>
      %285 = arith.extui %284 : vector<1x4xi1> to vector<1x4xi32>
      %286 = arith.sitofp %285 : vector<1x4xi32> to vector<1x4xf32>
      %287 = vector.broadcast %282 : vector<1x1xf32> to vector<1x4xf32>
      %288 = arith.mulf %287, %286 : vector<1x4xf32>
      %289 = arith.addf %281, %288 : vector<1x4xf32>
      %cst_92 = arith.constant 0.000000e+00 : f32
      %290 = vector.broadcast %cst_92 : f32 to vector<1x4xf32>
      %291 = vector.extract_strided_slice %257#0 {offsets = [0, 0], sizes = [1, 1], strides = [1, 1]} : vector<4x4xf32> to vector<1x1xf32>
      %292 = vector.broadcast %291 : vector<1x1xf32> to vector<1x4xf32>
      %293 = arith.cmpf olt, %292, %289 : vector<1x4xf32>
      %294 = arith.extui %293 : vector<1x4xi1> to vector<1x4xi32>
      %295 = arith.sitofp %294 : vector<1x4xi32> to vector<1x4xf32>
      %296 = arith.addf %290, %295 : vector<1x4xf32>
      %297 = vector.broadcast %291 : vector<1x1xf32> to vector<1x4xf32>
      %298 = arith.cmpf oeq, %297, %289 : vector<1x4xf32>
      %c0_i32_93 = arith.constant 0 : i32
      %299 = vector.broadcast %c0_i32_93 : i32 to vector<1x4xi32>
      %300 = arith.cmpi sgt, %258, %299 : vector<1x4xi32>
      %301 = arith.andi %298, %300 : vector<1x4xi1>
      %302 = arith.extui %301 : vector<1x4xi1> to vector<1x4xi32>
      %303 = arith.sitofp %302 : vector<1x4xi32> to vector<1x4xf32>
      %304 = arith.addf %296, %303 : vector<1x4xf32>
      %305 = vector.extract_strided_slice %257#0 {offsets = [1, 1], sizes = [1, 1], strides = [1, 1]} : vector<4x4xf32> to vector<1x1xf32>
      %306 = vector.broadcast %305 : vector<1x1xf32> to vector<1x4xf32>
      %307 = arith.cmpf olt, %306, %289 : vector<1x4xf32>
      %308 = arith.extui %307 : vector<1x4xi1> to vector<1x4xi32>
      %309 = arith.sitofp %308 : vector<1x4xi32> to vector<1x4xf32>
      %310 = arith.addf %304, %309 : vector<1x4xf32>
      %311 = vector.broadcast %305 : vector<1x1xf32> to vector<1x4xf32>
      %312 = arith.cmpf oeq, %311, %289 : vector<1x4xf32>
      %c1_i32_94 = arith.constant 1 : i32
      %313 = vector.broadcast %c1_i32_94 : i32 to vector<1x4xi32>
      %314 = arith.cmpi sgt, %258, %313 : vector<1x4xi32>
      %315 = arith.andi %312, %314 : vector<1x4xi1>
      %316 = arith.extui %315 : vector<1x4xi1> to vector<1x4xi32>
      %317 = arith.sitofp %316 : vector<1x4xi32> to vector<1x4xf32>
      %318 = arith.addf %310, %317 : vector<1x4xf32>
      %319 = vector.extract_strided_slice %257#0 {offsets = [2, 2], sizes = [1, 1], strides = [1, 1]} : vector<4x4xf32> to vector<1x1xf32>
      %320 = vector.broadcast %319 : vector<1x1xf32> to vector<1x4xf32>
      %321 = arith.cmpf olt, %320, %289 : vector<1x4xf32>
      %322 = arith.extui %321 : vector<1x4xi1> to vector<1x4xi32>
      %323 = arith.sitofp %322 : vector<1x4xi32> to vector<1x4xf32>
      %324 = arith.addf %318, %323 : vector<1x4xf32>
      %325 = vector.broadcast %319 : vector<1x1xf32> to vector<1x4xf32>
      %326 = arith.cmpf oeq, %325, %289 : vector<1x4xf32>
      %c2_i32_95 = arith.constant 2 : i32
      %327 = vector.broadcast %c2_i32_95 : i32 to vector<1x4xi32>
      %328 = arith.cmpi sgt, %258, %327 : vector<1x4xi32>
      %329 = arith.andi %326, %328 : vector<1x4xi1>
      %330 = arith.extui %329 : vector<1x4xi1> to vector<1x4xi32>
      %331 = arith.sitofp %330 : vector<1x4xi32> to vector<1x4xf32>
      %332 = arith.addf %324, %331 : vector<1x4xf32>
      %333 = vector.extract_strided_slice %257#0 {offsets = [3, 3], sizes = [1, 1], strides = [1, 1]} : vector<4x4xf32> to vector<1x1xf32>
      %334 = vector.broadcast %333 : vector<1x1xf32> to vector<1x4xf32>
      %335 = arith.cmpf olt, %334, %289 : vector<1x4xf32>
      %336 = arith.extui %335 : vector<1x4xi1> to vector<1x4xi32>
      %337 = arith.sitofp %336 : vector<1x4xi32> to vector<1x4xf32>
      %338 = arith.addf %332, %337 : vector<1x4xf32>
      %339 = vector.broadcast %333 : vector<1x1xf32> to vector<1x4xf32>
      %340 = arith.cmpf oeq, %339, %289 : vector<1x4xf32>
      %c3_i32_96 = arith.constant 3 : i32
      %341 = vector.broadcast %c3_i32_96 : i32 to vector<1x4xi32>
      %342 = arith.cmpi sgt, %258, %341 : vector<1x4xi32>
      %343 = arith.andi %340, %342 : vector<1x4xi1>
      %344 = arith.extui %343 : vector<1x4xi1> to vector<1x4xi32>
      %345 = arith.sitofp %344 : vector<1x4xi32> to vector<1x4xf32>
      %346 = arith.addf %338, %345 : vector<1x4xf32>
      %cst_97 = arith.constant 1.000000e+00 : f32
      %347 = vector.broadcast %cst_97 : f32 to vector<1x4xf32>
      %348 = arith.cmpf olt, %346, %347 : vector<1x4xf32>
      %349 = arith.extui %348 : vector<1x4xi1> to vector<1x4xi32>
      %350 = arith.sitofp %349 : vector<1x4xi32> to vector<1x4xf32>
      %cst_98 = arith.constant 2.000000e+00 : f32
      %351 = vector.broadcast %cst_98 : f32 to vector<1x4xf32>
      %352 = arith.mulf %351, %350 : vector<1x4xf32>
      %353 = vector.extract_strided_slice %1 {offsets = [0, 0], sizes = [4, 1], strides = [1, 1]} : vector<4x4xf32> to vector<4x1xf32>
      %354 = vector.extract_strided_slice %257#1 {offsets = [0, 0], sizes = [1, 4], strides = [1, 1]} : vector<4x4xf32> to vector<1x4xf32>
      %355 = vector.broadcast %353 : vector<4x1xf32> to vector<4x4xf32>
      %356 = vector.broadcast %354 : vector<1x4xf32> to vector<4x4xf32>
      %357 = arith.mulf %355, %356 : vector<4x4xf32>
      %358 = vector.extract_strided_slice %1 {offsets = [0, 1], sizes = [4, 1], strides = [1, 1]} : vector<4x4xf32> to vector<4x1xf32>
      %359 = vector.extract_strided_slice %257#1 {offsets = [1, 0], sizes = [1, 4], strides = [1, 1]} : vector<4x4xf32> to vector<1x4xf32>
      %360 = vector.broadcast %358 : vector<4x1xf32> to vector<4x4xf32>
      %361 = vector.broadcast %359 : vector<1x4xf32> to vector<4x4xf32>
      %362 = arith.mulf %360, %361 : vector<4x4xf32>
      %363 = arith.addf %357, %362 : vector<4x4xf32>
      %364 = vector.extract_strided_slice %1 {offsets = [0, 2], sizes = [4, 1], strides = [1, 1]} : vector<4x4xf32> to vector<4x1xf32>
      %365 = vector.extract_strided_slice %257#1 {offsets = [2, 0], sizes = [1, 4], strides = [1, 1]} : vector<4x4xf32> to vector<1x4xf32>
      %366 = vector.broadcast %364 : vector<4x1xf32> to vector<4x4xf32>
      %367 = vector.broadcast %365 : vector<1x4xf32> to vector<4x4xf32>
      %368 = arith.mulf %366, %367 : vector<4x4xf32>
      %369 = arith.addf %363, %368 : vector<4x4xf32>
      %370 = vector.extract_strided_slice %1 {offsets = [0, 3], sizes = [4, 1], strides = [1, 1]} : vector<4x4xf32> to vector<4x1xf32>
      %371 = vector.extract_strided_slice %257#1 {offsets = [3, 0], sizes = [1, 4], strides = [1, 1]} : vector<4x4xf32> to vector<1x4xf32>
      %372 = vector.broadcast %370 : vector<4x1xf32> to vector<4x4xf32>
      %373 = vector.broadcast %371 : vector<1x4xf32> to vector<4x4xf32>
      %374 = arith.mulf %372, %373 : vector<4x4xf32>
      %375 = arith.addf %369, %374 : vector<4x4xf32>
      %376 = vector.extract_strided_slice %257#2 {offsets = [0, 0], sizes = [4, 1], strides = [1, 1]} : vector<4x4xf32> to vector<4x1xf32>
      %377 = vector.extract_strided_slice %1 {offsets = [0, 0], sizes = [1, 4], strides = [1, 1]} : vector<4x4xf32> to vector<1x4xf32>
      %378 = vector.broadcast %376 : vector<4x1xf32> to vector<4x4xf32>
      %379 = vector.broadcast %377 : vector<1x4xf32> to vector<4x4xf32>
      %380 = arith.mulf %378, %379 : vector<4x4xf32>
      %381 = vector.extract_strided_slice %257#2 {offsets = [0, 1], sizes = [4, 1], strides = [1, 1]} : vector<4x4xf32> to vector<4x1xf32>
      %382 = vector.extract_strided_slice %1 {offsets = [1, 0], sizes = [1, 4], strides = [1, 1]} : vector<4x4xf32> to vector<1x4xf32>
      %383 = vector.broadcast %381 : vector<4x1xf32> to vector<4x4xf32>
      %384 = vector.broadcast %382 : vector<1x4xf32> to vector<4x4xf32>
      %385 = arith.mulf %383, %384 : vector<4x4xf32>
      %386 = arith.addf %380, %385 : vector<4x4xf32>
      %387 = vector.extract_strided_slice %257#2 {offsets = [0, 2], sizes = [4, 1], strides = [1, 1]} : vector<4x4xf32> to vector<4x1xf32>
      %388 = vector.extract_strided_slice %1 {offsets = [2, 0], sizes = [1, 4], strides = [1, 1]} : vector<4x4xf32> to vector<1x4xf32>
      %389 = vector.broadcast %387 : vector<4x1xf32> to vector<4x4xf32>
      %390 = vector.broadcast %388 : vector<1x4xf32> to vector<4x4xf32>
      %391 = arith.mulf %389, %390 : vector<4x4xf32>
      %392 = arith.addf %386, %391 : vector<4x4xf32>
      %393 = vector.extract_strided_slice %257#2 {offsets = [0, 3], sizes = [4, 1], strides = [1, 1]} : vector<4x4xf32> to vector<4x1xf32>
      %394 = vector.extract_strided_slice %1 {offsets = [3, 0], sizes = [1, 4], strides = [1, 1]} : vector<4x4xf32> to vector<1x4xf32>
      %395 = vector.broadcast %393 : vector<4x1xf32> to vector<4x4xf32>
      %396 = vector.broadcast %394 : vector<1x4xf32> to vector<4x4xf32>
      %397 = arith.mulf %395, %396 : vector<4x4xf32>
      %398 = arith.addf %392, %397 : vector<4x4xf32>
      %399 = vector.broadcast %352 : vector<1x4xf32> to vector<4x4xf32>
      %400 = arith.mulf %375, %399 : vector<4x4xf32>
      %401 = vector.extract_strided_slice %400 {offsets = [0, 0], sizes = [4, 1], strides = [1, 1]} : vector<4x4xf32> to vector<4x1xf32>
      %402 = vector.extract_strided_slice %398 {offsets = [0, 0], sizes = [1, 4], strides = [1, 1]} : vector<4x4xf32> to vector<1x4xf32>
      %403 = vector.broadcast %401 : vector<4x1xf32> to vector<4x4xf32>
      %404 = vector.broadcast %402 : vector<1x4xf32> to vector<4x4xf32>
      %405 = arith.mulf %403, %404 : vector<4x4xf32>
      %406 = vector.extract_strided_slice %400 {offsets = [0, 1], sizes = [4, 1], strides = [1, 1]} : vector<4x4xf32> to vector<4x1xf32>
      %407 = vector.extract_strided_slice %398 {offsets = [1, 0], sizes = [1, 4], strides = [1, 1]} : vector<4x4xf32> to vector<1x4xf32>
      %408 = vector.broadcast %406 : vector<4x1xf32> to vector<4x4xf32>
      %409 = vector.broadcast %407 : vector<1x4xf32> to vector<4x4xf32>
      %410 = arith.mulf %408, %409 : vector<4x4xf32>
      %411 = arith.addf %405, %410 : vector<4x4xf32>
      %412 = vector.extract_strided_slice %400 {offsets = [0, 2], sizes = [4, 1], strides = [1, 1]} : vector<4x4xf32> to vector<4x1xf32>
      %413 = vector.extract_strided_slice %398 {offsets = [2, 0], sizes = [1, 4], strides = [1, 1]} : vector<4x4xf32> to vector<1x4xf32>
      %414 = vector.broadcast %412 : vector<4x1xf32> to vector<4x4xf32>
      %415 = vector.broadcast %413 : vector<1x4xf32> to vector<4x4xf32>
      %416 = arith.mulf %414, %415 : vector<4x4xf32>
      %417 = arith.addf %411, %416 : vector<4x4xf32>
      %418 = vector.extract_strided_slice %400 {offsets = [0, 3], sizes = [4, 1], strides = [1, 1]} : vector<4x4xf32> to vector<4x1xf32>
      %419 = vector.extract_strided_slice %398 {offsets = [3, 0], sizes = [1, 4], strides = [1, 1]} : vector<4x4xf32> to vector<1x4xf32>
      %420 = vector.broadcast %418 : vector<4x1xf32> to vector<4x4xf32>
      %421 = vector.broadcast %419 : vector<1x4xf32> to vector<4x4xf32>
      %422 = arith.mulf %420, %421 : vector<4x4xf32>
      %423 = arith.addf %417, %422 : vector<4x4xf32>
      scf.yield %423 : vector<4x4xf32>
    }
    %10 = vector.extract_strided_slice %9 {offsets = [0, 0], sizes = [1, 1], strides = [1, 1]} : vector<4x4xf32> to vector<1x1xf32>
    %c0_3 = arith.constant 0 : index
    %c0_4 = arith.constant 0 : index
    %c0_5 = arith.constant 0 : index
    %11 = vector.load %arg0[%c0_3, %c0_4, %c0_5] : memref<16x4x4xf32, #tpu.memory_space<vmem>>, vector<1x4x4xf32>
    %12 = vector.shape_cast %11 : vector<1x4x4xf32> to vector<4x4xf32>
    %13 = vector.broadcast %10 : vector<1x1xf32> to vector<4x4xf32>
    %14 = arith.mulf %13, %12 : vector<4x4xf32>
    %15 = vector.extract_strided_slice %9 {offsets = [0, 1], sizes = [1, 1], strides = [1, 1]} : vector<4x4xf32> to vector<1x1xf32>
    %c1 = arith.constant 1 : index
    %c0_6 = arith.constant 0 : index
    %c0_7 = arith.constant 0 : index
    %16 = vector.load %arg0[%c1, %c0_6, %c0_7] : memref<16x4x4xf32, #tpu.memory_space<vmem>>, vector<1x4x4xf32>
    %17 = vector.shape_cast %16 : vector<1x4x4xf32> to vector<4x4xf32>
    %18 = vector.broadcast %15 : vector<1x1xf32> to vector<4x4xf32>
    %19 = arith.mulf %18, %17 : vector<4x4xf32>
    %20 = arith.addf %14, %19 : vector<4x4xf32>
    %21 = vector.extract_strided_slice %9 {offsets = [0, 2], sizes = [1, 1], strides = [1, 1]} : vector<4x4xf32> to vector<1x1xf32>
    %c2 = arith.constant 2 : index
    %c0_8 = arith.constant 0 : index
    %c0_9 = arith.constant 0 : index
    %22 = vector.load %arg0[%c2, %c0_8, %c0_9] : memref<16x4x4xf32, #tpu.memory_space<vmem>>, vector<1x4x4xf32>
    %23 = vector.shape_cast %22 : vector<1x4x4xf32> to vector<4x4xf32>
    %24 = vector.broadcast %21 : vector<1x1xf32> to vector<4x4xf32>
    %25 = arith.mulf %24, %23 : vector<4x4xf32>
    %26 = arith.addf %20, %25 : vector<4x4xf32>
    %27 = vector.extract_strided_slice %9 {offsets = [0, 3], sizes = [1, 1], strides = [1, 1]} : vector<4x4xf32> to vector<1x1xf32>
    %c3 = arith.constant 3 : index
    %c0_10 = arith.constant 0 : index
    %c0_11 = arith.constant 0 : index
    %28 = vector.load %arg0[%c3, %c0_10, %c0_11] : memref<16x4x4xf32, #tpu.memory_space<vmem>>, vector<1x4x4xf32>
    %29 = vector.shape_cast %28 : vector<1x4x4xf32> to vector<4x4xf32>
    %30 = vector.broadcast %27 : vector<1x1xf32> to vector<4x4xf32>
    %31 = arith.mulf %30, %29 : vector<4x4xf32>
    %32 = arith.addf %26, %31 : vector<4x4xf32>
    %33 = vector.extract_strided_slice %9 {offsets = [1, 0], sizes = [1, 1], strides = [1, 1]} : vector<4x4xf32> to vector<1x1xf32>
    %c4 = arith.constant 4 : index
    %c0_12 = arith.constant 0 : index
    %c0_13 = arith.constant 0 : index
    %34 = vector.load %arg0[%c4, %c0_12, %c0_13] : memref<16x4x4xf32, #tpu.memory_space<vmem>>, vector<1x4x4xf32>
    %35 = vector.shape_cast %34 : vector<1x4x4xf32> to vector<4x4xf32>
    %36 = vector.broadcast %33 : vector<1x1xf32> to vector<4x4xf32>
    %37 = arith.mulf %36, %35 : vector<4x4xf32>
    %38 = arith.addf %32, %37 : vector<4x4xf32>
    %39 = vector.extract_strided_slice %9 {offsets = [1, 1], sizes = [1, 1], strides = [1, 1]} : vector<4x4xf32> to vector<1x1xf32>
    %c5 = arith.constant 5 : index
    %c0_14 = arith.constant 0 : index
    %c0_15 = arith.constant 0 : index
    %40 = vector.load %arg0[%c5, %c0_14, %c0_15] : memref<16x4x4xf32, #tpu.memory_space<vmem>>, vector<1x4x4xf32>
    %41 = vector.shape_cast %40 : vector<1x4x4xf32> to vector<4x4xf32>
    %42 = vector.broadcast %39 : vector<1x1xf32> to vector<4x4xf32>
    %43 = arith.mulf %42, %41 : vector<4x4xf32>
    %44 = arith.addf %38, %43 : vector<4x4xf32>
    %45 = vector.extract_strided_slice %9 {offsets = [1, 2], sizes = [1, 1], strides = [1, 1]} : vector<4x4xf32> to vector<1x1xf32>
    %c6 = arith.constant 6 : index
    %c0_16 = arith.constant 0 : index
    %c0_17 = arith.constant 0 : index
    %46 = vector.load %arg0[%c6, %c0_16, %c0_17] : memref<16x4x4xf32, #tpu.memory_space<vmem>>, vector<1x4x4xf32>
    %47 = vector.shape_cast %46 : vector<1x4x4xf32> to vector<4x4xf32>
    %48 = vector.broadcast %45 : vector<1x1xf32> to vector<4x4xf32>
    %49 = arith.mulf %48, %47 : vector<4x4xf32>
    %50 = arith.addf %44, %49 : vector<4x4xf32>
    %51 = vector.extract_strided_slice %9 {offsets = [1, 3], sizes = [1, 1], strides = [1, 1]} : vector<4x4xf32> to vector<1x1xf32>
    %c7 = arith.constant 7 : index
    %c0_18 = arith.constant 0 : index
    %c0_19 = arith.constant 0 : index
    %52 = vector.load %arg0[%c7, %c0_18, %c0_19] : memref<16x4x4xf32, #tpu.memory_space<vmem>>, vector<1x4x4xf32>
    %53 = vector.shape_cast %52 : vector<1x4x4xf32> to vector<4x4xf32>
    %54 = vector.broadcast %51 : vector<1x1xf32> to vector<4x4xf32>
    %55 = arith.mulf %54, %53 : vector<4x4xf32>
    %56 = arith.addf %50, %55 : vector<4x4xf32>
    %57 = vector.extract_strided_slice %9 {offsets = [2, 0], sizes = [1, 1], strides = [1, 1]} : vector<4x4xf32> to vector<1x1xf32>
    %c8 = arith.constant 8 : index
    %c0_20 = arith.constant 0 : index
    %c0_21 = arith.constant 0 : index
    %58 = vector.load %arg0[%c8, %c0_20, %c0_21] : memref<16x4x4xf32, #tpu.memory_space<vmem>>, vector<1x4x4xf32>
    %59 = vector.shape_cast %58 : vector<1x4x4xf32> to vector<4x4xf32>
    %60 = vector.broadcast %57 : vector<1x1xf32> to vector<4x4xf32>
    %61 = arith.mulf %60, %59 : vector<4x4xf32>
    %62 = arith.addf %56, %61 : vector<4x4xf32>
    %63 = vector.extract_strided_slice %9 {offsets = [2, 1], sizes = [1, 1], strides = [1, 1]} : vector<4x4xf32> to vector<1x1xf32>
    %c9 = arith.constant 9 : index
    %c0_22 = arith.constant 0 : index
    %c0_23 = arith.constant 0 : index
    %64 = vector.load %arg0[%c9, %c0_22, %c0_23] : memref<16x4x4xf32, #tpu.memory_space<vmem>>, vector<1x4x4xf32>
    %65 = vector.shape_cast %64 : vector<1x4x4xf32> to vector<4x4xf32>
    %66 = vector.broadcast %63 : vector<1x1xf32> to vector<4x4xf32>
    %67 = arith.mulf %66, %65 : vector<4x4xf32>
    %68 = arith.addf %62, %67 : vector<4x4xf32>
    %69 = vector.extract_strided_slice %9 {offsets = [2, 2], sizes = [1, 1], strides = [1, 1]} : vector<4x4xf32> to vector<1x1xf32>
    %c10 = arith.constant 10 : index
    %c0_24 = arith.constant 0 : index
    %c0_25 = arith.constant 0 : index
    %70 = vector.load %arg0[%c10, %c0_24, %c0_25] : memref<16x4x4xf32, #tpu.memory_space<vmem>>, vector<1x4x4xf32>
    %71 = vector.shape_cast %70 : vector<1x4x4xf32> to vector<4x4xf32>
    %72 = vector.broadcast %69 : vector<1x1xf32> to vector<4x4xf32>
    %73 = arith.mulf %72, %71 : vector<4x4xf32>
    %74 = arith.addf %68, %73 : vector<4x4xf32>
    %75 = vector.extract_strided_slice %9 {offsets = [2, 3], sizes = [1, 1], strides = [1, 1]} : vector<4x4xf32> to vector<1x1xf32>
    %c11 = arith.constant 11 : index
    %c0_26 = arith.constant 0 : index
    %c0_27 = arith.constant 0 : index
    %76 = vector.load %arg0[%c11, %c0_26, %c0_27] : memref<16x4x4xf32, #tpu.memory_space<vmem>>, vector<1x4x4xf32>
    %77 = vector.shape_cast %76 : vector<1x4x4xf32> to vector<4x4xf32>
    %78 = vector.broadcast %75 : vector<1x1xf32> to vector<4x4xf32>
    %79 = arith.mulf %78, %77 : vector<4x4xf32>
    %80 = arith.addf %74, %79 : vector<4x4xf32>
    %81 = vector.extract_strided_slice %9 {offsets = [3, 0], sizes = [1, 1], strides = [1, 1]} : vector<4x4xf32> to vector<1x1xf32>
    %c12 = arith.constant 12 : index
    %c0_28 = arith.constant 0 : index
    %c0_29 = arith.constant 0 : index
    %82 = vector.load %arg0[%c12, %c0_28, %c0_29] : memref<16x4x4xf32, #tpu.memory_space<vmem>>, vector<1x4x4xf32>
    %83 = vector.shape_cast %82 : vector<1x4x4xf32> to vector<4x4xf32>
    %84 = vector.broadcast %81 : vector<1x1xf32> to vector<4x4xf32>
    %85 = arith.mulf %84, %83 : vector<4x4xf32>
    %86 = arith.addf %80, %85 : vector<4x4xf32>
    %87 = vector.extract_strided_slice %9 {offsets = [3, 1], sizes = [1, 1], strides = [1, 1]} : vector<4x4xf32> to vector<1x1xf32>
    %c13 = arith.constant 13 : index
    %c0_30 = arith.constant 0 : index
    %c0_31 = arith.constant 0 : index
    %88 = vector.load %arg0[%c13, %c0_30, %c0_31] : memref<16x4x4xf32, #tpu.memory_space<vmem>>, vector<1x4x4xf32>
    %89 = vector.shape_cast %88 : vector<1x4x4xf32> to vector<4x4xf32>
    %90 = vector.broadcast %87 : vector<1x1xf32> to vector<4x4xf32>
    %91 = arith.mulf %90, %89 : vector<4x4xf32>
    %92 = arith.addf %86, %91 : vector<4x4xf32>
    %93 = vector.extract_strided_slice %9 {offsets = [3, 2], sizes = [1, 1], strides = [1, 1]} : vector<4x4xf32> to vector<1x1xf32>
    %c14 = arith.constant 14 : index
    %c0_32 = arith.constant 0 : index
    %c0_33 = arith.constant 0 : index
    %94 = vector.load %arg0[%c14, %c0_32, %c0_33] : memref<16x4x4xf32, #tpu.memory_space<vmem>>, vector<1x4x4xf32>
    %95 = vector.shape_cast %94 : vector<1x4x4xf32> to vector<4x4xf32>
    %96 = vector.broadcast %93 : vector<1x1xf32> to vector<4x4xf32>
    %97 = arith.mulf %96, %95 : vector<4x4xf32>
    %98 = arith.addf %92, %97 : vector<4x4xf32>
    %99 = vector.extract_strided_slice %9 {offsets = [3, 3], sizes = [1, 1], strides = [1, 1]} : vector<4x4xf32> to vector<1x1xf32>
    %c15 = arith.constant 15 : index
    %c0_34 = arith.constant 0 : index
    %c0_35 = arith.constant 0 : index
    %100 = vector.load %arg0[%c15, %c0_34, %c0_35] : memref<16x4x4xf32, #tpu.memory_space<vmem>>, vector<1x4x4xf32>
    %101 = vector.shape_cast %100 : vector<1x4x4xf32> to vector<4x4xf32>
    %102 = vector.broadcast %99 : vector<1x1xf32> to vector<4x4xf32>
    %103 = arith.mulf %102, %101 : vector<4x4xf32>
    %104 = arith.addf %98, %103 : vector<4x4xf32>
    %105 = arith.addf %0, %104 : vector<4x4xf32>
    %106 = arith.addf %0, %105 : vector<4x4xf32>
    %107 = arith.mulf %9, %106 : vector<4x4xf32>
    %108 = vector.shape_cast %107 : vector<4x4xf32> to vector<1x4x4xf32>
    %cst_36 = arith.constant dense<0.000000e+00> : vector<1xf32>
    %109 = vector.multi_reduction <add>, %108, %cst_36 [1, 2] : vector<1x4x4xf32> to vector<1xf32>
    %110 = vector.shape_cast %109 : vector<1xf32> to vector<1x1x1xf32>
    %111 = vector.extract %110[0, 0, 0] : f32 from vector<1x1x1xf32>
    %cst_37 = arith.constant 5.000000e-01 : f32
    %112 = arith.mulf %cst_37, %111 : f32
    %c0_38 = arith.constant 0 : index
    %c0_39 = arith.constant 0 : index
    %113 = memref.load %arg3[%c0_38, %c0_39] : memref<1x1xf32, #tpu.memory_space<smem>>
    memref.store %112, %arg3[%c0_38, %c0_39] : memref<1x1xf32, #tpu.memory_space<smem>>
    return
  }
}

</mosaic_0001>

<llo_original>
// kernel: custom-call.2
$region0: #{custom-call.2}
  %s0 = inlined_call_operand.vmem [shape: f32[2,2], index: 0, kind: input, shape index: {}]
  %s1 = inlined_call_operand.vmem [shape: f32[2,2], index: 1, kind: input, shape index: {}]
  %s2 = inlined_call_operand.vmem [shape: f32[2,2], index: 2, kind: input, shape index: {}]
  %s3 = inlined_call_operand.vmem [shape: f32[2,2], index: 3, kind: input, shape index: {}]
  %s4 = inlined_call_operand.vmem [shape: f32[2], index: 4, kind: output, shape index: {0}]
  %s5 = inlined_call_operand.vmem [shape: f32[2], index: 5, kind: output, shape index: {1}]
  %s6 = inlined_call_operand.vmem [shape: f32[2,2], index: 6, kind: output, shape index: {2}]
  %s7 = inlined_call_operand.vmem [shape: f32[2,2], index: 7, kind: output, shape index: {3}]
  %s8 = inlined_call_operand.vmem [shape: f32[2,2], index: 8, kind: output, shape index: {4}]
  %s9 = inlined_call_operand.vmem [shape: f32[2,2], index: 9, kind: output, shape index: {5}]
  %10 = xla_tuple %s4, %s5, %s6, %s7, %s8, %s9
  $region1: #{custom-call.2} parent=0
    #allocation0 [shape = 'u8[4096]{0}', space=vmem, size = 0x1000, scoped, tag = 'operand span for operand 0']
    #allocation1 [shape = 'u8[1024]{0}', space=vmem, size = 0x400, scoped, tag = 'packed  for operand 0']
    #allocation2 [shape = 'u8[4096]{0}', space=vmem, size = 0x1000, scoped, tag = 'operand span for operand 1']
    #allocation3 [shape = 'u8[1024]{0}', space=vmem, size = 0x400, scoped, tag = 'packed  for operand 1']
    #allocation4 [shape = 'u8[4096]{0}', space=vmem, size = 0x1000, scoped, tag = 'operand span for operand 2']
    #allocation5 [shape = 'u8[1024]{0}', space=vmem, size = 0x400, scoped, tag = 'packed  for operand 2']
    #allocation6 [shape = 'u8[4096]{0}', space=vmem, size = 0x1000, scoped, tag = 'operand span for operand 3']
    #allocation7 [shape = 'u8[1024]{0}', space=vmem, size = 0x400, scoped, tag = 'packed  for operand 3']
    #allocation8 [shape = 'u8[4096]{0}', space=vmem, size = 0x1000, scoped, tag = 'operand span for operand 4']
    #allocation9 [shape = 'u8[512]{0}', space=vmem, size = 0x400, scoped, tag = 'packed  for operand 4']
    #allocation10 [shape = 'u8[4096]{0}', space=vmem, size = 0x1000, scoped, tag = 'operand span for operand 5']
    #allocation11 [shape = 'u8[512]{0}', space=vmem, size = 0x400, scoped, tag = 'packed  for operand 5']
    #allocation12 [shape = 'u8[4096]{0}', space=vmem, size = 0x1000, scoped, tag = 'operand span for operand 6']
    #allocation13 [shape = 'u8[1024]{0}', space=vmem, size = 0x400, scoped, tag = 'packed  for operand 6']
    #allocation14 [shape = 'u8[4096]{0}', space=vmem, size = 0x1000, scoped, tag = 'operand span for operand 7']
    #allocation15 [shape = 'u8[1024]{0}', space=vmem, size = 0x400, scoped, tag = 'packed  for operand 7']
    #allocation16 [shape = 'u8[4096]{0}', space=vmem, size = 0x1000, scoped, tag = 'operand span for operand 8']
    #allocation17 [shape = 'u8[1024]{0}', space=vmem, size = 0x400, scoped, tag = 'packed  for operand 8']
    #allocation18 [shape = 'u8[4096]{0}', space=vmem, size = 0x1000, scoped, tag = 'operand span for operand 9']
    #allocation19 [shape = 'u8[1024]{0}', space=vmem, size = 0x400, scoped, tag = 'packed  for operand 9']
    #allocation20 [shape = 'f32[2,2]{1,0}', space=vmem, size = 0x1000, scoped, tag = 'a top-left matrix']
    #allocation21 [shape = 'f32[2,2]{1,0}', space=vmem, size = 0x1000, scoped, tag = 'a top-right matrix']
    #allocation22 [shape = 'f32[2,2]{1,0}', space=vmem, size = 0x1000, scoped, tag = 'a bottom-left matrix']
    #allocation23 [shape = 'f32[2,2]{1,0}', space=vmem, size = 0x1000, scoped, tag = 'a bottom-right matrix']
    // Predicated region
    $region2: #{custom-call.2} parent=1 // pred_check
      _
    $region3: #{custom-call.2} parent=1 // pred_check_branch
      %12 = sbr.rel (0) target = $region5
    $region4: #{custom-call.2} parent=1 // pred_region
      %p14 = scmp.gt.s32.totalorder 0, 0
      // Predicated region
      $region6: #{custom-call.2} parent=4 // pred_check
        %p15 = pneg %p14
      $region7: #{custom-call.2} parent=4 // pred_check_branch
        %17 = sbr.rel (%p15) target = $region9
      $region8: #{custom-call.2} parent=4 // pred_region
        %s18 = ssub.s32 0, 1
        %s19 = smul.u32 %s18, 8
        %s20 = scalar_lea.vmem %s0, %s19
        %v21 = vld [vmem:[%s0] sm:$0xff]
        // While loop
        $region10: #{custom-call.2} parent=8 // loop_pre_header
          _
        $region11: #{custom-call.2} parent=8 // loop_header
          %s22 = sphi %s0, %s44
          %s23 = sphi [#allocation1], %s45
          %v24 = vphi %v21, %v46
          %s25 = ssub.s32 %s20, 64
          %p26 = scmp.gt.s32.totalorder %s22, %s25
        $region12: #{custom-call.2} parent=8 // loop_header_branch
          %28 = sbr.rel (%p26) target = $region16
        $region13: #{custom-call.2} parent=8 // loop_body
          %29 = vst [vmem:[%s23] sm:$0xff] %v24
          %v30 = vld [vmem:[%s22 + $0x8] sm:$0xff]
          %31 = vst [vmem:[%s23 + $0x8] sm:$0xff] %v30
          %v32 = vld [vmem:[%s22 + $0x10] sm:$0xff]
          %33 = vst [vmem:[%s23 + $0x10] sm:$0xff] %v32
          %v34 = vld [vmem:[%s22 + $0x18] sm:$0xff]
          %35 = vst [vmem:[%s23 + $0x18] sm:$0xff] %v34
          %v36 = vld [vmem:[%s22 + $0x20] sm:$0xff]
          %37 = vst [vmem:[%s23 + $0x20] sm:$0xff] %v36
          %v38 = vld [vmem:[%s22 + $0x28] sm:$0xff]
          %39 = vst [vmem:[%s23 + $0x28] sm:$0xff] %v38
          %v40 = vld [vmem:[%s22 + $0x30] sm:$0xff]
          %41 = vst [vmem:[%s23 + $0x30] sm:$0xff] %v40
          %v42 = vld [vmem:[%s22 + $0x38] sm:$0xff]
          %43 = vst [vmem:[%s23 + $0x38] sm:$0xff] %v42
        $region14: #{custom-call.2} parent=8 // loop_footer
          %s44 = scalar_lea.vmem %s22, 64
          %s45 = scalar_lea.vmem %s23, 64
          %v46 = vld [vmem:[%s22 + $0x40] sm:$0xff]
        $region15: #{custom-call.2} parent=8 // loop_footer_branch
          %47 = sbr.rel target = $region11
        $region16: #{custom-call.2} parent=8 // loop_exit
          _
        // While loop
        $region17: #{custom-call.2} parent=8 // loop_pre_header
          _
        $region18: #{custom-call.2} parent=8 // loop_header
          %s48 = sphi %s22, %s56
          %s49 = sphi %s23, %s57
          %v50 = vphi %v24, %v50
          %p51 = scmp.gt.s32.totalorder %s48, %s20
        $region19: #{custom-call.2} parent=8 // loop_header_branch
          %53 = sbr.rel (%p51) target = $region23
        $region20: #{custom-call.2} parent=8 // loop_body
          %v54 = vld [vmem:[%s48] sm:$0xff]
          %55 = vst [vmem:[%s49] sm:$0xff] %v54
        $region21: #{custom-call.2} parent=8 // loop_footer
          %s56 = scalar_lea.vmem %s48, 8
          %s57 = scalar_lea.vmem %s49, 8
        $region22: #{custom-call.2} parent=8 // loop_footer_branch
          %58 = sbr.rel target = $region18
        $region23: #{custom-call.2} parent=8 // loop_exit
          _
      $region9: #{custom-call.2} parent=4 // pred_fallthru
        _
      %s60 = ssub.s32 4, 1
      %s61 = smul.u32 0, 8
      %s62 = scalar_lea.vmem [#allocation1], %s61
      %s63 = smul.u32 0, 8
      %s64 = scalar_lea.vmem %s0, %s63
      %v65 = vld [vmem:[%s64] sm:%s60]
      %66 = vst [vmem:[%s62] sm:%s60] %v65
    $region5: #{custom-call.2} parent=1 // pred_fallthru
      _
    // Predicated region
    $region24: #{custom-call.2} parent=1 // pred_check
      _
    $region25: #{custom-call.2} parent=1 // pred_check_branch
      %68 = sbr.rel (0) target = $region27
    $region26: #{custom-call.2} parent=1 // pred_region
      %p70 = scmp.gt.s32.totalorder 0, 0
      // Predicated region
      $region28: #{custom-call.2} parent=26 // pred_check
        %p71 = pneg %p70
      $region29: #{custom-call.2} parent=26 // pred_check_branch
        %73 = sbr.rel (%p71) target = $region31
      $region30: #{custom-call.2} parent=26 // pred_region
        %s74 = ssub.s32 0, 1
        %s75 = smul.u32 %s74, 8
        %s76 = scalar_lea.vmem %s1, %s75
        %v77 = vld [vmem:[%s1] sm:$0xff]
        // While loop
        $region32: #{custom-call.2} parent=30 // loop_pre_header
          _
        $region33: #{custom-call.2} parent=30 // loop_header
          %s78 = sphi %s1, %s100
          %s79 = sphi [#allocation3], %s101
          %v80 = vphi %v77, %v102
          %s81 = ssub.s32 %s76, 64
          %p82 = scmp.gt.s32.totalorder %s78, %s81
        $region34: #{custom-call.2} parent=30 // loop_header_branch
          %84 = sbr.rel (%p82) target = $region38
        $region35: #{custom-call.2} parent=30 // loop_body
          %85 = vst [vmem:[%s79] sm:$0xff] %v80
          %v86 = vld [vmem:[%s78 + $0x8] sm:$0xff]
          %87 = vst [vmem:[%s79 + $0x8] sm:$0xff] %v86
          %v88 = vld [vmem:[%s78 + $0x10] sm:$0xff]
          %89 = vst [vmem:[%s79 + $0x10] sm:$0xff] %v88
          %v90 = vld [vmem:[%s78 + $0x18] sm:$0xff]
          %91 = vst [vmem:[%s79 + $0x18] sm:$0xff] %v90
          %v92 = vld [vmem:[%s78 + $0x20] sm:$0xff]
          %93 = vst [vmem:[%s79 + $0x20] sm:$0xff] %v92
          %v94 = vld [vmem:[%s78 + $0x28] sm:$0xff]
          %95 = vst [vmem:[%s79 + $0x28] sm:$0xff] %v94
          %v96 = vld [vmem:[%s78 + $0x30] sm:$0xff]
          %97 = vst [vmem:[%s79 + $0x30] sm:$0xff] %v96
          %v98 = vld [vmem:[%s78 + $0x38] sm:$0xff]
          %99 = vst [vmem:[%s79 + $0x38] sm:$0xff] %v98
        $region36: #{custom-call.2} parent=30 // loop_footer
          %s100 = scalar_lea.vmem %s78, 64
          %s101 = scalar_lea.vmem %s79, 64
          %v102 = vld [vmem:[%s78 + $0x40] sm:$0xff]
        $region37: #{custom-call.2} parent=30 // loop_footer_branch
          %103 = sbr.rel target = $region33
        $region38: #{custom-call.2} parent=30 // loop_exit
          _
        // While loop
        $region39: #{custom-call.2} parent=30 // loop_pre_header
          _
        $region40: #{custom-call.2} parent=30 // loop_header
          %s104 = sphi %s78, %s112
          %s105 = sphi %s79, %s113
          %v106 = vphi %v80, %v106
          %p107 = scmp.gt.s32.totalorder %s104, %s76
        $region41: #{custom-call.2} parent=30 // loop_header_branch
          %109 = sbr.rel (%p107) target = $region45
        $region42: #{custom-call.2} parent=30 // loop_body
          %v110 = vld [vmem:[%s104] sm:$0xff]
          %111 = vst [vmem:[%s105] sm:$0xff] %v110
        $region43: #{custom-call.2} parent=30 // loop_footer
          %s112 = scalar_lea.vmem %s104, 8
          %s113 = scalar_lea.vmem %s105, 8
        $region44: #{custom-call.2} parent=30 // loop_footer_branch
          %114 = sbr.rel target = $region40
        $region45: #{custom-call.2} parent=30 // loop_exit
          _
      $region31: #{custom-call.2} parent=26 // pred_fallthru
        _
      %s116 = ssub.s32 4, 1
      %s117 = smul.u32 0, 8
      %s118 = scalar_lea.vmem [#allocation3], %s117
      %s119 = smul.u32 0, 8
      %s120 = scalar_lea.vmem %s1, %s119
      %v121 = vld [vmem:[%s120] sm:%s116]
      %122 = vst [vmem:[%s118] sm:%s116] %v121
    $region27: #{custom-call.2} parent=1 // pred_fallthru
      _
    // Predicated region
    $region46: #{custom-call.2} parent=1 // pred_check
      _
    $region47: #{custom-call.2} parent=1 // pred_check_branch
      %124 = sbr.rel (0) target = $region49
    $region48: #{custom-call.2} parent=1 // pred_region
      %p126 = scmp.gt.s32.totalorder 0, 0
      // Predicated region
      $region50: #{custom-call.2} parent=48 // pred_check
        %p127 = pneg %p126
      $region51: #{custom-call.2} parent=48 // pred_check_branch
        %129 = sbr.rel (%p127) target = $region53
      $region52: #{custom-call.2} parent=48 // pred_region
        %s130 = ssub.s32 0, 1
        %s131 = smul.u32 %s130, 8
        %s132 = scalar_lea.vmem %s2, %s131
        %v133 = vld [vmem:[%s2] sm:$0xff]
        // While loop
        $region54: #{custom-call.2} parent=52 // loop_pre_header
          _
        $region55: #{custom-call.2} parent=52 // loop_header
          %s134 = sphi %s2, %s156
          %s135 = sphi [#allocation5], %s157
          %v136 = vphi %v133, %v158
          %s137 = ssub.s32 %s132, 64
          %p138 = scmp.gt.s32.totalorder %s134, %s137
        $region56: #{custom-call.2} parent=52 // loop_header_branch
          %140 = sbr.rel (%p138) target = $region60
        $region57: #{custom-call.2} parent=52 // loop_body
          %141 = vst [vmem:[%s135] sm:$0xff] %v136
          %v142 = vld [vmem:[%s134 + $0x8] sm:$0xff]
          %143 = vst [vmem:[%s135 + $0x8] sm:$0xff] %v142
          %v144 = vld [vmem:[%s134 + $0x10] sm:$0xff]
          %145 = vst [vmem:[%s135 + $0x10] sm:$0xff] %v144
          %v146 = vld [vmem:[%s134 + $0x18] sm:$0xff]
          %147 = vst [vmem:[%s135 + $0x18] sm:$0xff] %v146
          %v148 = vld [vmem:[%s134 + $0x20] sm:$0xff]
          %149 = vst [vmem:[%s135 + $0x20] sm:$0xff] %v148
          %v150 = vld [vmem:[%s134 + $0x28] sm:$0xff]
          %151 = vst [vmem:[%s135 + $0x28] sm:$0xff] %v150
          %v152 = vld [vmem:[%s134 + $0x30] sm:$0xff]
          %153 = vst [vmem:[%s135 + $0x30] sm:$0xff] %v152
          %v154 = vld [vmem:[%s134 + $0x38] sm:$0xff]
          %155 = vst [vmem:[%s135 + $0x38] sm:$0xff] %v154
        $region58: #{custom-call.2} parent=52 // loop_footer
          %s156 = scalar_lea.vmem %s134, 64
          %s157 = scalar_lea.vmem %s135, 64
          %v158 = vld [vmem:[%s134 + $0x40] sm:$0xff]
        $region59: #{custom-call.2} parent=52 // loop_footer_branch
          %159 = sbr.rel target = $region55
        $region60: #{custom-call.2} parent=52 // loop_exit
          _
        // While loop
        $region61: #{custom-call.2} parent=52 // loop_pre_header
          _
        $region62: #{custom-call.2} parent=52 // loop_header
          %s160 = sphi %s134, %s168
          %s161 = sphi %s135, %s169
          %v162 = vphi %v136, %v162
          %p163 = scmp.gt.s32.totalorder %s160, %s132
        $region63: #{custom-call.2} parent=52 // loop_header_branch
          %165 = sbr.rel (%p163) target = $region67
        $region64: #{custom-call.2} parent=52 // loop_body
          %v166 = vld [vmem:[%s160] sm:$0xff]
          %167 = vst [vmem:[%s161] sm:$0xff] %v166
        $region65: #{custom-call.2} parent=52 // loop_footer
          %s168 = scalar_lea.vmem %s160, 8
          %s169 = scalar_lea.vmem %s161, 8
        $region66: #{custom-call.2} parent=52 // loop_footer_branch
          %170 = sbr.rel target = $region62
        $region67: #{custom-call.2} parent=52 // loop_exit
          _
      $region53: #{custom-call.2} parent=48 // pred_fallthru
        _
      %s172 = ssub.s32 4, 1
      %s173 = smul.u32 0, 8
      %s174 = scalar_lea.vmem [#allocation5], %s173
      %s175 = smul.u32 0, 8
      %s176 = scalar_lea.vmem %s2, %s175
      %v177 = vld [vmem:[%s176] sm:%s172]
      %178 = vst [vmem:[%s174] sm:%s172] %v177
    $region49: #{custom-call.2} parent=1 // pred_fallthru
      _
    // Predicated region
    $region68: #{custom-call.2} parent=1 // pred_check
      _
    $region69: #{custom-call.2} parent=1 // pred_check_branch
      %180 = sbr.rel (0) target = $region71
    $region70: #{custom-call.2} parent=1 // pred_region
      %p182 = scmp.gt.s32.totalorder 0, 0
      // Predicated region
      $region72: #{custom-call.2} parent=70 // pred_check
        %p183 = pneg %p182
      $region73: #{custom-call.2} parent=70 // pred_check_branch
        %185 = sbr.rel (%p183) target = $region75
      $region74: #{custom-call.2} parent=70 // pred_region
        %s186 = ssub.s32 0, 1
        %s187 = smul.u32 %s186, 8
        %s188 = scalar_lea.vmem %s3, %s187
        %v189 = vld [vmem:[%s3] sm:$0xff]
        // While loop
        $region76: #{custom-call.2} parent=74 // loop_pre_header
          _
        $region77: #{custom-call.2} parent=74 // loop_header
          %s190 = sphi %s3, %s212
          %s191 = sphi [#allocation7], %s213
          %v192 = vphi %v189, %v214
          %s193 = ssub.s32 %s188, 64
          %p194 = scmp.gt.s32.totalorder %s190, %s193
        $region78: #{custom-call.2} parent=74 // loop_header_branch
          %196 = sbr.rel (%p194) target = $region82
        $region79: #{custom-call.2} parent=74 // loop_body
          %197 = vst [vmem:[%s191] sm:$0xff] %v192
          %v198 = vld [vmem:[%s190 + $0x8] sm:$0xff]
          %199 = vst [vmem:[%s191 + $0x8] sm:$0xff] %v198
          %v200 = vld [vmem:[%s190 + $0x10] sm:$0xff]
          %201 = vst [vmem:[%s191 + $0x10] sm:$0xff] %v200
          %v202 = vld [vmem:[%s190 + $0x18] sm:$0xff]
          %203 = vst [vmem:[%s191 + $0x18] sm:$0xff] %v202
          %v204 = vld [vmem:[%s190 + $0x20] sm:$0xff]
          %205 = vst [vmem:[%s191 + $0x20] sm:$0xff] %v204
          %v206 = vld [vmem:[%s190 + $0x28] sm:$0xff]
          %207 = vst [vmem:[%s191 + $0x28] sm:$0xff] %v206
          %v208 = vld [vmem:[%s190 + $0x30] sm:$0xff]
          %209 = vst [vmem:[%s191 + $0x30] sm:$0xff] %v208
          %v210 = vld [vmem:[%s190 + $0x38] sm:$0xff]
          %211 = vst [vmem:[%s191 + $0x38] sm:$0xff] %v210
        $region80: #{custom-call.2} parent=74 // loop_footer
          %s212 = scalar_lea.vmem %s190, 64
          %s213 = scalar_lea.vmem %s191, 64
          %v214 = vld [vmem:[%s190 + $0x40] sm:$0xff]
        $region81: #{custom-call.2} parent=74 // loop_footer_branch
          %215 = sbr.rel target = $region77
        $region82: #{custom-call.2} parent=74 // loop_exit
          _
        // While loop
        $region83: #{custom-call.2} parent=74 // loop_pre_header
          _
        $region84: #{custom-call.2} parent=74 // loop_header
          %s216 = sphi %s190, %s224
          %s217 = sphi %s191, %s225
          %v218 = vphi %v192, %v218
          %p219 = scmp.gt.s32.totalorder %s216, %s188
        $region85: #{custom-call.2} parent=74 // loop_header_branch
          %221 = sbr.rel (%p219) target = $region89
        $region86: #{custom-call.2} parent=74 // loop_body
          %v222 = vld [vmem:[%s216] sm:$0xff]
          %223 = vst [vmem:[%s217] sm:$0xff] %v222
        $region87: #{custom-call.2} parent=74 // loop_footer
          %s224 = scalar_lea.vmem %s216, 8
          %s225 = scalar_lea.vmem %s217, 8
        $region88: #{custom-call.2} parent=74 // loop_footer_branch
          %226 = sbr.rel target = $region84
        $region89: #{custom-call.2} parent=74 // loop_exit
          _
      $region75: #{custom-call.2} parent=70 // pred_fallthru
        _
      %s228 = ssub.s32 4, 1
      %s229 = smul.u32 0, 8
      %s230 = scalar_lea.vmem [#allocation7], %s229
      %s231 = smul.u32 0, 8
      %s232 = scalar_lea.vmem %s3, %s231
      %v233 = vld [vmem:[%s232] sm:%s228]
      %234 = vst [vmem:[%s230] sm:%s228] %v233
    $region71: #{custom-call.2} parent=1 // pred_fallthru
      _
    %s236 = ssub.s32 4, 1
    %v237 = vld [vmem:[#allocation1] sm:%s236]
    %238 = vst [vmem:[#allocation0] sm:%s236] %v237
    %s240 = ssub.s32 4, 1
    %v241 = vld [vmem:[#allocation3] sm:%s240]
    %242 = vst [vmem:[#allocation2] sm:%s240] %v241
    %s244 = ssub.s32 4, 1
    %v245 = vld [vmem:[#allocation5] sm:%s244]
    %246 = vst [vmem:[#allocation4] sm:%s244] %v245
    %s248 = ssub.s32 4, 1
    %v249 = vld [vmem:[#allocation7] sm:%s248]
    %250 = vst [vmem:[#allocation6] sm:%s248] %v249
    %s251 = smov [#allocation20]
    %v252 = vld [vmem:[#allocation0] sm:$0xff]
    %253 = vst [vmem:[%s251] sm:$0xff] %v252
    %s254 = smov [#allocation21]
    %v255 = vld [vmem:[#allocation2] sm:$0xff]
    %256 = vst [vmem:[%s254] sm:$0xff] %v255
    %s257 = smov [#allocation22]
    %v258 = vld [vmem:[#allocation4] sm:$0xff]
    %259 = vst [vmem:[%s257] sm:$0xff] %v258
    %s260 = smov [#allocation23]
    %v261 = vld [vmem:[#allocation6] sm:$0xff]
    %262 = vst [vmem:[%s260] sm:$0xff] %v261
    %263 = vst [vmem:[#allocation12] sm:$0xff] 0.0
    %264 = vst [vmem:[#allocation14] sm:$0xff] 0.0
    %265 = vst [vmem:[#allocation16] sm:$0xff] 0.0
    %266 = vst [vmem:[#allocation18] sm:$0xff] 0.0
    %s267 = smov [#allocation12]
    %v268 = vlaneseq
    %v269 = vand.u32 %v268, 127
    %v270 = vmov %v269
    %v271 = vlaneseq
    %v272 = vshrl.u32 %v271, 7
    %v273 = vmov %v272
    %v274 = vld [vmem:[%s267] sm:$0x3]
    %vm277 = vcmp.eq.s32.totalorder %v273, %v270
    %v278 = vsel %vm277, 1.0, %v274
    %279 = vst [vmem:[%s267] sm:$0x3] %v278
    %s280 = smov [#allocation18]
    %v281 = vlaneseq
    %v282 = vand.u32 %v281, 127
    %v283 = vmov %v282
    %v284 = vlaneseq
    %v285 = vshrl.u32 %v284, 7
    %v286 = vmov %v285
    %v287 = vld [vmem:[%s280] sm:$0x3]
    %vm290 = vcmp.eq.s32.totalorder %v286, %v283
    %v291 = vsel %vm290, 1.0, %v287
    %292 = vst [vmem:[%s280] sm:$0x3] %v291
    // While loop
    $region90: #{custom-call.2} parent=1 // loop_pre_header
      _
    $region91: #{custom-call.2} parent=1 // loop_header
      %s294 = sphi 0, %s876
      %v295 = vlaneseq
      %v296 = vand.u32 %v295, 127
      %v297 = vmov %v296
      %v298 = vlaneseq
      %v299 = vshrl.u32 %v298, 7
      %v300 = vmov %v299
      %s301 = smov [#allocation20]
      %v302 = vlaneseq
      %v303 = vand.u32 %v302, 127
      %vm304 = vcmp.ge.s32.totalorder %v303, 0
      %vm305 = vcmp.lt.s32.totalorder %v303, 2
      %vm306 = vmand %vm304, %vm305
      %v307 = vld [vmem:[%s301] sm:$0x3]
      %v308 = vsel %vm306, %v307, 0.0
      %v309 = vmul.f32 %v308, %v308
      %vm312 = vcmp.eq.s32.totalorder %v300, %v297
      %v313 = vsel %vm312, 0.0, %v309
      %v314 = vlaneseq
      %v315 = vand.u32 %v314, 127
      %v316 = vmov %v315
      %v317 = vlaneseq
      %v318 = vshrl.u32 %v317, 7
      %v319 = vmov %v318
      %s320 = smov [#allocation21]
      %v321 = vlaneseq
      %v322 = vand.u32 %v321, 127
      %vm323 = vcmp.ge.s32.totalorder %v322, 0
      %vm324 = vcmp.lt.s32.totalorder %v322, 2
      %vm325 = vmand %vm323, %vm324
      %v326 = vld [vmem:[%s320] sm:$0x3]
      %v327 = vsel %vm325, %v326, 0.0
      %v328 = vmul.f32 %v327, %v327
      %v329 = vadd.f32 %v313, %v328
      %v330 = vadd.f32 %v309, %v328
      %v331 = vlaneseq
      %v332 = vand.u32 %v331, 127
      %v333 = vmov %v332
      %v334 = vlaneseq
      %v335 = vshrl.u32 %v334, 7
      %v336 = vmov %v335
      %s337 = smov [#allocation22]
      %v338 = vlaneseq
      %v339 = vand.u32 %v338, 127
      %vm340 = vcmp.ge.s32.totalorder %v339, 0
      %vm341 = vcmp.lt.s32.totalorder %v339, 2
      %vm342 = vmand %vm340, %vm341
      %v343 = vld [vmem:[%s337] sm:$0x3]
      %v344 = vsel %vm342, %v343, 0.0
      %v345 = vmul.f32 %v344, %v344
      %v346 = vadd.f32 %v329, %v345
      %v347 = vadd.f32 %v330, %v345
      %v348 = vlaneseq
      %v349 = vand.u32 %v348, 127
      %v350 = vmov %v349
      %v351 = vlaneseq
      %v352 = vshrl.u32 %v351, 7
      %v353 = vmov %v352
      %s354 = smov [#allocation23]
      %v355 = vlaneseq
      %v356 = vand.u32 %v355, 127
      %vm357 = vcmp.ge.s32.totalorder %v356, 0
      %vm358 = vcmp.lt.s32.totalorder %v356, 2
      %vm359 = vmand %vm357, %vm358
      %v360 = vld [vmem:[%s354] sm:$0x3]
      %v361 = vsel %vm359, %v360, 0.0
      %v362 = vmul.f32 %v361, %v361
      %vm365 = vcmp.eq.s32.totalorder %v353, %v350
      %v366 = vsel %vm365, 0.0, %v362
      %v367 = vadd.f32 %v346, %v366
      %v368 = vadd.f32 %v347, %v362
      %369 = vadd.xlane.f32.xlu0 %v368
      %v370 = vpop.xlane.xlu0 %369
      %v371 = vrot.slane %v370, 4
      %v372 = vadd.f32 %v370, %v371
      %v373 = vrot.slane %v372, 2
      %v374 = vadd.f32 %v372, %v373
      %v375 = vrot.slane %v374, 1
      %v376 = vadd.f32 %v374, %v375
      %377 = vadd.xlane.f32.xlu0 %v367
      %v378 = vpop.xlane.xlu0 %377
      %v379 = vrot.slane %v378, 4
      %v380 = vadd.f32 %v378, %v379
      %v381 = vrot.slane %v380, 2
      %v382 = vadd.f32 %v380, %v381
      %v383 = vrot.slane %v382, 1
      %v384 = vadd.f32 %v382, %v383
      %s385 = vtos %v384
      %s386 = vtos %v376
      %s387 = smul.f32 1e-10, %s386
      %p388 = scmp.le.f32.partialorder %s385, %s387
      %p389 = scmp.ge.s32.totalorder %s294, 15
      %p390 = por %p388, %p389
    $region92: #{custom-call.2} parent=1 // loop_header_branch
      %878 = sbr.rel (%p390) target = $region96
    $region93: #{custom-call.2} parent=1 // loop_body
      loop: start=0, step=1, limit=3
      $region97: #{custom-call.2} parent=93 // loop_pre_header
        _
      $region98: #{custom-call.2} parent=93 // loop_header
        %s392 = sphi 0, %s396
        %p393 = scmp.ge.s32.totalorder %s392, 3
      $region99: #{custom-call.2} parent=93 // loop_header_branch
        %395 = sbr.rel (%p393) target = $region103
      $region100: #{custom-call.2} parent=93 // loop_body
        #allocation24 [shape = 'f32[1024]{0}', space=vmem, size = 0x1000, scoped, tag = 'a_tl_diag vmem']
        #allocation25 [shape = 'f32[1024]{0}', space=vmem, size = 0x1000, scoped, tag = 'a_tr_diag vmem']
        #allocation26 [shape = 'f32[1024]{0}', space=vmem, size = 0x1000, scoped, tag = 'a_br_diag vmem']
        #allocation27 [shape = 'f32[1024]{0}', space=vmem, size = 0x1000, scoped, tag = 'rt1 vmem']
        #allocation28 [shape = 'f32[1024]{0}', space=vmem, size = 0x1000, scoped, tag = 'rt2 vmem']
        #allocation29 [shape = 'f32[1024]{0}', space=vmem, size = 0x1000, scoped, tag = 'c vmem']
        #allocation30 [shape = 'f32[1024]{0}', space=vmem, size = 0x1000, scoped, tag = 's vmem']
        #allocation31 [shape = 'f32[4096]{0}', space=vmem, size = 0x4000, scoped, tag = 'c broadcast']
        #allocation32 [shape = 'f32[4096]{0}', space=vmem, size = 0x4000, scoped, tag = 's broadcast']
        %s397 = smov [#allocation20]
        %s398 = smov [#allocation24]
        %v399 = vlaneseq
        %v400 = vand.u32 %v399, 127
        %v401 = vmov %v400
        %v402 = vlaneseq
        %v403 = vshrl.u32 %v402, 7
        %v404 = vmov %v403
        %v405 = vld [vmem:[%s397] sm:$0x3]
        %vm408 = vcmp.eq.s32.totalorder %v404, %v401
        %v409 = vsel %vm408, %v405, 0.0
        %v410 = vrot.slane %v409, 4
        %v411 = vadd.f32 %v409, %v410
        %v412 = vrot.slane %v411, 2
        %v413 = vadd.f32 %v411, %v412
        %v414 = vrot.slane %v413, 1
        %v415 = vadd.f32 %v413, %v414
        %416 = vst [vmem:[%s398] sm:$0x1] %v415
        %s417 = smov [#allocation21]
        %s418 = smov [#allocation25]
        %v419 = vlaneseq
        %v420 = vand.u32 %v419, 127
        %v421 = vmov %v420
        %v422 = vlaneseq
        %v423 = vshrl.u32 %v422, 7
        %v424 = vmov %v423
        %v425 = vld [vmem:[%s417] sm:$0x3]
        %vm428 = vcmp.eq.s32.totalorder %v424, %v421
        %v429 = vsel %vm428, %v425, 0.0
        %v430 = vrot.slane %v429, 4
        %v431 = vadd.f32 %v429, %v430
        %v432 = vrot.slane %v431, 2
        %v433 = vadd.f32 %v431, %v432
        %v434 = vrot.slane %v433, 1
        %v435 = vadd.f32 %v433, %v434
        %436 = vst [vmem:[%s418] sm:$0x1] %v435
        %s437 = smov [#allocation23]
        %s438 = smov [#allocation26]
        %v439 = vlaneseq
        %v440 = vand.u32 %v439, 127
        %v441 = vmov %v440
        %v442 = vlaneseq
        %v443 = vshrl.u32 %v442, 7
        %v444 = vmov %v443
        %v445 = vld [vmem:[%s437] sm:$0x3]
        %vm448 = vcmp.eq.s32.totalorder %v444, %v441
        %v449 = vsel %vm448, %v445, 0.0
        %v450 = vrot.slane %v449, 4
        %v451 = vadd.f32 %v449, %v450
        %v452 = vrot.slane %v451, 2
        %v453 = vadd.f32 %v451, %v452
        %v454 = vrot.slane %v453, 1
        %v455 = vadd.f32 %v453, %v454
        %456 = vst [vmem:[%s438] sm:$0x1] %v455
        %s457 = smov [#allocation29]
        %s458 = smov [#allocation30]
        %s459 = smov [#allocation24]
        %v460 = vld [vmem:[%s459] sm:$0xff]
        %s461 = smov [#allocation25]
        %v462 = vld [vmem:[%s461] sm:$0xff]
        %s463 = smov [#allocation26]
        %v464 = vld [vmem:[%s463] sm:$0xff]
        %v465 = vsub.f32 %v464, %v460
        %v466 = vmul.f32 2.0, %v462
        %v467 = vrcp.pop %v466
        %v468 = vmul.f32 %v466, %v467
        %v469 = vsub.f32 1.0, %v468
        %v470 = vmul.f32 %v467, %v469
        %v471 = vadd.f32 %v467, %v470
        %vm472 = vweird.f32 %v466
        %vm473 = vweird.f32 %v467
        %vm474 = vmor %vm472, %vm473
        %v475 = vsel %vm474, %v467, %v471
        %v476 = vand.u32 2147483647, %v466
        %vm477 = vcmp.eq.f32.partialorder %v476, 8.507059e+37
        %v478 = vand.u32 %v466, 2147483648
        %v479 = vor.u32 1.1754944e-38, %v478
        %v480 = vsel %vm477, %v479, %v475
        %v481 = vmul.f32 %v465, %v480
        %vm482 = vcmp.ge.f32.partialorder %v481, 0.0
        %v483 = vmul.f32 %v481, %v481
        %v484 = vadd.f32 1.0, %v483
        %v485 = vrsqrt.pop %v484
        %v486 = vmul.f32 %v485, %v484
        %v487 = vmul.f32 %v486, %v485
        %v488 = vmul.f32 0.5, %v487
        %v489 = vsub.f32 1.5, %v488
        %v490 = vmul.f32 %v485, %v489
        %v491 = vmul.f32 %v484, %v490
        %vm492 = vcmp.eq.f32.partialorder %v484, inf
        %v493 = vsel %vm492, %v484, %v491
        %vm494 = vcmp.eq.f32.partialorder %v484, 0.0
        %v495 = vand.u32 %v484, 2147483648
        %v496 = vsel %vm494, %v495, %v493
        %v497 = vxor.u32 %v496, 2147483648
        %v498 = vsel %vm482, %v496, %v497
        %v499 = vadd.f32 %v481, %v498
        %v500 = vrcp.pop %v499
        %v501 = vmul.f32 %v499, %v500
        %v502 = vsub.f32 1.0, %v501
        %v503 = vmul.f32 %v500, %v502
        %v504 = vadd.f32 %v500, %v503
        %vm505 = vweird.f32 %v499
        %vm506 = vweird.f32 %v500
        %vm507 = vmor %vm505, %vm506
        %v508 = vsel %vm507, %v500, %v504
        %v509 = vand.u32 2147483647, %v499
        %vm510 = vcmp.eq.f32.partialorder %v509, 8.507059e+37
        %v511 = vand.u32 %v499, 2147483648
        %v512 = vor.u32 1.1754944e-38, %v511
        %v513 = vsel %vm510, %v512, %v508
        %v514 = vand.u32 2147483647, %v460
        %v515 = vand.u32 2147483647, %v462
        %v516 = vand.u32 2147483647, %v464
        %v517 = vmin.f32 %v514, %v516
        %v518 = vmul.f32 1.1920929e-08, %v517
        %vm519 = vcmp.le.f32.partialorder %v515, %v518
        %v520 = vsel %vm519, 0.0, %v513
        %v521 = vmul.f32 %v520, %v520
        %v522 = vadd.f32 1.0, %v521
        %v523 = vrsqrt.pop %v522
        %v524 = vmul.f32 %v523, %v522
        %v525 = vmul.f32 %v524, %v523
        %v526 = vmul.f32 0.5, %v525
        %v527 = vsub.f32 1.5, %v526
        %v528 = vmul.f32 %v523, %v527
        %vm529 = vweird.f32 %v522
        %vm530 = vweird.f32 %v523
        %vm531 = vmor %vm529, %vm530
        %v532 = vsel %vm531, %v523, %v528
        %v533 = vmul.f32 %v520, %v532
        %v534 = vmul.f32 %v520, %v462
        %v535 = vsub.f32 %v460, %v534
        %v536 = vmul.f32 %v520, %v462
        %v537 = vadd.f32 %v464, %v536
        %s538 = smov [#allocation27]
        %539 = vst [vmem:[%s538] sm:$0xff] %v535
        %s540 = smov [#allocation28]
        %541 = vst [vmem:[%s540] sm:$0xff] %v537
        %s542 = smov %s457
        %543 = vst [vmem:[%s542] sm:$0xff] %v532
        %s544 = smov %s458
        %545 = vst [vmem:[%s544] sm:$0xff] %v533
        %s546 = smov [#allocation29]
        %v547 = vld [vmem:[%s546] ss:$0 sm:$0xff]
        %v548 = vlaneseq
        %v549 = vand.u32 %v548, 127
        %v550 = vmov %v549
        %v551 = vlaneseq
        %v552 = vshrl.u32 %v551, 7
        %v553 = vmov %v552
        %vm555 = vcmp.eq.s32.totalorder %v553, %v550
        %v556 = vsel %vm555, %v547, 0.0
        %557 = vadd.xlane.f32.xlu0 %v556
        %v558 = vpop.xlane.xlu0 %557
        %s559 = smov [#allocation31]
        %560 = vst [vmem:[%s559] sm:$0xff] %v558
        %s561 = smov [#allocation30]
        %v562 = vld [vmem:[%s561] ss:$0 sm:$0xff]
        %v563 = vlaneseq
        %v564 = vand.u32 %v563, 127
        %v565 = vmov %v564
        %v566 = vlaneseq
        %v567 = vshrl.u32 %v566, 7
        %v568 = vmov %v567
        %vm570 = vcmp.eq.s32.totalorder %v568, %v565
        %v571 = vsel %vm570, %v562, 0.0
        %572 = vadd.xlane.f32.xlu0 %v571
        %v573 = vpop.xlane.xlu0 %572
        %s574 = smov [#allocation32]
        %575 = vst [vmem:[%s574] sm:$0xff] %v573
        %s576 = smov [#allocation31]
        %v577 = vld [vmem:[%s576] sm:$0xff]
        %s578 = smov [#allocation32]
        %v579 = vld [vmem:[%s578] sm:$0xff]
        %s580 = smov [#allocation20]
        %s581 = smov [#allocation21]
        %s582 = smov [#allocation22]
        %s583 = smov [#allocation23]
        %v584 = vld [vmem:[%s580] sm:$0x3]
        %v585 = vld [vmem:[%s581] sm:$0x3]
        %v586 = vld [vmem:[%s582] sm:$0x3]
        %v587 = vld [vmem:[%s583] sm:$0x3]
        %v588 = vmul.f32 %v577, %v584
        %v589 = vmul.f32 %v579, %v586
        %v590 = vsub.f32 %v588, %v589
        %v591 = vmul.f32 %v577, %v585
        %v592 = vmul.f32 %v579, %v587
        %v593 = vsub.f32 %v591, %v592
        %v594 = vmul.f32 %v579, %v584
        %v595 = vmul.f32 %v577, %v586
        %v596 = vadd.f32 %v594, %v595
        %v597 = vmul.f32 %v579, %v585
        %v598 = vmul.f32 %v577, %v587
        %v599 = vadd.f32 %v597, %v598
        %600 = vst [vmem:[%s580] sm:$0x3] %v590
        %601 = vst [vmem:[%s581] sm:$0x3] %v593
        %602 = vst [vmem:[%s582] sm:$0x3] %v596
        %603 = vst [vmem:[%s583] sm:$0x3] %v599
        %s604 = smov [#allocation29]
        %v605 = vld [vmem:[%s604] ss:$0 sm:$0xff]
        %s606 = smov [#allocation30]
        %v607 = vld [vmem:[%s606] ss:$0 sm:$0xff]
        %s608 = smov [#allocation20]
        %s609 = smov [#allocation21]
        %s610 = smov [#allocation22]
        %s611 = smov [#allocation23]
        %v612 = vld [vmem:[%s608] sm:$0x3]
        %v613 = vld [vmem:[%s609] sm:$0x3]
        %v614 = vld [vmem:[%s610] sm:$0x3]
        %v615 = vld [vmem:[%s611] sm:$0x3]
        %v616 = vmul.f32 %v605, %v612
        %v617 = vmul.f32 %v607, %v613
        %v618 = vsub.f32 %v616, %v617
        %v619 = vmul.f32 %v607, %v612
        %v620 = vmul.f32 %v605, %v613
        %v621 = vadd.f32 %v619, %v620
        %v622 = vmul.f32 %v605, %v614
        %v623 = vmul.f32 %v607, %v615
        %v624 = vsub.f32 %v622, %v623
        %v625 = vmul.f32 %v607, %v614
        %v626 = vmul.f32 %v605, %v615
        %v627 = vadd.f32 %v625, %v626
        %628 = vst [vmem:[%s608] sm:$0x3] %v618
        %629 = vst [vmem:[%s609] sm:$0x3] %v621
        %630 = vst [vmem:[%s610] sm:$0x3] %v624
        %631 = vst [vmem:[%s611] sm:$0x3] %v627
        %s632 = smov [#allocation20]
        %s633 = smov [#allocation27]
        %v634 = vlaneseq
        %v635 = vand.u32 %v634, 127
        %v636 = vmov %v635
        %v637 = vlaneseq
        %v638 = vshrl.u32 %v637, 7
        %v639 = vmov %v638
        %v640 = vld [vmem:[%s633] ss:$0 sm:$0xff]
        %v641 = vld [vmem:[%s632] sm:$0x3]
        %vm644 = vcmp.eq.s32.totalorder %v639, %v636
        %v645 = vsel %vm644, %v640, %v641
        %646 = vst [vmem:[%s632] sm:$0x3] %v645
        %s647 = smov [#allocation21]
        %v648 = vlaneseq
        %v649 = vand.u32 %v648, 127
        %v650 = vmov %v649
        %v651 = vlaneseq
        %v652 = vshrl.u32 %v651, 7
        %v653 = vmov %v652
        %v654 = vld [vmem:[%s647] sm:$0x3]
        %vm657 = vcmp.eq.s32.totalorder %v653, %v650
        %v658 = vsel %vm657, 0.0, %v654
        %659 = vst [vmem:[%s647] sm:$0x3] %v658
        %s660 = smov [#allocation22]
        %v661 = vlaneseq
        %v662 = vand.u32 %v661, 127
        %v663 = vmov %v662
        %v664 = vlaneseq
        %v665 = vshrl.u32 %v664, 7
        %v666 = vmov %v665
        %v667 = vld [vmem:[%s660] sm:$0x3]
        %vm670 = vcmp.eq.s32.totalorder %v666, %v663
        %v671 = vsel %vm670, 0.0, %v667
        %672 = vst [vmem:[%s660] sm:$0x3] %v671
        %s673 = smov [#allocation23]
        %s674 = smov [#allocation28]
        %v675 = vlaneseq
        %v676 = vand.u32 %v675, 127
        %v677 = vmov %v676
        %v678 = vlaneseq
        %v679 = vshrl.u32 %v678, 7
        %v680 = vmov %v679
        %v681 = vld [vmem:[%s674] ss:$0 sm:$0xff]
        %v682 = vld [vmem:[%s673] sm:$0x3]
        %vm685 = vcmp.eq.s32.totalorder %v680, %v677
        %v686 = vsel %vm685, %v681, %v682
        %687 = vst [vmem:[%s673] sm:$0x3] %v686
        %s688 = smov [#allocation20]
        %s689 = smov [#allocation21]
        %v690 = vld [vmem:[%s689] sm:$0x3]
        %691 = vrot.lane.b32.xlu0 %v690, 1
        %v692 = vpop.permute.xlu0 %691
        %v693 = vld [vmem:[%s688] sm:$0x3]
        %v694 = vld [vmem:[%s688] sm:$0x3]
        %695 = vrot.lane.b32.xlu0 %v694, 1
        %v696 = vpop.permute.xlu0 %695
        %v697 = vlaneseq
        %v698 = vand.u32 %v697, 127
        %vm699 = vcmp.eq.s32.totalorder %v698, 0
        %v700 = vsel %vm699, %v694, %v696
        %v701 = vlaneseq
        %v702 = vand.u32 %v701, 127
        %vm703 = vcmp.eq.s32.totalorder %v702, 1
        %v704 = vsel %vm703, %v692, %v700
        %v705 = vlaneseq
        %v706 = vand.u32 %v705, 127
        %vm707 = vcmp.ge.s32.totalorder %v706, 0
        %vm708 = vcmp.lt.s32.totalorder %v706, 2
        %vm709 = vmand %vm707, %vm708
        %v710 = vsel %vm709, %v704, 0.0
        %v711 = vld [vmem:[%s689] sm:$0x3]
        %712 = vrot.lane.b32.xlu0 %v711, 127
        %v713 = vpop.permute.xlu0 %712
        %v714 = vlaneseq
        %v715 = vand.u32 %v714, 127
        %vm716 = vcmp.eq.s32.totalorder %v715, 1
        %v717 = vsel %vm716, %v693, %v713
        %718 = vst [vmem:[%s688] sm:$0x3] %v710
        %719 = vst [vmem:[%s689] sm:$0x3] %v717
        %s720 = smov [#allocation22]
        %s721 = smov [#allocation23]
        %v722 = vld [vmem:[%s721] sm:$0x3]
        %723 = vrot.lane.b32.xlu0 %v722, 1
        %v724 = vpop.permute.xlu0 %723
        %v725 = vld [vmem:[%s720] sm:$0x3]
        %v726 = vld [vmem:[%s720] sm:$0x3]
        %727 = vrot.lane.b32.xlu0 %v726, 1
        %v728 = vpop.permute.xlu0 %727
        %v729 = vlaneseq
        %v730 = vand.u32 %v729, 127
        %vm731 = vcmp.eq.s32.totalorder %v730, 0
        %v732 = vsel %vm731, %v726, %v728
        %v733 = vlaneseq
        %v734 = vand.u32 %v733, 127
        %vm735 = vcmp.eq.s32.totalorder %v734, 1
        %v736 = vsel %vm735, %v724, %v732
        %v737 = vlaneseq
        %v738 = vand.u32 %v737, 127
        %vm739 = vcmp.ge.s32.totalorder %v738, 0
        %vm740 = vcmp.lt.s32.totalorder %v738, 2
        %vm741 = vmand %vm739, %vm740
        %v742 = vsel %vm741, %v736, 0.0
        %v743 = vld [vmem:[%s721] sm:$0x3]
        %744 = vrot.lane.b32.xlu0 %v743, 127
        %v745 = vpop.permute.xlu0 %744
        %v746 = vlaneseq
        %v747 = vand.u32 %v746, 127
        %vm748 = vcmp.eq.s32.totalorder %v747, 1
        %v749 = vsel %vm748, %v725, %v745
        %750 = vst [vmem:[%s720] sm:$0x3] %v742
        %751 = vst [vmem:[%s721] sm:$0x3] %v749
        %s752 = smov [#allocation20]
        %s753 = smov [#allocation22]
        %v754 = vld [vmem:[%s752] ss:$0 sm:$0xff]
        %s756 = scalar_lea.vmem %s752, 4294967295
        %v757 = vld [vmem:[%s756] sm:$0x2]
        %v758 = vlaneseq
        %v759 = vshrl.u32 %v758, 7
        %vm760 = vcmp.eq.s32.totalorder %v759, 0
        %v761 = vsel %vm760, %v754, %v757
        %s762 = scalar_lea.vmem %s752, 1
        %v763 = vld [vmem:[%s762] ss:$0 sm:$0xff]
        %764 = vst [vmem:[%s752] sm:$0x3] %v761
        %v765 = vld [vmem:[%s753] ss:$0 sm:$0xff]
        %s766 = scalar_lea.vmem %s752, 1
        %767 = vst [vmem:[%s766] sm:$0x1] %v765
        %s768 = scalar_lea.vmem %s753, 1
        %v769 = vld [vmem:[%s768] sm:$0x1]
        %v770 = vlaneseq
        %v771 = vshrl.u32 %v770, 7
        %vm772 = vcmp.eq.s32.totalorder %v771, 1
        %v773 = vsel %vm772, %v763, %v769
        %v774 = vld [vmem:[%s753] ss:$0 sm:$0xff]
        %775 = vst [vmem:[%s753] sm:$0x3] %v773
        %s776 = smov [#allocation21]
        %s777 = smov [#allocation23]
        %v778 = vld [vmem:[%s776] ss:$0 sm:$0xff]
        %s780 = scalar_lea.vmem %s776, 4294967295
        %v781 = vld [vmem:[%s780] sm:$0x2]
        %v782 = vlaneseq
        %v783 = vshrl.u32 %v782, 7
        %vm784 = vcmp.eq.s32.totalorder %v783, 0
        %v785 = vsel %vm784, %v778, %v781
        %s786 = scalar_lea.vmem %s776, 1
        %v787 = vld [vmem:[%s786] ss:$0 sm:$0xff]
        %788 = vst [vmem:[%s776] sm:$0x3] %v785
        %v789 = vld [vmem:[%s777] ss:$0 sm:$0xff]
        %s790 = scalar_lea.vmem %s776, 1
        %791 = vst [vmem:[%s790] sm:$0x1] %v789
        %s792 = scalar_lea.vmem %s777, 1
        %v793 = vld [vmem:[%s792] sm:$0x1]
        %v794 = vlaneseq
        %v795 = vshrl.u32 %v794, 7
        %vm796 = vcmp.eq.s32.totalorder %v795, 1
        %v797 = vsel %vm796, %v787, %v793
        %v798 = vld [vmem:[%s777] ss:$0 sm:$0xff]
        %799 = vst [vmem:[%s777] sm:$0x3] %v797
        %s800 = smov [#allocation31]
        %v801 = vld [vmem:[%s800] sm:$0xff]
        %s802 = smov [#allocation32]
        %v803 = vld [vmem:[%s802] sm:$0xff]
        %s804 = smov [#allocation12]
        %s805 = smov [#allocation14]
        %s806 = smov [#allocation16]
        %s807 = smov [#allocation18]
        %v808 = vld [vmem:[%s804] sm:$0x3]
        %v809 = vld [vmem:[%s805] sm:$0x3]
        %v810 = vld [vmem:[%s806] sm:$0x3]
        %v811 = vld [vmem:[%s807] sm:$0x3]
        %v812 = vmul.f32 %v801, %v808
        %v813 = vmul.f32 %v803, %v810
        %v814 = vsub.f32 %v812, %v813
        %v815 = vmul.f32 %v801, %v809
        %v816 = vmul.f32 %v803, %v811
        %v817 = vsub.f32 %v815, %v816
        %v818 = vmul.f32 %v803, %v808
        %v819 = vmul.f32 %v801, %v810
        %v820 = vadd.f32 %v818, %v819
        %v821 = vmul.f32 %v803, %v809
        %v822 = vmul.f32 %v801, %v811
        %v823 = vadd.f32 %v821, %v822
        %824 = vst [vmem:[%s804] sm:$0x3] %v814
        %825 = vst [vmem:[%s805] sm:$0x3] %v817
        %826 = vst [vmem:[%s806] sm:$0x3] %v820
        %827 = vst [vmem:[%s807] sm:$0x3] %v823
        %s828 = smov [#allocation12]
        %s829 = smov [#allocation16]
        %v830 = vld [vmem:[%s828] ss:$0 sm:$0xff]
        %s832 = scalar_lea.vmem %s828, 4294967295
        %v833 = vld [vmem:[%s832] sm:$0x2]
        %v834 = vlaneseq
        %v835 = vshrl.u32 %v834, 7
        %vm836 = vcmp.eq.s32.totalorder %v835, 0
        %v837 = vsel %vm836, %v830, %v833
        %s838 = scalar_lea.vmem %s828, 1
        %v839 = vld [vmem:[%s838] ss:$0 sm:$0xff]
        %840 = vst [vmem:[%s828] sm:$0x3] %v837
        %v841 = vld [vmem:[%s829] ss:$0 sm:$0xff]
        %s842 = scalar_lea.vmem %s828, 1
        %843 = vst [vmem:[%s842] sm:$0x1] %v841
        %s844 = scalar_lea.vmem %s829, 1
        %v845 = vld [vmem:[%s844] sm:$0x1]
        %v846 = vlaneseq
        %v847 = vshrl.u32 %v846, 7
        %vm848 = vcmp.eq.s32.totalorder %v847, 1
        %v849 = vsel %vm848, %v839, %v845
        %v850 = vld [vmem:[%s829] ss:$0 sm:$0xff]
        %851 = vst [vmem:[%s829] sm:$0x3] %v849
        %s852 = smov [#allocation14]
        %s853 = smov [#allocation18]
        %v854 = vld [vmem:[%s852] ss:$0 sm:$0xff]
        %s856 = scalar_lea.vmem %s852, 4294967295
        %v857 = vld [vmem:[%s856] sm:$0x2]
        %v858 = vlaneseq
        %v859 = vshrl.u32 %v858, 7
        %vm860 = vcmp.eq.s32.totalorder %v859, 0
        %v861 = vsel %vm860, %v854, %v857
        %s862 = scalar_lea.vmem %s852, 1
        %v863 = vld [vmem:[%s862] ss:$0 sm:$0xff]
        %864 = vst [vmem:[%s852] sm:$0x3] %v861
        %v865 = vld [vmem:[%s853] ss:$0 sm:$0xff]
        %s866 = scalar_lea.vmem %s852, 1
        %867 = vst [vmem:[%s866] sm:$0x1] %v865
        %s868 = scalar_lea.vmem %s853, 1
        %v869 = vld [vmem:[%s868] sm:$0x1]
        %v870 = vlaneseq
        %v871 = vshrl.u32 %v870, 7
        %vm872 = vcmp.eq.s32.totalorder %v871, 1
        %v873 = vsel %vm872, %v863, %v869
        %v874 = vld [vmem:[%s853] ss:$0 sm:$0xff]
        %875 = vst [vmem:[%s853] sm:$0x3] %v873
      $region101: #{custom-call.2} parent=93 // loop_footer
        %s396 = sadd.s32 1, %s392
      $region102: #{custom-call.2} parent=93 // loop_footer_branch
        %391 = sbr.rel target = $region98
      $region103: #{custom-call.2} parent=93 // loop_exit
        _
      %s876 = sadd.s32 %s294, 1
    $region94: #{custom-call.2} parent=1 // loop_footer
      _
    $region95: #{custom-call.2} parent=1 // loop_footer_branch
      %293 = sbr.rel target = $region91
    $region96: #{custom-call.2} parent=1 // loop_exit
      _
    %s879 = smov [#allocation20]
    %s880 = smov [#allocation8]
    %v881 = vlaneseq
    %v882 = vand.u32 %v881, 127
    %v883 = vmov %v882
    %v884 = vlaneseq
    %v885 = vshrl.u32 %v884, 7
    %v886 = vmov %v885
    %v887 = vld [vmem:[%s879] sm:$0x3]
    %vm890 = vcmp.eq.s32.totalorder %v886, %v883
    %v891 = vsel %vm890, %v887, 0.0
    %v892 = vrot.slane %v891, 4
    %v893 = vadd.f32 %v891, %v892
    %v894 = vrot.slane %v893, 2
    %v895 = vadd.f32 %v893, %v894
    %v896 = vrot.slane %v895, 1
    %v897 = vadd.f32 %v895, %v896
    %898 = vst [vmem:[%s880] sm:$0x1] %v897
    %s899 = smov [#allocation23]
    %s900 = smov [#allocation10]
    %v901 = vlaneseq
    %v902 = vand.u32 %v901, 127
    %v903 = vmov %v902
    %v904 = vlaneseq
    %v905 = vshrl.u32 %v904, 7
    %v906 = vmov %v905
    %v907 = vld [vmem:[%s899] sm:$0x3]
    %vm910 = vcmp.eq.s32.totalorder %v906, %v903
    %v911 = vsel %vm910, %v907, 0.0
    %v912 = vrot.slane %v911, 4
    %v913 = vadd.f32 %v911, %v912
    %v914 = vrot.slane %v913, 2
    %v915 = vadd.f32 %v913, %v914
    %v916 = vrot.slane %v915, 1
    %v917 = vadd.f32 %v915, %v916
    %918 = vst [vmem:[%s900] sm:$0x1] %v917
    %s920 = ssub.s32 2, 1
    %v921 = vld [vmem:[#allocation8] sm:%s920]
    %s923 = ssub.s32 2, 1
    %924 = vst [vmem:[#allocation9] sm:%s923] %v921
    %s926 = ssub.s32 2, 1
    %v927 = vld [vmem:[#allocation10] sm:%s926]
    %s929 = ssub.s32 2, 1
    %930 = vst [vmem:[#allocation11] sm:%s929] %v927
    %s932 = ssub.s32 4, 1
    %v933 = vld [vmem:[#allocation12] sm:%s932]
    %s935 = ssub.s32 4, 1
    %936 = vst [vmem:[#allocation13] sm:%s935] %v933
    %s938 = ssub.s32 4, 1
    %v939 = vld [vmem:[#allocation14] sm:%s938]
    %s941 = ssub.s32 4, 1
    %942 = vst [vmem:[#allocation15] sm:%s941] %v939
    %s944 = ssub.s32 4, 1
    %v945 = vld [vmem:[#allocation16] sm:%s944]
    %s947 = ssub.s32 4, 1
    %948 = vst [vmem:[#allocation17] sm:%s947] %v945
    %s950 = ssub.s32 4, 1
    %v951 = vld [vmem:[#allocation18] sm:%s950]
    %s953 = ssub.s32 4, 1
    %954 = vst [vmem:[#allocation19] sm:%s953] %v951
    // Predicated region
    $region104: #{custom-call.2} parent=1 // pred_check
      _
    $region105: #{custom-call.2} parent=1 // pred_check_branch
      %956 = sbr.rel (0) target = $region107
    $region106: #{custom-call.2} parent=1 // pred_region
      // Predicated region
      $region108: #{custom-call.2} parent=106 // pred_check
        _
      $region109: #{custom-call.2} parent=106 // pred_check_branch
        %958 = sbr.rel (0) target = $region111
      $region110: #{custom-call.2} parent=106 // pred_region
        %p960 = scmp.gt.s32.totalorder 0, 0
        // Predicated region
        $region112: #{custom-call.2} parent=110 // pred_check
          %p961 = pneg %p960
        $region113: #{custom-call.2} parent=110 // pred_check_branch
          %963 = sbr.rel (%p961) target = $region115
        $region114: #{custom-call.2} parent=110 // pred_region
          %s964 = ssub.s32 0, 1
          %s965 = smul.u32 %s964, 8
          %s966 = scalar_lea.vmem [#allocation9], %s965
          %v967 = vld [vmem:[#allocation9] sm:$0xff]
          // While loop
          $region116: #{custom-call.2} parent=114 // loop_pre_header
            _
          $region117: #{custom-call.2} parent=114 // loop_header
            %s968 = sphi [#allocation9], %s990
            %s969 = sphi %s4, %s991
            %v970 = vphi %v967, %v992
            %s971 = ssub.s32 %s966, 64
            %p972 = scmp.gt.s32.totalorder %s968, %s971
          $region118: #{custom-call.2} parent=114 // loop_header_branch
            %974 = sbr.rel (%p972) target = $region122
          $region119: #{custom-call.2} parent=114 // loop_body
            %975 = vst [vmem:[%s969] sm:$0xff] %v970
            %v976 = vld [vmem:[%s968 + $0x8] sm:$0xff]
            %977 = vst [vmem:[%s969 + $0x8] sm:$0xff] %v976
            %v978 = vld [vmem:[%s968 + $0x10] sm:$0xff]
            %979 = vst [vmem:[%s969 + $0x10] sm:$0xff] %v978
            %v980 = vld [vmem:[%s968 + $0x18] sm:$0xff]
            %981 = vst [vmem:[%s969 + $0x18] sm:$0xff] %v980
            %v982 = vld [vmem:[%s968 + $0x20] sm:$0xff]
            %983 = vst [vmem:[%s969 + $0x20] sm:$0xff] %v982
            %v984 = vld [vmem:[%s968 + $0x28] sm:$0xff]
            %985 = vst [vmem:[%s969 + $0x28] sm:$0xff] %v984
            %v986 = vld [vmem:[%s968 + $0x30] sm:$0xff]
            %987 = vst [vmem:[%s969 + $0x30] sm:$0xff] %v986
            %v988 = vld [vmem:[%s968 + $0x38] sm:$0xff]
            %989 = vst [vmem:[%s969 + $0x38] sm:$0xff] %v988
          $region120: #{custom-call.2} parent=114 // loop_footer
            %s990 = scalar_lea.vmem %s968, 64
            %s991 = scalar_lea.vmem %s969, 64
            %v992 = vld [vmem:[%s968 + $0x40] sm:$0xff]
          $region121: #{custom-call.2} parent=114 // loop_footer_branch
            %993 = sbr.rel target = $region117
          $region122: #{custom-call.2} parent=114 // loop_exit
            _
          // While loop
          $region123: #{custom-call.2} parent=114 // loop_pre_header
            _
          $region124: #{custom-call.2} parent=114 // loop_header
            %s994 = sphi %s968, %s1002
            %s995 = sphi %s969, %s1003
            %v996 = vphi %v970, %v996
            %p997 = scmp.gt.s32.totalorder %s994, %s966
          $region125: #{custom-call.2} parent=114 // loop_header_branch
            %999 = sbr.rel (%p997) target = $region129
          $region126: #{custom-call.2} parent=114 // loop_body
            %v1000 = vld [vmem:[%s994] sm:$0xff]
            %1001 = vst [vmem:[%s995] sm:$0xff] %v1000
          $region127: #{custom-call.2} parent=114 // loop_footer
            %s1002 = scalar_lea.vmem %s994, 8
            %s1003 = scalar_lea.vmem %s995, 8
          $region128: #{custom-call.2} parent=114 // loop_footer_branch
            %1004 = sbr.rel target = $region124
          $region129: #{custom-call.2} parent=114 // loop_exit
            _
        $region115: #{custom-call.2} parent=110 // pred_fallthru
          _
        %s1006 = ssub.s32 2, 1
        %s1007 = smul.u32 0, 8
        %s1008 = scalar_lea.vmem %s4, %s1007
        %s1009 = smul.u32 0, 8
        %s1010 = scalar_lea.vmem [#allocation9], %s1009
        %v1011 = vld [vmem:[%s1010] sm:%s1006]
        %1012 = vst [vmem:[%s1008] sm:%s1006] %v1011
      $region111: #{custom-call.2} parent=106 // pred_fallthru
        _
    $region107: #{custom-call.2} parent=1 // pred_fallthru
      _
    // Predicated region
    $region130: #{custom-call.2} parent=1 // pred_check
      _
    $region131: #{custom-call.2} parent=1 // pred_check_branch
      %1014 = sbr.rel (0) target = $region133
    $region132: #{custom-call.2} parent=1 // pred_region
      // Predicated region
      $region134: #{custom-call.2} parent=132 // pred_check
        _
      $region135: #{custom-call.2} parent=132 // pred_check_branch
        %1016 = sbr.rel (0) target = $region137
      $region136: #{custom-call.2} parent=132 // pred_region
        %p1018 = scmp.gt.s32.totalorder 0, 0
        // Predicated region
        $region138: #{custom-call.2} parent=136 // pred_check
          %p1019 = pneg %p1018
        $region139: #{custom-call.2} parent=136 // pred_check_branch
          %1021 = sbr.rel (%p1019) target = $region141
        $region140: #{custom-call.2} parent=136 // pred_region
          %s1022 = ssub.s32 0, 1
          %s1023 = smul.u32 %s1022, 8
          %s1024 = scalar_lea.vmem [#allocation11], %s1023
          %v1025 = vld [vmem:[#allocation11] sm:$0xff]
          // While loop
          $region142: #{custom-call.2} parent=140 // loop_pre_header
            _
          $region143: #{custom-call.2} parent=140 // loop_header
            %s1026 = sphi [#allocation11], %s1048
            %s1027 = sphi %s5, %s1049
            %v1028 = vphi %v1025, %v1050
            %s1029 = ssub.s32 %s1024, 64
            %p1030 = scmp.gt.s32.totalorder %s1026, %s1029
          $region144: #{custom-call.2} parent=140 // loop_header_branch
            %1032 = sbr.rel (%p1030) target = $region148
          $region145: #{custom-call.2} parent=140 // loop_body
            %1033 = vst [vmem:[%s1027] sm:$0xff] %v1028
            %v1034 = vld [vmem:[%s1026 + $0x8] sm:$0xff]
            %1035 = vst [vmem:[%s1027 + $0x8] sm:$0xff] %v1034
            %v1036 = vld [vmem:[%s1026 + $0x10] sm:$0xff]
            %1037 = vst [vmem:[%s1027 + $0x10] sm:$0xff] %v1036
            %v1038 = vld [vmem:[%s1026 + $0x18] sm:$0xff]
            %1039 = vst [vmem:[%s1027 + $0x18] sm:$0xff] %v1038
            %v1040 = vld [vmem:[%s1026 + $0x20] sm:$0xff]
            %1041 = vst [vmem:[%s1027 + $0x20] sm:$0xff] %v1040
            %v1042 = vld [vmem:[%s1026 + $0x28] sm:$0xff]
            %1043 = vst [vmem:[%s1027 + $0x28] sm:$0xff] %v1042
            %v1044 = vld [vmem:[%s1026 + $0x30] sm:$0xff]
            %1045 = vst [vmem:[%s1027 + $0x30] sm:$0xff] %v1044
            %v1046 = vld [vmem:[%s1026 + $0x38] sm:$0xff]
            %1047 = vst [vmem:[%s1027 + $0x38] sm:$0xff] %v1046
          $region146: #{custom-call.2} parent=140 // loop_footer
            %s1048 = scalar_lea.vmem %s1026, 64
            %s1049 = scalar_lea.vmem %s1027, 64
            %v1050 = vld [vmem:[%s1026 + $0x40] sm:$0xff]
          $region147: #{custom-call.2} parent=140 // loop_footer_branch
            %1051 = sbr.rel target = $region143
          $region148: #{custom-call.2} parent=140 // loop_exit
            _
          // While loop
          $region149: #{custom-call.2} parent=140 // loop_pre_header
            _
          $region150: #{custom-call.2} parent=140 // loop_header
            %s1052 = sphi %s1026, %s1060
            %s1053 = sphi %s1027, %s1061
            %v1054 = vphi %v1028, %v1054
            %p1055 = scmp.gt.s32.totalorder %s1052, %s1024
          $region151: #{custom-call.2} parent=140 // loop_header_branch
            %1057 = sbr.rel (%p1055) target = $region155
          $region152: #{custom-call.2} parent=140 // loop_body
            %v1058 = vld [vmem:[%s1052] sm:$0xff]
            %1059 = vst [vmem:[%s1053] sm:$0xff] %v1058
          $region153: #{custom-call.2} parent=140 // loop_footer
            %s1060 = scalar_lea.vmem %s1052, 8
            %s1061 = scalar_lea.vmem %s1053, 8
          $region154: #{custom-call.2} parent=140 // loop_footer_branch
            %1062 = sbr.rel target = $region150
          $region155: #{custom-call.2} parent=140 // loop_exit
            _
        $region141: #{custom-call.2} parent=136 // pred_fallthru
          _
        %s1064 = ssub.s32 2, 1
        %s1065 = smul.u32 0, 8
        %s1066 = scalar_lea.vmem %s5, %s1065
        %s1067 = smul.u32 0, 8
        %s1068 = scalar_lea.vmem [#allocation11], %s1067
        %v1069 = vld [vmem:[%s1068] sm:%s1064]
        %1070 = vst [vmem:[%s1066] sm:%s1064] %v1069
      $region137: #{custom-call.2} parent=132 // pred_fallthru
        _
    $region133: #{custom-call.2} parent=1 // pred_fallthru
      _
    // Predicated region
    $region156: #{custom-call.2} parent=1 // pred_check
      _
    $region157: #{custom-call.2} parent=1 // pred_check_branch
      %1072 = sbr.rel (0) target = $region159
    $region158: #{custom-call.2} parent=1 // pred_region
      %p1074 = scmp.gt.s32.totalorder 0, 0
      // Predicated region
      $region160: #{custom-call.2} parent=158 // pred_check
        %p1075 = pneg %p1074
      $region161: #{custom-call.2} parent=158 // pred_check_branch
        %1077 = sbr.rel (%p1075) target = $region163
      $region162: #{custom-call.2} parent=158 // pred_region
        %s1078 = ssub.s32 0, 1
        %s1079 = smul.u32 %s1078, 8
        %s1080 = scalar_lea.vmem [#allocation13], %s1079
        %v1081 = vld [vmem:[#allocation13] sm:$0xff]
        // While loop
        $region164: #{custom-call.2} parent=162 // loop_pre_header
          _
        $region165: #{custom-call.2} parent=162 // loop_header
          %s1082 = sphi [#allocation13], %s1104
          %s1083 = sphi %s6, %s1105
          %v1084 = vphi %v1081, %v1106
          %s1085 = ssub.s32 %s1080, 64
          %p1086 = scmp.gt.s32.totalorder %s1082, %s1085
        $region166: #{custom-call.2} parent=162 // loop_header_branch
          %1088 = sbr.rel (%p1086) target = $region170
        $region167: #{custom-call.2} parent=162 // loop_body
          %1089 = vst [vmem:[%s1083] sm:$0xff] %v1084
          %v1090 = vld [vmem:[%s1082 + $0x8] sm:$0xff]
          %1091 = vst [vmem:[%s1083 + $0x8] sm:$0xff] %v1090
          %v1092 = vld [vmem:[%s1082 + $0x10] sm:$0xff]
          %1093 = vst [vmem:[%s1083 + $0x10] sm:$0xff] %v1092
          %v1094 = vld [vmem:[%s1082 + $0x18] sm:$0xff]
          %1095 = vst [vmem:[%s1083 + $0x18] sm:$0xff] %v1094
          %v1096 = vld [vmem:[%s1082 + $0x20] sm:$0xff]
          %1097 = vst [vmem:[%s1083 + $0x20] sm:$0xff] %v1096
          %v1098 = vld [vmem:[%s1082 + $0x28] sm:$0xff]
          %1099 = vst [vmem:[%s1083 + $0x28] sm:$0xff] %v1098
          %v1100 = vld [vmem:[%s1082 + $0x30] sm:$0xff]
          %1101 = vst [vmem:[%s1083 + $0x30] sm:$0xff] %v1100
          %v1102 = vld [vmem:[%s1082 + $0x38] sm:$0xff]
          %1103 = vst [vmem:[%s1083 + $0x38] sm:$0xff] %v1102
        $region168: #{custom-call.2} parent=162 // loop_footer
          %s1104 = scalar_lea.vmem %s1082, 64
          %s1105 = scalar_lea.vmem %s1083, 64
          %v1106 = vld [vmem:[%s1082 + $0x40] sm:$0xff]
        $region169: #{custom-call.2} parent=162 // loop_footer_branch
          %1107 = sbr.rel target = $region165
        $region170: #{custom-call.2} parent=162 // loop_exit
          _
        // While loop
        $region171: #{custom-call.2} parent=162 // loop_pre_header
          _
        $region172: #{custom-call.2} parent=162 // loop_header
          %s1108 = sphi %s1082, %s1116
          %s1109 = sphi %s1083, %s1117
          %v1110 = vphi %v1084, %v1110
          %p1111 = scmp.gt.s32.totalorder %s1108, %s1080
        $region173: #{custom-call.2} parent=162 // loop_header_branch
          %1113 = sbr.rel (%p1111) target = $region177
        $region174: #{custom-call.2} parent=162 // loop_body
          %v1114 = vld [vmem:[%s1108] sm:$0xff]
          %1115 = vst [vmem:[%s1109] sm:$0xff] %v1114
        $region175: #{custom-call.2} parent=162 // loop_footer
          %s1116 = scalar_lea.vmem %s1108, 8
          %s1117 = scalar_lea.vmem %s1109, 8
        $region176: #{custom-call.2} parent=162 // loop_footer_branch
          %1118 = sbr.rel target = $region172
        $region177: #{custom-call.2} parent=162 // loop_exit
          _
      $region163: #{custom-call.2} parent=158 // pred_fallthru
        _
      %s1120 = ssub.s32 4, 1
      %s1121 = smul.u32 0, 8
      %s1122 = scalar_lea.vmem %s6, %s1121
      %s1123 = smul.u32 0, 8
      %s1124 = scalar_lea.vmem [#allocation13], %s1123
      %v1125 = vld [vmem:[%s1124] sm:%s1120]
      %1126 = vst [vmem:[%s1122] sm:%s1120] %v1125
    $region159: #{custom-call.2} parent=1 // pred_fallthru
      _
    // Predicated region
    $region178: #{custom-call.2} parent=1 // pred_check
      _
    $region179: #{custom-call.2} parent=1 // pred_check_branch
      %1128 = sbr.rel (0) target = $region181
    $region180: #{custom-call.2} parent=1 // pred_region
      %p1130 = scmp.gt.s32.totalorder 0, 0
      // Predicated region
      $region182: #{custom-call.2} parent=180 // pred_check
        %p1131 = pneg %p1130
      $region183: #{custom-call.2} parent=180 // pred_check_branch
        %1133 = sbr.rel (%p1131) target = $region185
      $region184: #{custom-call.2} parent=180 // pred_region
        %s1134 = ssub.s32 0, 1
        %s1135 = smul.u32 %s1134, 8
        %s1136 = scalar_lea.vmem [#allocation15], %s1135
        %v1137 = vld [vmem:[#allocation15] sm:$0xff]
        // While loop
        $region186: #{custom-call.2} parent=184 // loop_pre_header
          _
        $region187: #{custom-call.2} parent=184 // loop_header
          %s1138 = sphi [#allocation15], %s1160
          %s1139 = sphi %s7, %s1161
          %v1140 = vphi %v1137, %v1162
          %s1141 = ssub.s32 %s1136, 64
          %p1142 = scmp.gt.s32.totalorder %s1138, %s1141
        $region188: #{custom-call.2} parent=184 // loop_header_branch
          %1144 = sbr.rel (%p1142) target = $region192
        $region189: #{custom-call.2} parent=184 // loop_body
          %1145 = vst [vmem:[%s1139] sm:$0xff] %v1140
          %v1146 = vld [vmem:[%s1138 + $0x8] sm:$0xff]
          %1147 = vst [vmem:[%s1139 + $0x8] sm:$0xff] %v1146
          %v1148 = vld [vmem:[%s1138 + $0x10] sm:$0xff]
          %1149 = vst [vmem:[%s1139 + $0x10] sm:$0xff] %v1148
          %v1150 = vld [vmem:[%s1138 + $0x18] sm:$0xff]
          %1151 = vst [vmem:[%s1139 + $0x18] sm:$0xff] %v1150
          %v1152 = vld [vmem:[%s1138 + $0x20] sm:$0xff]
          %1153 = vst [vmem:[%s1139 + $0x20] sm:$0xff] %v1152
          %v1154 = vld [vmem:[%s1138 + $0x28] sm:$0xff]
          %1155 = vst [vmem:[%s1139 + $0x28] sm:$0xff] %v1154
          %v1156 = vld [vmem:[%s1138 + $0x30] sm:$0xff]
          %1157 = vst [vmem:[%s1139 + $0x30] sm:$0xff] %v1156
          %v1158 = vld [vmem:[%s1138 + $0x38] sm:$0xff]
          %1159 = vst [vmem:[%s1139 + $0x38] sm:$0xff] %v1158
        $region190: #{custom-call.2} parent=184 // loop_footer
          %s1160 = scalar_lea.vmem %s1138, 64
          %s1161 = scalar_lea.vmem %s1139, 64
          %v1162 = vld [vmem:[%s1138 + $0x40] sm:$0xff]
        $region191: #{custom-call.2} parent=184 // loop_footer_branch
          %1163 = sbr.rel target = $region187
        $region192: #{custom-call.2} parent=184 // loop_exit
          _
        // While loop
        $region193: #{custom-call.2} parent=184 // loop_pre_header
          _
        $region194: #{custom-call.2} parent=184 // loop_header
          %s1164 = sphi %s1138, %s1172
          %s1165 = sphi %s1139, %s1173
          %v1166 = vphi %v1140, %v1166
          %p1167 = scmp.gt.s32.totalorder %s1164, %s1136
        $region195: #{custom-call.2} parent=184 // loop_header_branch
          %1169 = sbr.rel (%p1167) target = $region199
        $region196: #{custom-call.2} parent=184 // loop_body
          %v1170 = vld [vmem:[%s1164] sm:$0xff]
          %1171 = vst [vmem:[%s1165] sm:$0xff] %v1170
        $region197: #{custom-call.2} parent=184 // loop_footer
          %s1172 = scalar_lea.vmem %s1164, 8
          %s1173 = scalar_lea.vmem %s1165, 8
        $region198: #{custom-call.2} parent=184 // loop_footer_branch
          %1174 = sbr.rel target = $region194
        $region199: #{custom-call.2} parent=184 // loop_exit
          _
      $region185: #{custom-call.2} parent=180 // pred_fallthru
        _
      %s1176 = ssub.s32 4, 1
      %s1177 = smul.u32 0, 8
      %s1178 = scalar_lea.vmem %s7, %s1177
      %s1179 = smul.u32 0, 8
      %s1180 = scalar_lea.vmem [#allocation15], %s1179
      %v1181 = vld [vmem:[%s1180] sm:%s1176]
      %1182 = vst [vmem:[%s1178] sm:%s1176] %v1181
    $region181: #{custom-call.2} parent=1 // pred_fallthru
      _
    // Predicated region
    $region200: #{custom-call.2} parent=1 // pred_check
      _
    $region201: #{custom-call.2} parent=1 // pred_check_branch
      %1184 = sbr.rel (0) target = $region203
    $region202: #{custom-call.2} parent=1 // pred_region
      %p1186 = scmp.gt.s32.totalorder 0, 0
      // Predicated region
      $region204: #{custom-call.2} parent=202 // pred_check
        %p1187 = pneg %p1186
      $region205: #{custom-call.2} parent=202 // pred_check_branch
        %1189 = sbr.rel (%p1187) target = $region207
      $region206: #{custom-call.2} parent=202 // pred_region
        %s1190 = ssub.s32 0, 1
        %s1191 = smul.u32 %s1190, 8
        %s1192 = scalar_lea.vmem [#allocation17], %s1191
        %v1193 = vld [vmem:[#allocation17] sm:$0xff]
        // While loop
        $region208: #{custom-call.2} parent=206 // loop_pre_header
          _
        $region209: #{custom-call.2} parent=206 // loop_header
          %s1194 = sphi [#allocation17], %s1216
          %s1195 = sphi %s8, %s1217
          %v1196 = vphi %v1193, %v1218
          %s1197 = ssub.s32 %s1192, 64
          %p1198 = scmp.gt.s32.totalorder %s1194, %s1197
        $region210: #{custom-call.2} parent=206 // loop_header_branch
          %1200 = sbr.rel (%p1198) target = $region214
        $region211: #{custom-call.2} parent=206 // loop_body
          %1201 = vst [vmem:[%s1195] sm:$0xff] %v1196
          %v1202 = vld [vmem:[%s1194 + $0x8] sm:$0xff]
          %1203 = vst [vmem:[%s1195 + $0x8] sm:$0xff] %v1202
          %v1204 = vld [vmem:[%s1194 + $0x10] sm:$0xff]
          %1205 = vst [vmem:[%s1195 + $0x10] sm:$0xff] %v1204
          %v1206 = vld [vmem:[%s1194 + $0x18] sm:$0xff]
          %1207 = vst [vmem:[%s1195 + $0x18] sm:$0xff] %v1206
          %v1208 = vld [vmem:[%s1194 + $0x20] sm:$0xff]
          %1209 = vst [vmem:[%s1195 + $0x20] sm:$0xff] %v1208
          %v1210 = vld [vmem:[%s1194 + $0x28] sm:$0xff]
          %1211 = vst [vmem:[%s1195 + $0x28] sm:$0xff] %v1210
          %v1212 = vld [vmem:[%s1194 + $0x30] sm:$0xff]
          %1213 = vst [vmem:[%s1195 + $0x30] sm:$0xff] %v1212
          %v1214 = vld [vmem:[%s1194 + $0x38] sm:$0xff]
          %1215 = vst [vmem:[%s1195 + $0x38] sm:$0xff] %v1214
        $region212: #{custom-call.2} parent=206 // loop_footer
          %s1216 = scalar_lea.vmem %s1194, 64
          %s1217 = scalar_lea.vmem %s1195, 64
          %v1218 = vld [vmem:[%s1194 + $0x40] sm:$0xff]
        $region213: #{custom-call.2} parent=206 // loop_footer_branch
          %1219 = sbr.rel target = $region209
        $region214: #{custom-call.2} parent=206 // loop_exit
          _
        // While loop
        $region215: #{custom-call.2} parent=206 // loop_pre_header
          _
        $region216: #{custom-call.2} parent=206 // loop_header
          %s1220 = sphi %s1194, %s1228
          %s1221 = sphi %s1195, %s1229
          %v1222 = vphi %v1196, %v1222
          %p1223 = scmp.gt.s32.totalorder %s1220, %s1192
        $region217: #{custom-call.2} parent=206 // loop_header_branch
          %1225 = sbr.rel (%p1223) target = $region221
        $region218: #{custom-call.2} parent=206 // loop_body
          %v1226 = vld [vmem:[%s1220] sm:$0xff]
          %1227 = vst [vmem:[%s1221] sm:$0xff] %v1226
        $region219: #{custom-call.2} parent=206 // loop_footer
          %s1228 = scalar_lea.vmem %s1220, 8
          %s1229 = scalar_lea.vmem %s1221, 8
        $region220: #{custom-call.2} parent=206 // loop_footer_branch
          %1230 = sbr.rel target = $region216
        $region221: #{custom-call.2} parent=206 // loop_exit
          _
      $region207: #{custom-call.2} parent=202 // pred_fallthru
        _
      %s1232 = ssub.s32 4, 1
      %s1233 = smul.u32 0, 8
      %s1234 = scalar_lea.vmem %s8, %s1233
      %s1235 = smul.u32 0, 8
      %s1236 = scalar_lea.vmem [#allocation17], %s1235
      %v1237 = vld [vmem:[%s1236] sm:%s1232]
      %1238 = vst [vmem:[%s1234] sm:%s1232] %v1237
    $region203: #{custom-call.2} parent=1 // pred_fallthru
      _
    // Predicated region
    $region222: #{custom-call.2} parent=1 // pred_check
      _
    $region223: #{custom-call.2} parent=1 // pred_check_branch
      %1240 = sbr.rel (0) target = $region225
    $region224: #{custom-call.2} parent=1 // pred_region
      %p1242 = scmp.gt.s32.totalorder 0, 0
      // Predicated region
      $region226: #{custom-call.2} parent=224 // pred_check
        %p1243 = pneg %p1242
      $region227: #{custom-call.2} parent=224 // pred_check_branch
        %1245 = sbr.rel (%p1243) target = $region229
      $region228: #{custom-call.2} parent=224 // pred_region
        %s1246 = ssub.s32 0, 1
        %s1247 = smul.u32 %s1246, 8
        %s1248 = scalar_lea.vmem [#allocation19], %s1247
        %v1249 = vld [vmem:[#allocation19] sm:$0xff]
        // While loop
        $region230: #{custom-call.2} parent=228 // loop_pre_header
          _
        $region231: #{custom-call.2} parent=228 // loop_header
          %s1250 = sphi [#allocation19], %s1272
          %s1251 = sphi %s9, %s1273
          %v1252 = vphi %v1249, %v1274
          %s1253 = ssub.s32 %s1248, 64
          %p1254 = scmp.gt.s32.totalorder %s1250, %s1253
        $region232: #{custom-call.2} parent=228 // loop_header_branch
          %1256 = sbr.rel (%p1254) target = $region236
        $region233: #{custom-call.2} parent=228 // loop_body
          %1257 = vst [vmem:[%s1251] sm:$0xff] %v1252
          %v1258 = vld [vmem:[%s1250 + $0x8] sm:$0xff]
          %1259 = vst [vmem:[%s1251 + $0x8] sm:$0xff] %v1258
          %v1260 = vld [vmem:[%s1250 + $0x10] sm:$0xff]
          %1261 = vst [vmem:[%s1251 + $0x10] sm:$0xff] %v1260
          %v1262 = vld [vmem:[%s1250 + $0x18] sm:$0xff]
          %1263 = vst [vmem:[%s1251 + $0x18] sm:$0xff] %v1262
          %v1264 = vld [vmem:[%s1250 + $0x20] sm:$0xff]
          %1265 = vst [vmem:[%s1251 + $0x20] sm:$0xff] %v1264
          %v1266 = vld [vmem:[%s1250 + $0x28] sm:$0xff]
          %1267 = vst [vmem:[%s1251 + $0x28] sm:$0xff] %v1266
          %v1268 = vld [vmem:[%s1250 + $0x30] sm:$0xff]
          %1269 = vst [vmem:[%s1251 + $0x30] sm:$0xff] %v1268
          %v1270 = vld [vmem:[%s1250 + $0x38] sm:$0xff]
          %1271 = vst [vmem:[%s1251 + $0x38] sm:$0xff] %v1270
        $region234: #{custom-call.2} parent=228 // loop_footer
          %s1272 = scalar_lea.vmem %s1250, 64
          %s1273 = scalar_lea.vmem %s1251, 64
          %v1274 = vld [vmem:[%s1250 + $0x40] sm:$0xff]
        $region235: #{custom-call.2} parent=228 // loop_footer_branch
          %1275 = sbr.rel target = $region231
        $region236: #{custom-call.2} parent=228 // loop_exit
          _
        // While loop
        $region237: #{custom-call.2} parent=228 // loop_pre_header
          _
        $region238: #{custom-call.2} parent=228 // loop_header
          %s1276 = sphi %s1250, %s1284
          %s1277 = sphi %s1251, %s1285
          %v1278 = vphi %v1252, %v1278
          %p1279 = scmp.gt.s32.totalorder %s1276, %s1248
        $region239: #{custom-call.2} parent=228 // loop_header_branch
          %1281 = sbr.rel (%p1279) target = $region243
        $region240: #{custom-call.2} parent=228 // loop_body
          %v1282 = vld [vmem:[%s1276] sm:$0xff]
          %1283 = vst [vmem:[%s1277] sm:$0xff] %v1282
        $region241: #{custom-call.2} parent=228 // loop_footer
          %s1284 = scalar_lea.vmem %s1276, 8
          %s1285 = scalar_lea.vmem %s1277, 8
        $region242: #{custom-call.2} parent=228 // loop_footer_branch
          %1286 = sbr.rel target = $region238
        $region243: #{custom-call.2} parent=228 // loop_exit
          _
      $region229: #{custom-call.2} parent=224 // pred_fallthru
        _
      %s1288 = ssub.s32 4, 1
      %s1289 = smul.u32 0, 8
      %s1290 = scalar_lea.vmem %s9, %s1289
      %s1291 = smul.u32 0, 8
      %s1292 = scalar_lea.vmem [#allocation19], %s1291
      %v1293 = vld [vmem:[%s1292] sm:%s1288]
      %1294 = vst [vmem:[%s1290] sm:%s1288] %v1293
    $region225: #{custom-call.2} parent=1 // pred_fallthru
      _
    // Predicated region
    $region244: #{custom-call.2} parent=1 // pred_check
      _
    $region245: #{custom-call.2} parent=1 // pred_check_branch
      %1296 = sbr.rel (0) target = $region247
    $region246: #{custom-call.2} parent=1 // pred_region
      _
    $region247: #{custom-call.2} parent=1 // pred_fallthru
      _
    // Predicated region
    $region248: #{custom-call.2} parent=1 // pred_check
      _
    $region249: #{custom-call.2} parent=1 // pred_check_branch
      %1298 = sbr.rel (0) target = $region251
    $region250: #{custom-call.2} parent=1 // pred_region
      _
    $region251: #{custom-call.2} parent=1 // pred_fallthru
      _

// kernel: hf_energy.1
$region0: #{hf_energy.1}
  #allocation0 [shape = 'u32[]', space=smem, size = 0x4, offset = 0x4, fixed_abs, tag = 'smem constant byte address 0x4 - core index']
  #allocation1 [shape = 'u32[72,128]{1,0:T(1,128)}', space=vmem, size = 0x9000, scoped, tag = 'internal scratch']
  %s0 = inlined_call_operand.vmem [shape: f32[16,4,4], index: 0, kind: input, shape index: {}]
  %s1 = inlined_call_operand.vmem [shape: f32[4,4], index: 1, kind: input, shape index: {}]
  %s2 = inlined_call_operand.vmem [shape: f32[4,4], index: 2, kind: input, shape index: {}]
  %s3 = inlined_call_operand.hbm [shape: f32[1,1], index: 3, kind: output, shape index: {}]
  %s4 = sld [smem:[#allocation0]]
  $region36: #{hf_energy.1} parent=0
    _
  %s6 = ssub.s32 1, %s4
  %s7 = scalar_select 0, %s6, %s4
  $region1: #{hf_energy.1} parent=0
    #allocation2 [shape = 'u8[512]{0}', space=smem, size = 0x200, scoped, tag = 'output window, operand 0, single buffered']
    #allocation3 [shape = 's32[1]{0}', space=sflag, size = 0x4, scoped, tag = 'scoped memory for hf_energy.1']
    %8 = vsyncpa [#allocation3], 0
    // Predicated region
    $region2: #{hf_energy.1} parent=1 // pred_check
      _
    $region3: #{hf_energy.1} parent=1 // pred_check_branch
      %10 = sbr.rel (0) target = $region5
    $region4: #{hf_energy.1} parent=1 // pred_region
      _
    $region5: #{hf_energy.1} parent=1 // pred_fallthru
      _
    // Predicated region
    $region6: #{hf_energy.1} parent=1 // pred_check
      _
    $region7: #{hf_energy.1} parent=1 // pred_check_branch
      %12 = sbr.rel (0) target = $region9
    $region8: #{hf_energy.1} parent=1 // pred_region
      _
    $region9: #{hf_energy.1} parent=1 // pred_fallthru
      _
    // Predicated region
    $region10: #{hf_energy.1} parent=1 // pred_check
      _
    $region11: #{hf_energy.1} parent=1 // pred_check_branch
      %14 = sbr.rel (0) target = $region13
    $region12: #{hf_energy.1} parent=1 // pred_region
      _
    $region13: #{hf_energy.1} parent=1 // pred_fallthru
      _
    %v15 = vld [vmem:[%s1] sm:$0xf]
    %v16 = vld [vmem:[%s2] sm:$0xf]
    %v17 = vlaneseq
    %v18 = vshrl.u32 %v17, 7
    %v19 = vlaneseq
    %v20 = vand.u32 %v19, 127
    %vm21 = vcmp.eq.s32.totalorder %v18, %v20
    %v22 = vsel %vm21, 1, 0
    %v23 = vcvt.s32.f32 %v22
    loop: start=0, step=1, limit=40
    $region14: #{hf_energy.1} parent=1 // loop_pre_header
      _
    $region15: #{hf_energy.1} parent=1 // loop_header
      %s25 = sphi 0, %s29
      %p26 = scmp.ge.s32.totalorder %s25, 40
      %v30 = vphi 0.0, %v1639
    $region16: #{hf_energy.1} parent=1 // loop_header_branch
      %28 = sbr.rel (%p26) target = $region20
    $region17: #{hf_energy.1} parent=1 // loop_body
      %v31 = vld [vmem:[%s0] sm:$0xf]
      %s33 = vtos %v30
      %v34 = vstv %s33
      %v36 = vmul.f32 %v34, %v31
      %s37 = scalar_lea.vmem %s0, 4
      %v38 = vld [vmem:[%s37] sm:$0xf]
      %39 = vrot.lane.b32.xlu0 %v30, 127
      %v40 = vpop.permute.xlu0 %39
      %s41 = vtos %v40
      %v42 = vstv %s41
      %v44 = vmul.f32 %v42, %v38
      %v45 = vadd.f32 %v36, %v44
      %s46 = scalar_lea.vmem %s0, 8
      %v47 = vld [vmem:[%s46] sm:$0xf]
      %48 = vrot.lane.b32.xlu0 %v30, 126
      %v49 = vpop.permute.xlu0 %48
      %s50 = vtos %v49
      %v51 = vstv %s50
      %v53 = vmul.f32 %v51, %v47
      %v54 = vadd.f32 %v45, %v53
      %s55 = scalar_lea.vmem %s0, 12
      %v56 = vld [vmem:[%s55] sm:$0xf]
      %57 = vrot.lane.b32.xlu0 %v30, 125
      %v58 = vpop.permute.xlu0 %57
      %s59 = vtos %v58
      %v60 = vstv %s59
      %v62 = vmul.f32 %v60, %v56
      %v63 = vadd.f32 %v54, %v62
      %s64 = scalar_lea.vmem %s0, 16
      %v65 = vld [vmem:[%s64] sm:$0xf]
      %v66 = vrot.slane %v30, 1
      %s67 = vtos %v66
      %v68 = vstv %s67
      %v70 = vmul.f32 %v68, %v65
      %v71 = vadd.f32 %v63, %v70
      %s72 = scalar_lea.vmem %s0, 20
      %v73 = vld [vmem:[%s72] sm:$0xf]
      %74 = vrot.lane.b32.xlu0 %v66, 127
      %v75 = vpop.permute.xlu0 %74
      %s76 = vtos %v75
      %v77 = vstv %s76
      %v79 = vmul.f32 %v77, %v73
      %v80 = vadd.f32 %v71, %v79
      %s81 = scalar_lea.vmem %s0, 24
      %v82 = vld [vmem:[%s81] sm:$0xf]
      %83 = vrot.lane.b32.xlu0 %v66, 126
      %v84 = vpop.permute.xlu0 %83
      %s85 = vtos %v84
      %v86 = vstv %s85
      %v88 = vmul.f32 %v86, %v82
      %v89 = vadd.f32 %v80, %v88
      %s90 = scalar_lea.vmem %s0, 28
      %v91 = vld [vmem:[%s90] sm:$0xf]
      %92 = vrot.lane.b32.xlu0 %v66, 125
      %v93 = vpop.permute.xlu0 %92
      %s94 = vtos %v93
      %v95 = vstv %s94
      %v97 = vmul.f32 %v95, %v91
      %v98 = vadd.f32 %v89, %v97
      %s99 = scalar_lea.vmem %s0, 32
      %v100 = vld [vmem:[%s99] sm:$0xf]
      %v101 = vrot.slane %v30, 2
      %s102 = vtos %v101
      %v103 = vstv %s102
      %v105 = vmul.f32 %v103, %v100
      %v106 = vadd.f32 %v98, %v105
      %s107 = scalar_lea.vmem %s0, 36
      %v108 = vld [vmem:[%s107] sm:$0xf]
      %109 = vrot.lane.b32.xlu0 %v101, 127
      %v110 = vpop.permute.xlu0 %109
      %s111 = vtos %v110
      %v112 = vstv %s111
      %v114 = vmul.f32 %v112, %v108
      %v115 = vadd.f32 %v106, %v114
      %s116 = scalar_lea.vmem %s0, 40
      %v117 = vld [vmem:[%s116] sm:$0xf]
      %118 = vrot.lane.b32.xlu0 %v101, 126
      %v119 = vpop.permute.xlu0 %118
      %s120 = vtos %v119
      %v121 = vstv %s120
      %v123 = vmul.f32 %v121, %v117
      %v124 = vadd.f32 %v115, %v123
      %s125 = scalar_lea.vmem %s0, 44
      %v126 = vld [vmem:[%s125] sm:$0xf]
      %127 = vrot.lane.b32.xlu0 %v101, 125
      %v128 = vpop.permute.xlu0 %127
      %s129 = vtos %v128
      %v130 = vstv %s129
      %v132 = vmul.f32 %v130, %v126
      %v133 = vadd.f32 %v124, %v132
      %s134 = scalar_lea.vmem %s0, 48
      %v135 = vld [vmem:[%s134] sm:$0xf]
      %v136 = vrot.slane %v30, 3
      %s137 = vtos %v136
      %v138 = vstv %s137
      %v140 = vmul.f32 %v138, %v135
      %v141 = vadd.f32 %v133, %v140
      %s142 = scalar_lea.vmem %s0, 52
      %v143 = vld [vmem:[%s142] sm:$0xf]
      %144 = vrot.lane.b32.xlu0 %v136, 127
      %v145 = vpop.permute.xlu0 %144
      %s146 = vtos %v145
      %v147 = vstv %s146
      %v149 = vmul.f32 %v147, %v143
      %v150 = vadd.f32 %v141, %v149
      %s151 = scalar_lea.vmem %s0, 56
      %v152 = vld [vmem:[%s151] sm:$0xf]
      %153 = vrot.lane.b32.xlu0 %v136, 126
      %v154 = vpop.permute.xlu0 %153
      %s155 = vtos %v154
      %v156 = vstv %s155
      %v158 = vmul.f32 %v156, %v152
      %v159 = vadd.f32 %v150, %v158
      %s160 = scalar_lea.vmem %s0, 60
      %v161 = vld [vmem:[%s160] sm:$0xf]
      %162 = vrot.lane.b32.xlu0 %v136, 125
      %v163 = vpop.permute.xlu0 %162
      %s164 = vtos %v163
      %v165 = vstv %s164
      %v167 = vmul.f32 %v165, %v161
      %v168 = vadd.f32 %v159, %v167
      %v169 = vadd.f32 %v15, %v168
      %171 = vset.pattern.permute.xlu0 0
      %172 = vperm.xlu0 %171, %v169
      %v173 = vpop.permute.xlu0 %172
      %v175 = vperm.slane %v16, 0
      %v176 = vmul.f32 %v173, %v175
      %177 = vset.pattern.permute.xlu0 1
      %178 = vperm.xlu0 %177, %v169
      %v179 = vpop.permute.xlu0 %178
      %v181 = vperm.slane %v16, 1
      %v182 = vmul.f32 %v179, %v181
      %v183 = vadd.f32 %v176, %v182
      %184 = vset.pattern.permute.xlu0 2
      %185 = vperm.xlu0 %184, %v169
      %v186 = vpop.permute.xlu0 %185
      %v188 = vperm.slane %v16, 2
      %v189 = vmul.f32 %v186, %v188
      %v190 = vadd.f32 %v183, %v189
      %191 = vset.pattern.permute.xlu0 3
      %192 = vperm.xlu0 %191, %v169
      %v193 = vpop.permute.xlu0 %192
      %v195 = vperm.slane %v16, 3
      %v196 = vmul.f32 %v193, %v195
      %v197 = vadd.f32 %v190, %v196
      %199 = vset.pattern.permute.xlu0 0
      %200 = vperm.xlu0 %199, %v16
      %v201 = vpop.permute.xlu0 %200
      %v203 = vperm.slane %v197, 0
      %v204 = vmul.f32 %v201, %v203
      %205 = vset.pattern.permute.xlu0 1
      %206 = vperm.xlu0 %205, %v16
      %v207 = vpop.permute.xlu0 %206
      %v209 = vperm.slane %v197, 1
      %v210 = vmul.f32 %v207, %v209
      %v211 = vadd.f32 %v204, %v210
      %212 = vset.pattern.permute.xlu0 2
      %213 = vperm.xlu0 %212, %v16
      %v214 = vpop.permute.xlu0 %213
      %v216 = vperm.slane %v197, 2
      %v217 = vmul.f32 %v214, %v216
      %v218 = vadd.f32 %v211, %v217
      %219 = vset.pattern.permute.xlu0 3
      %220 = vperm.xlu0 %219, %v16
      %v221 = vpop.permute.xlu0 %220
      %v223 = vperm.slane %v197, 3
      %v224 = vmul.f32 %v221, %v223
      %v225 = vadd.f32 %v218, %v224
      loop: start=0, step=1, limit=8
      $region21: #{hf_energy.1} parent=17 // loop_pre_header
        _
      $region22: #{hf_energy.1} parent=17 // loop_header
        %s227 = sphi 0, %s231
        %p228 = scmp.ge.s32.totalorder %s227, 8
        %v232 = vphi %v225, %v1425
        %v233 = vphi %v23, %v1449
        %v234 = vphi %v23, %v1460
      $region23: #{hf_energy.1} parent=17 // loop_header_branch
        %230 = sbr.rel (%p228) target = $region27
      $region24: #{hf_energy.1} parent=17 // loop_body
        %v235 = vand.u32 2147483647, %v232
        %vm236 = vcmp.lt.f32.partialorder %v235, 1e-12
        %v237 = vsel %vm236, 1.0, %v232
        %v239 = vrot.slane %v232, 7
        %240 = vrot.lane.b32.xlu0 %v239, 1
        %v241 = vpop.permute.xlu0 %240
        %v243 = vsub.f32 %v232, %v241
        %v244 = vmul.f32 %v237, 2.0
        %v246 = vrot.slane %v244, 7
        %v248 = vrcp.pop %v246
        %v249 = vmul.f32 %v246, %v248
        %v250 = vsub.f32 1.0, %v249
        %v251 = vmul.f32 %v248, %v250
        %v252 = vadd.f32 %v248, %v251
        %vm253 = vweird.f32 %v246
        %vm254 = vweird.f32 %v248
        %vm255 = vmor %vm253, %vm254
        %v256 = vsel %vm255, %v248, %v252
        %v257 = vand.u32 2147483647, %v246
        %vm258 = vcmp.eq.f32.partialorder %v257, 8.507059e+37
        %v259 = vand.u32 %v246, 2147483648
        %v260 = vor.u32 1.1754944e-38, %v259
        %v261 = vsel %vm258, %v260, %v256
        %v262 = vmul.f32 %v243, %v261
        %vm263 = vcmp.ge.f32.partialorder %v262, 0.0
        %v264 = vsel %vm263, 1.0, -1.0
        %v265 = vand.u32 2147483647, %v262
        %v266 = vmul.f32 %v262, %v262
        %v267 = vadd.f32 %v266, 1.0
        %v268 = vrsqrt.pop %v267
        %v269 = vmul.f32 %v268, %v267
        %v270 = vmul.f32 %v269, %v268
        %v271 = vmul.f32 0.5, %v270
        %v272 = vsub.f32 1.5, %v271
        %v273 = vmul.f32 %v268, %v272
        %v274 = vmul.f32 %v267, %v273
        %vm275 = vcmp.eq.f32.partialorder %v267, inf
        %v276 = vsel %vm275, %v267, %v274
        %vm277 = vcmp.eq.f32.partialorder %v267, 0.0
        %v278 = vand.u32 %v267, 2147483648
        %v279 = vsel %vm277, %v278, %v276
        %v280 = vadd.f32 %v265, %v279
        %v281 = vrcp.pop %v280
        %v282 = vmul.f32 %v280, %v281
        %v283 = vsub.f32 1.0, %v282
        %v284 = vmul.f32 %v281, %v283
        %v285 = vadd.f32 %v281, %v284
        %vm286 = vweird.f32 %v280
        %vm287 = vweird.f32 %v281
        %vm288 = vmor %vm286, %vm287
        %v289 = vsel %vm288, %v281, %v285
        %v290 = vand.u32 2147483647, %v280
        %vm291 = vcmp.eq.f32.partialorder %v290, 8.507059e+37
        %v292 = vand.u32 %v280, 2147483648
        %v293 = vor.u32 1.1754944e-38, %v292
        %v294 = vsel %vm291, %v293, %v289
        %v295 = vmul.f32 %v264, %v294
        %v296 = vmul.f32 %v295, %v295
        %v297 = vadd.f32 %v296, 1.0
        %v298 = vrsqrt.pop %v297
        %v299 = vmul.f32 %v298, %v297
        %v300 = vmul.f32 %v299, %v298
        %v301 = vmul.f32 0.5, %v300
        %v302 = vsub.f32 1.5, %v301
        %v303 = vmul.f32 %v298, %v302
        %vm304 = vweird.f32 %v297
        %vm305 = vweird.f32 %v298
        %vm306 = vmor %vm304, %vm305
        %v307 = vsel %vm306, %v298, %v303
        %v308 = vmul.f32 %v295, %v307
        %v310 = vrot.slane %v307, 1
        %v312 = vsel %vm236, 1.0, %v310
        %v314 = vrot.slane %v308, 1
        %v316 = vsel %vm236, 0.0, %v314
        %vm317 = vcmp.eq.s32.totalorder %v18, 0
        %vm318 = vcmp.eq.s32.totalorder %v20, 0
        %vm319 = vmand %vm317, %vm318
        %v320 = vsel %vm319, 1, 0
        %v321 = vcvt.s32.f32 %v320
        %vm322 = vcmp.eq.s32.totalorder %v18, 1
        %vm323 = vcmp.eq.s32.totalorder %v20, 1
        %vm324 = vmand %vm322, %vm323
        %v325 = vsel %vm324, 1, 0
        %v326 = vcvt.s32.f32 %v325
        %vm327 = vmand %vm317, %vm323
        %v328 = vsel %vm327, 1, 0
        %v329 = vcvt.s32.f32 %v328
        %vm330 = vmand %vm322, %vm318
        %v331 = vsel %vm330, 1, 0
        %v332 = vcvt.s32.f32 %v331
        %v333 = vsub.f32 %v312, 1.0
        %v334 = vadd.f32 %v321, %v326
        %336 = vrot.lane.b32.xlu0 %v333, 127
        %v337 = vpop.permute.xlu0 %336
        %s338 = vtos %v337
        %v339 = vstv %s338
        %v341 = vmul.f32 %v339, %v334
        %v342 = vadd.f32 %v23, %v341
        %344 = vrot.lane.b32.xlu0 %v316, 127
        %v345 = vpop.permute.xlu0 %344
        %s346 = vtos %v345
        %v347 = vstv %s346
        %v349 = vmul.f32 %v347, %v329
        %v350 = vadd.f32 %v342, %v349
        %v351 = vmul.f32 %v347, %v332
        %v352 = vsub.f32 %v350, %v351
        %v353 = vsub.f32 %v342, %v349
        %v354 = vadd.f32 %v353, %v351
        %355 = vset.pattern.permute.xlu0 0
        %356 = vperm.xlu0 %355, %v232
        %v357 = vpop.permute.xlu0 %356
        %v359 = vperm.slane %v352, 0
        %v360 = vmul.f32 %v357, %v359
        %361 = vset.pattern.permute.xlu0 1
        %362 = vperm.xlu0 %361, %v232
        %v363 = vpop.permute.xlu0 %362
        %v365 = vperm.slane %v352, 1
        %v366 = vmul.f32 %v363, %v365
        %v367 = vadd.f32 %v360, %v366
        %368 = vset.pattern.permute.xlu0 2
        %369 = vperm.xlu0 %368, %v232
        %v370 = vpop.permute.xlu0 %369
        %v372 = vperm.slane %v352, 2
        %v373 = vmul.f32 %v370, %v372
        %v374 = vadd.f32 %v367, %v373
        %375 = vset.pattern.permute.xlu0 3
        %376 = vperm.xlu0 %375, %v232
        %v377 = vpop.permute.xlu0 %376
        %v379 = vperm.slane %v352, 3
        %v380 = vmul.f32 %v377, %v379
        %v381 = vadd.f32 %v374, %v380
        %383 = vset.pattern.permute.xlu0 0
        %384 = vperm.xlu0 %383, %v354
        %v385 = vpop.permute.xlu0 %384
        %v387 = vperm.slane %v381, 0
        %v388 = vmul.f32 %v385, %v387
        %389 = vset.pattern.permute.xlu0 1
        %390 = vperm.xlu0 %389, %v354
        %v391 = vpop.permute.xlu0 %390
        %v393 = vperm.slane %v381, 1
        %v394 = vmul.f32 %v391, %v393
        %v395 = vadd.f32 %v388, %v394
        %396 = vset.pattern.permute.xlu0 2
        %397 = vperm.xlu0 %396, %v354
        %v398 = vpop.permute.xlu0 %397
        %v400 = vperm.slane %v381, 2
        %v401 = vmul.f32 %v398, %v400
        %v402 = vadd.f32 %v395, %v401
        %403 = vset.pattern.permute.xlu0 3
        %404 = vperm.xlu0 %403, %v354
        %v405 = vpop.permute.xlu0 %404
        %v407 = vperm.slane %v381, 3
        %v408 = vmul.f32 %v405, %v407
        %v409 = vadd.f32 %v402, %v408
        %411 = vset.pattern.permute.xlu0 0
        %412 = vperm.xlu0 %411, %v233
        %v413 = vpop.permute.xlu0 %412
        %v415 = vmul.f32 %v413, %v359
        %416 = vset.pattern.permute.xlu0 1
        %417 = vperm.xlu0 %416, %v233
        %v418 = vpop.permute.xlu0 %417
        %v420 = vmul.f32 %v418, %v365
        %v421 = vadd.f32 %v415, %v420
        %422 = vset.pattern.permute.xlu0 2
        %423 = vperm.xlu0 %422, %v233
        %v424 = vpop.permute.xlu0 %423
        %v426 = vmul.f32 %v424, %v372
        %v427 = vadd.f32 %v421, %v426
        %428 = vset.pattern.permute.xlu0 3
        %429 = vperm.xlu0 %428, %v233
        %v430 = vpop.permute.xlu0 %429
        %v432 = vmul.f32 %v430, %v379
        %v433 = vadd.f32 %v427, %v432
        %v434 = vperm.slane %v234, 0
        %v435 = vmul.f32 %v385, %v434
        %v436 = vperm.slane %v234, 1
        %v437 = vmul.f32 %v391, %v436
        %v438 = vadd.f32 %v435, %v437
        %v439 = vperm.slane %v234, 2
        %v440 = vmul.f32 %v398, %v439
        %v441 = vadd.f32 %v438, %v440
        %v442 = vperm.slane %v234, 3
        %v443 = vmul.f32 %v405, %v442
        %v444 = vadd.f32 %v441, %v443
        %v445 = vand.u32 2147483647, %v409
        %vm446 = vcmp.lt.f32.partialorder %v445, 1e-12
        %v447 = vsel %vm446, 1.0, %v409
        %v449 = vrot.slane %v409, 6
        %450 = vrot.lane.b32.xlu0 %v449, 2
        %v451 = vpop.permute.xlu0 %450
        %v453 = vsub.f32 %v409, %v451
        %v454 = vmul.f32 %v447, 2.0
        %v456 = vrot.slane %v454, 6
        %v458 = vrcp.pop %v456
        %v459 = vmul.f32 %v456, %v458
        %v460 = vsub.f32 1.0, %v459
        %v461 = vmul.f32 %v458, %v460
        %v462 = vadd.f32 %v458, %v461
        %vm463 = vweird.f32 %v456
        %vm464 = vweird.f32 %v458
        %vm465 = vmor %vm463, %vm464
        %v466 = vsel %vm465, %v458, %v462
        %v467 = vand.u32 2147483647, %v456
        %vm468 = vcmp.eq.f32.partialorder %v467, 8.507059e+37
        %v469 = vand.u32 %v456, 2147483648
        %v470 = vor.u32 1.1754944e-38, %v469
        %v471 = vsel %vm468, %v470, %v466
        %v472 = vmul.f32 %v453, %v471
        %vm473 = vcmp.ge.f32.partialorder %v472, 0.0
        %v474 = vsel %vm473, 1.0, -1.0
        %v475 = vand.u32 2147483647, %v472
        %v476 = vmul.f32 %v472, %v472
        %v477 = vadd.f32 %v476, 1.0
        %v478 = vrsqrt.pop %v477
        %v479 = vmul.f32 %v478, %v477
        %v480 = vmul.f32 %v479, %v478
        %v481 = vmul.f32 0.5, %v480
        %v482 = vsub.f32 1.5, %v481
        %v483 = vmul.f32 %v478, %v482
        %v484 = vmul.f32 %v477, %v483
        %vm485 = vcmp.eq.f32.partialorder %v477, inf
        %v486 = vsel %vm485, %v477, %v484
        %vm487 = vcmp.eq.f32.partialorder %v477, 0.0
        %v488 = vand.u32 %v477, 2147483648
        %v489 = vsel %vm487, %v488, %v486
        %v490 = vadd.f32 %v475, %v489
        %v491 = vrcp.pop %v490
        %v492 = vmul.f32 %v490, %v491
        %v493 = vsub.f32 1.0, %v492
        %v494 = vmul.f32 %v491, %v493
        %v495 = vadd.f32 %v491, %v494
        %vm496 = vweird.f32 %v490
        %vm497 = vweird.f32 %v491
        %vm498 = vmor %vm496, %vm497
        %v499 = vsel %vm498, %v491, %v495
        %v500 = vand.u32 2147483647, %v490
        %vm501 = vcmp.eq.f32.partialorder %v500, 8.507059e+37
        %v502 = vand.u32 %v490, 2147483648
        %v503 = vor.u32 1.1754944e-38, %v502
        %v504 = vsel %vm501, %v503, %v499
        %v505 = vmul.f32 %v474, %v504
        %v506 = vmul.f32 %v505, %v505
        %v507 = vadd.f32 %v506, 1.0
        %v508 = vrsqrt.pop %v507
        %v509 = vmul.f32 %v508, %v507
        %v510 = vmul.f32 %v509, %v508
        %v511 = vmul.f32 0.5, %v510
        %v512 = vsub.f32 1.5, %v511
        %v513 = vmul.f32 %v508, %v512
        %vm514 = vweird.f32 %v507
        %vm515 = vweird.f32 %v508
        %vm516 = vmor %vm514, %vm515
        %v517 = vsel %vm516, %v508, %v513
        %v518 = vmul.f32 %v505, %v517
        %v520 = vrot.slane %v517, 2
        %v522 = vsel %vm446, 1.0, %v520
        %v524 = vrot.slane %v518, 2
        %v526 = vsel %vm446, 0.0, %v524
        %vm527 = vcmp.eq.s32.totalorder %v18, 2
        %vm528 = vcmp.eq.s32.totalorder %v20, 2
        %vm529 = vmand %vm527, %vm528
        %v530 = vsel %vm529, 1, 0
        %v531 = vcvt.s32.f32 %v530
        %vm532 = vmand %vm317, %vm528
        %v533 = vsel %vm532, 1, 0
        %v534 = vcvt.s32.f32 %v533
        %vm535 = vmand %vm527, %vm318
        %v536 = vsel %vm535, 1, 0
        %v537 = vcvt.s32.f32 %v536
        %v538 = vsub.f32 %v522, 1.0
        %v539 = vadd.f32 %v321, %v531
        %541 = vrot.lane.b32.xlu0 %v538, 126
        %v542 = vpop.permute.xlu0 %541
        %s543 = vtos %v542
        %v544 = vstv %s543
        %v546 = vmul.f32 %v544, %v539
        %v547 = vadd.f32 %v23, %v546
        %549 = vrot.lane.b32.xlu0 %v526, 126
        %v550 = vpop.permute.xlu0 %549
        %s551 = vtos %v550
        %v552 = vstv %s551
        %v554 = vmul.f32 %v552, %v534
        %v555 = vadd.f32 %v547, %v554
        %v556 = vmul.f32 %v552, %v537
        %v557 = vsub.f32 %v555, %v556
        %v558 = vsub.f32 %v547, %v554
        %v559 = vadd.f32 %v558, %v556
        %560 = vset.pattern.permute.xlu0 0
        %561 = vperm.xlu0 %560, %v409
        %v562 = vpop.permute.xlu0 %561
        %v564 = vperm.slane %v557, 0
        %v565 = vmul.f32 %v562, %v564
        %566 = vset.pattern.permute.xlu0 1
        %567 = vperm.xlu0 %566, %v409
        %v568 = vpop.permute.xlu0 %567
        %v570 = vperm.slane %v557, 1
        %v571 = vmul.f32 %v568, %v570
        %v572 = vadd.f32 %v565, %v571
        %573 = vset.pattern.permute.xlu0 2
        %574 = vperm.xlu0 %573, %v409
        %v575 = vpop.permute.xlu0 %574
        %v577 = vperm.slane %v557, 2
        %v578 = vmul.f32 %v575, %v577
        %v579 = vadd.f32 %v572, %v578
        %580 = vset.pattern.permute.xlu0 3
        %581 = vperm.xlu0 %580, %v409
        %v582 = vpop.permute.xlu0 %581
        %v584 = vperm.slane %v557, 3
        %v585 = vmul.f32 %v582, %v584
        %v586 = vadd.f32 %v579, %v585
        %588 = vset.pattern.permute.xlu0 0
        %589 = vperm.xlu0 %588, %v559
        %v590 = vpop.permute.xlu0 %589
        %v592 = vperm.slane %v586, 0
        %v593 = vmul.f32 %v590, %v592
        %594 = vset.pattern.permute.xlu0 1
        %595 = vperm.xlu0 %594, %v559
        %v596 = vpop.permute.xlu0 %595
        %v598 = vperm.slane %v586, 1
        %v599 = vmul.f32 %v596, %v598
        %v600 = vadd.f32 %v593, %v599
        %601 = vset.pattern.permute.xlu0 2
        %602 = vperm.xlu0 %601, %v559
        %v603 = vpop.permute.xlu0 %602
        %v605 = vperm.slane %v586, 2
        %v606 = vmul.f32 %v603, %v605
        %v607 = vadd.f32 %v600, %v606
        %608 = vset.pattern.permute.xlu0 3
        %609 = vperm.xlu0 %608, %v559
        %v610 = vpop.permute.xlu0 %609
        %v612 = vperm.slane %v586, 3
        %v613 = vmul.f32 %v610, %v612
        %v614 = vadd.f32 %v607, %v613
        %616 = vset.pattern.permute.xlu0 0
        %617 = vperm.xlu0 %616, %v433
        %v618 = vpop.permute.xlu0 %617
        %v620 = vmul.f32 %v618, %v564
        %621 = vset.pattern.permute.xlu0 1
        %622 = vperm.xlu0 %621, %v433
        %v623 = vpop.permute.xlu0 %622
        %v625 = vmul.f32 %v623, %v570
        %v626 = vadd.f32 %v620, %v625
        %627 = vset.pattern.permute.xlu0 2
        %628 = vperm.xlu0 %627, %v433
        %v629 = vpop.permute.xlu0 %628
        %v631 = vmul.f32 %v629, %v577
        %v632 = vadd.f32 %v626, %v631
        %633 = vset.pattern.permute.xlu0 3
        %634 = vperm.xlu0 %633, %v433
        %v635 = vpop.permute.xlu0 %634
        %v637 = vmul.f32 %v635, %v584
        %v638 = vadd.f32 %v632, %v637
        %v639 = vperm.slane %v444, 0
        %v640 = vmul.f32 %v590, %v639
        %v641 = vperm.slane %v444, 1
        %v642 = vmul.f32 %v596, %v641
        %v643 = vadd.f32 %v640, %v642
        %v644 = vperm.slane %v444, 2
        %v645 = vmul.f32 %v603, %v644
        %v646 = vadd.f32 %v643, %v645
        %v647 = vperm.slane %v444, 3
        %v648 = vmul.f32 %v610, %v647
        %v649 = vadd.f32 %v646, %v648
        %v650 = vand.u32 2147483647, %v614
        %vm651 = vcmp.lt.f32.partialorder %v650, 1e-12
        %v652 = vsel %vm651, 1.0, %v614
        %v654 = vrot.slane %v614, 5
        %655 = vrot.lane.b32.xlu0 %v654, 3
        %v656 = vpop.permute.xlu0 %655
        %v658 = vsub.f32 %v614, %v656
        %v659 = vmul.f32 %v652, 2.0
        %v661 = vrot.slane %v659, 5
        %v663 = vrcp.pop %v661
        %v664 = vmul.f32 %v661, %v663
        %v665 = vsub.f32 1.0, %v664
        %v666 = vmul.f32 %v663, %v665
        %v667 = vadd.f32 %v663, %v666
        %vm668 = vweird.f32 %v661
        %vm669 = vweird.f32 %v663
        %vm670 = vmor %vm668, %vm669
        %v671 = vsel %vm670, %v663, %v667
        %v672 = vand.u32 2147483647, %v661
        %vm673 = vcmp.eq.f32.partialorder %v672, 8.507059e+37
        %v674 = vand.u32 %v661, 2147483648
        %v675 = vor.u32 1.1754944e-38, %v674
        %v676 = vsel %vm673, %v675, %v671
        %v677 = vmul.f32 %v658, %v676
        %vm678 = vcmp.ge.f32.partialorder %v677, 0.0
        %v679 = vsel %vm678, 1.0, -1.0
        %v680 = vand.u32 2147483647, %v677
        %v681 = vmul.f32 %v677, %v677
        %v682 = vadd.f32 %v681, 1.0
        %v683 = vrsqrt.pop %v682
        %v684 = vmul.f32 %v683, %v682
        %v685 = vmul.f32 %v684, %v683
        %v686 = vmul.f32 0.5, %v685
        %v687 = vsub.f32 1.5, %v686
        %v688 = vmul.f32 %v683, %v687
        %v689 = vmul.f32 %v682, %v688
        %vm690 = vcmp.eq.f32.partialorder %v682, inf
        %v691 = vsel %vm690, %v682, %v689
        %vm692 = vcmp.eq.f32.partialorder %v682, 0.0
        %v693 = vand.u32 %v682, 2147483648
        %v694 = vsel %vm692, %v693, %v691
        %v695 = vadd.f32 %v680, %v694
        %v696 = vrcp.pop %v695
        %v697 = vmul.f32 %v695, %v696
        %v698 = vsub.f32 1.0, %v697
        %v699 = vmul.f32 %v696, %v698
        %v700 = vadd.f32 %v696, %v699
        %vm701 = vweird.f32 %v695
        %vm702 = vweird.f32 %v696
        %vm703 = vmor %vm701, %vm702
        %v704 = vsel %vm703, %v696, %v700
        %v705 = vand.u32 2147483647, %v695
        %vm706 = vcmp.eq.f32.partialorder %v705, 8.507059e+37
        %v707 = vand.u32 %v695, 2147483648
        %v708 = vor.u32 1.1754944e-38, %v707
        %v709 = vsel %vm706, %v708, %v704
        %v710 = vmul.f32 %v679, %v709
        %v711 = vmul.f32 %v710, %v710
        %v712 = vadd.f32 %v711, 1.0
        %v713 = vrsqrt.pop %v712
        %v714 = vmul.f32 %v713, %v712
        %v715 = vmul.f32 %v714, %v713
        %v716 = vmul.f32 0.5, %v715
        %v717 = vsub.f32 1.5, %v716
        %v718 = vmul.f32 %v713, %v717
        %vm719 = vweird.f32 %v712
        %vm720 = vweird.f32 %v713
        %vm721 = vmor %vm719, %vm720
        %v722 = vsel %vm721, %v713, %v718
        %v723 = vmul.f32 %v710, %v722
        %v725 = vrot.slane %v722, 3
        %v727 = vsel %vm651, 1.0, %v725
        %v729 = vrot.slane %v723, 3
        %v731 = vsel %vm651, 0.0, %v729
        %vm732 = vcmp.eq.s32.totalorder %v18, 3
        %vm733 = vcmp.eq.s32.totalorder %v20, 3
        %vm734 = vmand %vm732, %vm733
        %v735 = vsel %vm734, 1, 0
        %v736 = vcvt.s32.f32 %v735
        %vm737 = vmand %vm317, %vm733
        %v738 = vsel %vm737, 1, 0
        %v739 = vcvt.s32.f32 %v738
        %vm740 = vmand %vm732, %vm318
        %v741 = vsel %vm740, 1, 0
        %v742 = vcvt.s32.f32 %v741
        %v743 = vsub.f32 %v727, 1.0
        %v744 = vadd.f32 %v321, %v736
        %746 = vrot.lane.b32.xlu0 %v743, 125
        %v747 = vpop.permute.xlu0 %746
        %s748 = vtos %v747
        %v749 = vstv %s748
        %v751 = vmul.f32 %v749, %v744
        %v752 = vadd.f32 %v23, %v751
        %754 = vrot.lane.b32.xlu0 %v731, 125
        %v755 = vpop.permute.xlu0 %754
        %s756 = vtos %v755
        %v757 = vstv %s756
        %v759 = vmul.f32 %v757, %v739
        %v760 = vadd.f32 %v752, %v759
        %v761 = vmul.f32 %v757, %v742
        %v762 = vsub.f32 %v760, %v761
        %v763 = vsub.f32 %v752, %v759
        %v764 = vadd.f32 %v763, %v761
        %765 = vset.pattern.permute.xlu0 0
        %766 = vperm.xlu0 %765, %v614
        %v767 = vpop.permute.xlu0 %766
        %v769 = vperm.slane %v762, 0
        %v770 = vmul.f32 %v767, %v769
        %771 = vset.pattern.permute.xlu0 1
        %772 = vperm.xlu0 %771, %v614
        %v773 = vpop.permute.xlu0 %772
        %v775 = vperm.slane %v762, 1
        %v776 = vmul.f32 %v773, %v775
        %v777 = vadd.f32 %v770, %v776
        %778 = vset.pattern.permute.xlu0 2
        %779 = vperm.xlu0 %778, %v614
        %v780 = vpop.permute.xlu0 %779
        %v782 = vperm.slane %v762, 2
        %v783 = vmul.f32 %v780, %v782
        %v784 = vadd.f32 %v777, %v783
        %785 = vset.pattern.permute.xlu0 3
        %786 = vperm.xlu0 %785, %v614
        %v787 = vpop.permute.xlu0 %786
        %v789 = vperm.slane %v762, 3
        %v790 = vmul.f32 %v787, %v789
        %v791 = vadd.f32 %v784, %v790
        %793 = vset.pattern.permute.xlu0 0
        %794 = vperm.xlu0 %793, %v764
        %v795 = vpop.permute.xlu0 %794
        %v797 = vperm.slane %v791, 0
        %v798 = vmul.f32 %v795, %v797
        %799 = vset.pattern.permute.xlu0 1
        %800 = vperm.xlu0 %799, %v764
        %v801 = vpop.permute.xlu0 %800
        %v803 = vperm.slane %v791, 1
        %v804 = vmul.f32 %v801, %v803
        %v805 = vadd.f32 %v798, %v804
        %806 = vset.pattern.permute.xlu0 2
        %807 = vperm.xlu0 %806, %v764
        %v808 = vpop.permute.xlu0 %807
        %v810 = vperm.slane %v791, 2
        %v811 = vmul.f32 %v808, %v810
        %v812 = vadd.f32 %v805, %v811
        %813 = vset.pattern.permute.xlu0 3
        %814 = vperm.xlu0 %813, %v764
        %v815 = vpop.permute.xlu0 %814
        %v817 = vperm.slane %v791, 3
        %v818 = vmul.f32 %v815, %v817
        %v819 = vadd.f32 %v812, %v818
        %821 = vset.pattern.permute.xlu0 0
        %822 = vperm.xlu0 %821, %v638
        %v823 = vpop.permute.xlu0 %822
        %v825 = vmul.f32 %v823, %v769
        %826 = vset.pattern.permute.xlu0 1
        %827 = vperm.xlu0 %826, %v638
        %v828 = vpop.permute.xlu0 %827
        %v830 = vmul.f32 %v828, %v775
        %v831 = vadd.f32 %v825, %v830
        %832 = vset.pattern.permute.xlu0 2
        %833 = vperm.xlu0 %832, %v638
        %v834 = vpop.permute.xlu0 %833
        %v836 = vmul.f32 %v834, %v782
        %v837 = vadd.f32 %v831, %v836
        %838 = vset.pattern.permute.xlu0 3
        %839 = vperm.xlu0 %838, %v638
        %v840 = vpop.permute.xlu0 %839
        %v842 = vmul.f32 %v840, %v789
        %v843 = vadd.f32 %v837, %v842
        %v844 = vperm.slane %v649, 0
        %v845 = vmul.f32 %v795, %v844
        %v846 = vperm.slane %v649, 1
        %v847 = vmul.f32 %v801, %v846
        %v848 = vadd.f32 %v845, %v847
        %v849 = vperm.slane %v649, 2
        %v850 = vmul.f32 %v808, %v849
        %v851 = vadd.f32 %v848, %v850
        %v852 = vperm.slane %v649, 3
        %v853 = vmul.f32 %v815, %v852
        %v854 = vadd.f32 %v851, %v853
        %v855 = vand.u32 2147483647, %v819
        %vm856 = vcmp.lt.f32.partialorder %v855, 1e-12
        %v857 = vsel %vm856, 1.0, %v819
        %v859 = vrot.slane %v819, 7
        %860 = vrot.lane.b32.xlu0 %v859, 1
        %v861 = vpop.permute.xlu0 %860
        %v863 = vsub.f32 %v819, %v861
        %v864 = vmul.f32 %v857, 2.0
        %v866 = vrot.slane %v864, 7
        %v868 = vrcp.pop %v866
        %v869 = vmul.f32 %v866, %v868
        %v870 = vsub.f32 1.0, %v869
        %v871 = vmul.f32 %v868, %v870
        %v872 = vadd.f32 %v868, %v871
        %vm873 = vweird.f32 %v866
        %vm874 = vweird.f32 %v868
        %vm875 = vmor %vm873, %vm874
        %v876 = vsel %vm875, %v868, %v872
        %v877 = vand.u32 2147483647, %v866
        %vm878 = vcmp.eq.f32.partialorder %v877, 8.507059e+37
        %v879 = vand.u32 %v866, 2147483648
        %v880 = vor.u32 1.1754944e-38, %v879
        %v881 = vsel %vm878, %v880, %v876
        %v882 = vmul.f32 %v863, %v881
        %vm883 = vcmp.ge.f32.partialorder %v882, 0.0
        %v884 = vsel %vm883, 1.0, -1.0
        %v885 = vand.u32 2147483647, %v882
        %v886 = vmul.f32 %v882, %v882
        %v887 = vadd.f32 %v886, 1.0
        %v888 = vrsqrt.pop %v887
        %v889 = vmul.f32 %v888, %v887
        %v890 = vmul.f32 %v889, %v888
        %v891 = vmul.f32 0.5, %v890
        %v892 = vsub.f32 1.5, %v891
        %v893 = vmul.f32 %v888, %v892
        %v894 = vmul.f32 %v887, %v893
        %vm895 = vcmp.eq.f32.partialorder %v887, inf
        %v896 = vsel %vm895, %v887, %v894
        %vm897 = vcmp.eq.f32.partialorder %v887, 0.0
        %v898 = vand.u32 %v887, 2147483648
        %v899 = vsel %vm897, %v898, %v896
        %v900 = vadd.f32 %v885, %v899
        %v901 = vrcp.pop %v900
        %v902 = vmul.f32 %v900, %v901
        %v903 = vsub.f32 1.0, %v902
        %v904 = vmul.f32 %v901, %v903
        %v905 = vadd.f32 %v901, %v904
        %vm906 = vweird.f32 %v900
        %vm907 = vweird.f32 %v901
        %vm908 = vmor %vm906, %vm907
        %v909 = vsel %vm908, %v901, %v905
        %v910 = vand.u32 2147483647, %v900
        %vm911 = vcmp.eq.f32.partialorder %v910, 8.507059e+37
        %v912 = vand.u32 %v900, 2147483648
        %v913 = vor.u32 1.1754944e-38, %v912
        %v914 = vsel %vm911, %v913, %v909
        %v915 = vmul.f32 %v884, %v914
        %v916 = vmul.f32 %v915, %v915
        %v917 = vadd.f32 %v916, 1.0
        %v918 = vrsqrt.pop %v917
        %v919 = vmul.f32 %v918, %v917
        %v920 = vmul.f32 %v919, %v918
        %v921 = vmul.f32 0.5, %v920
        %v922 = vsub.f32 1.5, %v921
        %v923 = vmul.f32 %v918, %v922
        %vm924 = vweird.f32 %v917
        %vm925 = vweird.f32 %v918
        %vm926 = vmor %vm924, %vm925
        %v927 = vsel %vm926, %v918, %v923
        %v928 = vmul.f32 %v915, %v927
        %v930 = vrot.slane %v927, 1
        %v932 = vsel %vm856, 1.0, %v930
        %v934 = vrot.slane %v928, 1
        %v936 = vsel %vm856, 0.0, %v934
        %vm937 = vmand %vm322, %vm528
        %v938 = vsel %vm937, 1, 0
        %v939 = vcvt.s32.f32 %v938
        %vm940 = vmand %vm527, %vm323
        %v941 = vsel %vm940, 1, 0
        %v942 = vcvt.s32.f32 %v941
        %v943 = vsub.f32 %v932, 1.0
        %v944 = vadd.f32 %v326, %v531
        %v946 = vrot.slane %v943, 1
        %947 = vrot.lane.b32.xlu0 %v946, 126
        %v948 = vpop.permute.xlu0 %947
        %s949 = vtos %v948
        %v950 = vstv %s949
        %v952 = vmul.f32 %v950, %v944
        %v953 = vadd.f32 %v23, %v952
        %v955 = vrot.slane %v936, 1
        %956 = vrot.lane.b32.xlu0 %v955, 126
        %v957 = vpop.permute.xlu0 %956
        %s958 = vtos %v957
        %v959 = vstv %s958
        %v961 = vmul.f32 %v959, %v939
        %v962 = vadd.f32 %v953, %v961
        %v963 = vmul.f32 %v959, %v942
        %v964 = vsub.f32 %v962, %v963
        %v965 = vsub.f32 %v953, %v961
        %v966 = vadd.f32 %v965, %v963
        %967 = vset.pattern.permute.xlu0 0
        %968 = vperm.xlu0 %967, %v819
        %v969 = vpop.permute.xlu0 %968
        %v971 = vperm.slane %v964, 0
        %v972 = vmul.f32 %v969, %v971
        %973 = vset.pattern.permute.xlu0 1
        %974 = vperm.xlu0 %973, %v819
        %v975 = vpop.permute.xlu0 %974
        %v977 = vperm.slane %v964, 1
        %v978 = vmul.f32 %v975, %v977
        %v979 = vadd.f32 %v972, %v978
        %980 = vset.pattern.permute.xlu0 2
        %981 = vperm.xlu0 %980, %v819
        %v982 = vpop.permute.xlu0 %981
        %v984 = vperm.slane %v964, 2
        %v985 = vmul.f32 %v982, %v984
        %v986 = vadd.f32 %v979, %v985
        %987 = vset.pattern.permute.xlu0 3
        %988 = vperm.xlu0 %987, %v819
        %v989 = vpop.permute.xlu0 %988
        %v991 = vperm.slane %v964, 3
        %v992 = vmul.f32 %v989, %v991
        %v993 = vadd.f32 %v986, %v992
        %995 = vset.pattern.permute.xlu0 0
        %996 = vperm.xlu0 %995, %v966
        %v997 = vpop.permute.xlu0 %996
        %v999 = vperm.slane %v993, 0
        %v1000 = vmul.f32 %v997, %v999
        %1001 = vset.pattern.permute.xlu0 1
        %1002 = vperm.xlu0 %1001, %v966
        %v1003 = vpop.permute.xlu0 %1002
        %v1005 = vperm.slane %v993, 1
        %v1006 = vmul.f32 %v1003, %v1005
        %v1007 = vadd.f32 %v1000, %v1006
        %1008 = vset.pattern.permute.xlu0 2
        %1009 = vperm.xlu0 %1008, %v966
        %v1010 = vpop.permute.xlu0 %1009
        %v1012 = vperm.slane %v993, 2
        %v1013 = vmul.f32 %v1010, %v1012
        %v1014 = vadd.f32 %v1007, %v1013
        %1015 = vset.pattern.permute.xlu0 3
        %1016 = vperm.xlu0 %1015, %v966
        %v1017 = vpop.permute.xlu0 %1016
        %v1019 = vperm.slane %v993, 3
        %v1020 = vmul.f32 %v1017, %v1019
        %v1021 = vadd.f32 %v1014, %v1020
        %1023 = vset.pattern.permute.xlu0 0
        %1024 = vperm.xlu0 %1023, %v843
        %v1025 = vpop.permute.xlu0 %1024
        %v1027 = vmul.f32 %v1025, %v971
        %1028 = vset.pattern.permute.xlu0 1
        %1029 = vperm.xlu0 %1028, %v843
        %v1030 = vpop.permute.xlu0 %1029
        %v1032 = vmul.f32 %v1030, %v977
        %v1033 = vadd.f32 %v1027, %v1032
        %1034 = vset.pattern.permute.xlu0 2
        %1035 = vperm.xlu0 %1034, %v843
        %v1036 = vpop.permute.xlu0 %1035
        %v1038 = vmul.f32 %v1036, %v984
        %v1039 = vadd.f32 %v1033, %v1038
        %1040 = vset.pattern.permute.xlu0 3
        %1041 = vperm.xlu0 %1040, %v843
        %v1042 = vpop.permute.xlu0 %1041
        %v1044 = vmul.f32 %v1042, %v991
        %v1045 = vadd.f32 %v1039, %v1044
        %v1046 = vperm.slane %v854, 0
        %v1047 = vmul.f32 %v997, %v1046
        %v1048 = vperm.slane %v854, 1
        %v1049 = vmul.f32 %v1003, %v1048
        %v1050 = vadd.f32 %v1047, %v1049
        %v1051 = vperm.slane %v854, 2
        %v1052 = vmul.f32 %v1010, %v1051
        %v1053 = vadd.f32 %v1050, %v1052
        %v1054 = vperm.slane %v854, 3
        %v1055 = vmul.f32 %v1017, %v1054
        %v1056 = vadd.f32 %v1053, %v1055
        %v1057 = vand.u32 2147483647, %v1021
        %vm1058 = vcmp.lt.f32.partialorder %v1057, 1e-12
        %v1059 = vsel %vm1058, 1.0, %v1021
        %v1061 = vrot.slane %v1021, 6
        %1062 = vrot.lane.b32.xlu0 %v1061, 2
        %v1063 = vpop.permute.xlu0 %1062
        %v1065 = vsub.f32 %v1021, %v1063
        %v1066 = vmul.f32 %v1059, 2.0
        %v1068 = vrot.slane %v1066, 6
        %v1070 = vrcp.pop %v1068
        %v1071 = vmul.f32 %v1068, %v1070
        %v1072 = vsub.f32 1.0, %v1071
        %v1073 = vmul.f32 %v1070, %v1072
        %v1074 = vadd.f32 %v1070, %v1073
        %vm1075 = vweird.f32 %v1068
        %vm1076 = vweird.f32 %v1070
        %vm1077 = vmor %vm1075, %vm1076
        %v1078 = vsel %vm1077, %v1070, %v1074
        %v1079 = vand.u32 2147483647, %v1068
        %vm1080 = vcmp.eq.f32.partialorder %v1079, 8.507059e+37
        %v1081 = vand.u32 %v1068, 2147483648
        %v1082 = vor.u32 1.1754944e-38, %v1081
        %v1083 = vsel %vm1080, %v1082, %v1078
        %v1084 = vmul.f32 %v1065, %v1083
        %vm1085 = vcmp.ge.f32.partialorder %v1084, 0.0
        %v1086 = vsel %vm1085, 1.0, -1.0
        %v1087 = vand.u32 2147483647, %v1084
        %v1088 = vmul.f32 %v1084, %v1084
        %v1089 = vadd.f32 %v1088, 1.0
        %v1090 = vrsqrt.pop %v1089
        %v1091 = vmul.f32 %v1090, %v1089
        %v1092 = vmul.f32 %v1091, %v1090
        %v1093 = vmul.f32 0.5, %v1092
        %v1094 = vsub.f32 1.5, %v1093
        %v1095 = vmul.f32 %v1090, %v1094
        %v1096 = vmul.f32 %v1089, %v1095
        %vm1097 = vcmp.eq.f32.partialorder %v1089, inf
        %v1098 = vsel %vm1097, %v1089, %v1096
        %vm1099 = vcmp.eq.f32.partialorder %v1089, 0.0
        %v1100 = vand.u32 %v1089, 2147483648
        %v1101 = vsel %vm1099, %v1100, %v1098
        %v1102 = vadd.f32 %v1087, %v1101
        %v1103 = vrcp.pop %v1102
        %v1104 = vmul.f32 %v1102, %v1103
        %v1105 = vsub.f32 1.0, %v1104
        %v1106 = vmul.f32 %v1103, %v1105
        %v1107 = vadd.f32 %v1103, %v1106
        %vm1108 = vweird.f32 %v1102
        %vm1109 = vweird.f32 %v1103
        %vm1110 = vmor %vm1108, %vm1109
        %v1111 = vsel %vm1110, %v1103, %v1107
        %v1112 = vand.u32 2147483647, %v1102
        %vm1113 = vcmp.eq.f32.partialorder %v1112, 8.507059e+37
        %v1114 = vand.u32 %v1102, 2147483648
        %v1115 = vor.u32 1.1754944e-38, %v1114
        %v1116 = vsel %vm1113, %v1115, %v1111
        %v1117 = vmul.f32 %v1086, %v1116
        %v1118 = vmul.f32 %v1117, %v1117
        %v1119 = vadd.f32 %v1118, 1.0
        %v1120 = vrsqrt.pop %v1119
        %v1121 = vmul.f32 %v1120, %v1119
        %v1122 = vmul.f32 %v1121, %v1120
        %v1123 = vmul.f32 0.5, %v1122
        %v1124 = vsub.f32 1.5, %v1123
        %v1125 = vmul.f32 %v1120, %v1124
        %vm1126 = vweird.f32 %v1119
        %vm1127 = vweird.f32 %v1120
        %vm1128 = vmor %vm1126, %vm1127
        %v1129 = vsel %vm1128, %v1120, %v1125
        %v1130 = vmul.f32 %v1117, %v1129
        %v1132 = vrot.slane %v1129, 2
        %v1134 = vsel %vm1058, 1.0, %v1132
        %v1136 = vrot.slane %v1130, 2
        %v1138 = vsel %vm1058, 0.0, %v1136
        %vm1139 = vmand %vm322, %vm733
        %v1140 = vsel %vm1139, 1, 0
        %v1141 = vcvt.s32.f32 %v1140
        %vm1142 = vmand %vm732, %vm323
        %v1143 = vsel %vm1142, 1, 0
        %v1144 = vcvt.s32.f32 %v1143
        %v1145 = vsub.f32 %v1134, 1.0
        %v1146 = vadd.f32 %v326, %v736
        %v1148 = vrot.slane %v1145, 1
        %1149 = vrot.lane.b32.xlu0 %v1148, 125
        %v1150 = vpop.permute.xlu0 %1149
        %s1151 = vtos %v1150
        %v1152 = vstv %s1151
        %v1154 = vmul.f32 %v1152, %v1146
        %v1155 = vadd.f32 %v23, %v1154
        %v1157 = vrot.slane %v1138, 1
        %1158 = vrot.lane.b32.xlu0 %v1157, 125
        %v1159 = vpop.permute.xlu0 %1158
        %s1160 = vtos %v1159
        %v1161 = vstv %s1160
        %v1163 = vmul.f32 %v1161, %v1141
        %v1164 = vadd.f32 %v1155, %v1163
        %v1165 = vmul.f32 %v1161, %v1144
        %v1166 = vsub.f32 %v1164, %v1165
        %v1167 = vsub.f32 %v1155, %v1163
        %v1168 = vadd.f32 %v1167, %v1165
        %1169 = vset.pattern.permute.xlu0 0
        %1170 = vperm.xlu0 %1169, %v1021
        %v1171 = vpop.permute.xlu0 %1170
        %v1173 = vperm.slane %v1166, 0
        %v1174 = vmul.f32 %v1171, %v1173
        %1175 = vset.pattern.permute.xlu0 1
        %1176 = vperm.xlu0 %1175, %v1021
        %v1177 = vpop.permute.xlu0 %1176
        %v1179 = vperm.slane %v1166, 1
        %v1180 = vmul.f32 %v1177, %v1179
        %v1181 = vadd.f32 %v1174, %v1180
        %1182 = vset.pattern.permute.xlu0 2
        %1183 = vperm.xlu0 %1182, %v1021
        %v1184 = vpop.permute.xlu0 %1183
        %v1186 = vperm.slane %v1166, 2
        %v1187 = vmul.f32 %v1184, %v1186
        %v1188 = vadd.f32 %v1181, %v1187
        %1189 = vset.pattern.permute.xlu0 3
        %1190 = vperm.xlu0 %1189, %v1021
        %v1191 = vpop.permute.xlu0 %1190
        %v1193 = vperm.slane %v1166, 3
        %v1194 = vmul.f32 %v1191, %v1193
        %v1195 = vadd.f32 %v1188, %v1194
        %1197 = vset.pattern.permute.xlu0 0
        %1198 = vperm.xlu0 %1197, %v1168
        %v1199 = vpop.permute.xlu0 %1198
        %v1201 = vperm.slane %v1195, 0
        %v1202 = vmul.f32 %v1199, %v1201
        %1203 = vset.pattern.permute.xlu0 1
        %1204 = vperm.xlu0 %1203, %v1168
        %v1205 = vpop.permute.xlu0 %1204
        %v1207 = vperm.slane %v1195, 1
        %v1208 = vmul.f32 %v1205, %v1207
        %v1209 = vadd.f32 %v1202, %v1208
        %1210 = vset.pattern.permute.xlu0 2
        %1211 = vperm.xlu0 %1210, %v1168
        %v1212 = vpop.permute.xlu0 %1211
        %v1214 = vperm.slane %v1195, 2
        %v1215 = vmul.f32 %v1212, %v1214
        %v1216 = vadd.f32 %v1209, %v1215
        %1217 = vset.pattern.permute.xlu0 3
        %1218 = vperm.xlu0 %1217, %v1168
        %v1219 = vpop.permute.xlu0 %1218
        %v1221 = vperm.slane %v1195, 3
        %v1222 = vmul.f32 %v1219, %v1221
        %v1223 = vadd.f32 %v1216, %v1222
        %1225 = vset.pattern.permute.xlu0 0
        %1226 = vperm.xlu0 %1225, %v1045
        %v1227 = vpop.permute.xlu0 %1226
        %v1229 = vmul.f32 %v1227, %v1173
        %1230 = vset.pattern.permute.xlu0 1
        %1231 = vperm.xlu0 %1230, %v1045
        %v1232 = vpop.permute.xlu0 %1231
        %v1234 = vmul.f32 %v1232, %v1179
        %v1235 = vadd.f32 %v1229, %v1234
        %1236 = vset.pattern.permute.xlu0 2
        %1237 = vperm.xlu0 %1236, %v1045
        %v1238 = vpop.permute.xlu0 %1237
        %v1240 = vmul.f32 %v1238, %v1186
        %v1241 = vadd.f32 %v1235, %v1240
        %1242 = vset.pattern.permute.xlu0 3
        %1243 = vperm.xlu0 %1242, %v1045
        %v1244 = vpop.permute.xlu0 %1243
        %v1246 = vmul.f32 %v1244, %v1193
        %v1247 = vadd.f32 %v1241, %v1246
        %v1248 = vperm.slane %v1056, 0
        %v1249 = vmul.f32 %v1199, %v1248
        %v1250 = vperm.slane %v1056, 1
        %v1251 = vmul.f32 %v1205, %v1250
        %v1252 = vadd.f32 %v1249, %v1251
        %v1253 = vperm.slane %v1056, 2
        %v1254 = vmul.f32 %v1212, %v1253
        %v1255 = vadd.f32 %v1252, %v1254
        %v1256 = vperm.slane %v1056, 3
        %v1257 = vmul.f32 %v1219, %v1256
        %v1258 = vadd.f32 %v1255, %v1257
        %v1259 = vand.u32 2147483647, %v1223
        %vm1260 = vcmp.lt.f32.partialorder %v1259, 1e-12
        %v1261 = vsel %vm1260, 1.0, %v1223
        %v1263 = vrot.slane %v1223, 7
        %1264 = vrot.lane.b32.xlu0 %v1263, 1
        %v1265 = vpop.permute.xlu0 %1264
        %v1267 = vsub.f32 %v1223, %v1265
        %v1268 = vmul.f32 %v1261, 2.0
        %v1270 = vrot.slane %v1268, 7
        %v1272 = vrcp.pop %v1270
        %v1273 = vmul.f32 %v1270, %v1272
        %v1274 = vsub.f32 1.0, %v1273
        %v1275 = vmul.f32 %v1272, %v1274
        %v1276 = vadd.f32 %v1272, %v1275
        %vm1277 = vweird.f32 %v1270
        %vm1278 = vweird.f32 %v1272
        %vm1279 = vmor %vm1277, %vm1278
        %v1280 = vsel %vm1279, %v1272, %v1276
        %v1281 = vand.u32 2147483647, %v1270
        %vm1282 = vcmp.eq.f32.partialorder %v1281, 8.507059e+37
        %v1283 = vand.u32 %v1270, 2147483648
        %v1284 = vor.u32 1.1754944e-38, %v1283
        %v1285 = vsel %vm1282, %v1284, %v1280
        %v1286 = vmul.f32 %v1267, %v1285
        %vm1287 = vcmp.ge.f32.partialorder %v1286, 0.0
        %v1288 = vsel %vm1287, 1.0, -1.0
        %v1289 = vand.u32 2147483647, %v1286
        %v1290 = vmul.f32 %v1286, %v1286
        %v1291 = vadd.f32 %v1290, 1.0
        %v1292 = vrsqrt.pop %v1291
        %v1293 = vmul.f32 %v1292, %v1291
        %v1294 = vmul.f32 %v1293, %v1292
        %v1295 = vmul.f32 0.5, %v1294
        %v1296 = vsub.f32 1.5, %v1295
        %v1297 = vmul.f32 %v1292, %v1296
        %v1298 = vmul.f32 %v1291, %v1297
        %vm1299 = vcmp.eq.f32.partialorder %v1291, inf
        %v1300 = vsel %vm1299, %v1291, %v1298
        %vm1301 = vcmp.eq.f32.partialorder %v1291, 0.0
        %v1302 = vand.u32 %v1291, 2147483648
        %v1303 = vsel %vm1301, %v1302, %v1300
        %v1304 = vadd.f32 %v1289, %v1303
        %v1305 = vrcp.pop %v1304
        %v1306 = vmul.f32 %v1304, %v1305
        %v1307 = vsub.f32 1.0, %v1306
        %v1308 = vmul.f32 %v1305, %v1307
        %v1309 = vadd.f32 %v1305, %v1308
        %vm1310 = vweird.f32 %v1304
        %vm1311 = vweird.f32 %v1305
        %vm1312 = vmor %vm1310, %vm1311
        %v1313 = vsel %vm1312, %v1305, %v1309
        %v1314 = vand.u32 2147483647, %v1304
        %vm1315 = vcmp.eq.f32.partialorder %v1314, 8.507059e+37
        %v1316 = vand.u32 %v1304, 2147483648
        %v1317 = vor.u32 1.1754944e-38, %v1316
        %v1318 = vsel %vm1315, %v1317, %v1313
        %v1319 = vmul.f32 %v1288, %v1318
        %v1320 = vmul.f32 %v1319, %v1319
        %v1321 = vadd.f32 %v1320, 1.0
        %v1322 = vrsqrt.pop %v1321
        %v1323 = vmul.f32 %v1322, %v1321
        %v1324 = vmul.f32 %v1323, %v1322
        %v1325 = vmul.f32 0.5, %v1324
        %v1326 = vsub.f32 1.5, %v1325
        %v1327 = vmul.f32 %v1322, %v1326
        %vm1328 = vweird.f32 %v1321
        %vm1329 = vweird.f32 %v1322
        %vm1330 = vmor %vm1328, %vm1329
        %v1331 = vsel %vm1330, %v1322, %v1327
        %v1332 = vmul.f32 %v1319, %v1331
        %v1334 = vrot.slane %v1331, 1
        %v1336 = vsel %vm1260, 1.0, %v1334
        %v1338 = vrot.slane %v1332, 1
        %v1340 = vsel %vm1260, 0.0, %v1338
        %vm1341 = vmand %vm527, %vm733
        %v1342 = vsel %vm1341, 1, 0
        %v1343 = vcvt.s32.f32 %v1342
        %vm1344 = vmand %vm732, %vm528
        %v1345 = vsel %vm1344, 1, 0
        %v1346 = vcvt.s32.f32 %v1345
        %v1347 = vsub.f32 %v1336, 1.0
        %v1348 = vadd.f32 %v531, %v736
        %v1350 = vrot.slane %v1347, 2
        %1351 = vrot.lane.b32.xlu0 %v1350, 125
        %v1352 = vpop.permute.xlu0 %1351
        %s1353 = vtos %v1352
        %v1354 = vstv %s1353
        %v1356 = vmul.f32 %v1354, %v1348
        %v1357 = vadd.f32 %v23, %v1356
        %v1359 = vrot.slane %v1340, 2
        %1360 = vrot.lane.b32.xlu0 %v1359, 125
        %v1361 = vpop.permute.xlu0 %1360
        %s1362 = vtos %v1361
        %v1363 = vstv %s1362
        %v1365 = vmul.f32 %v1363, %v1343
        %v1366 = vadd.f32 %v1357, %v1365
        %v1367 = vmul.f32 %v1363, %v1346
        %v1368 = vsub.f32 %v1366, %v1367
        %v1369 = vsub.f32 %v1357, %v1365
        %v1370 = vadd.f32 %v1369, %v1367
        %1371 = vset.pattern.permute.xlu0 0
        %1372 = vperm.xlu0 %1371, %v1223
        %v1373 = vpop.permute.xlu0 %1372
        %v1375 = vperm.slane %v1368, 0
        %v1376 = vmul.f32 %v1373, %v1375
        %1377 = vset.pattern.permute.xlu0 1
        %1378 = vperm.xlu0 %1377, %v1223
        %v1379 = vpop.permute.xlu0 %1378
        %v1381 = vperm.slane %v1368, 1
        %v1382 = vmul.f32 %v1379, %v1381
        %v1383 = vadd.f32 %v1376, %v1382
        %1384 = vset.pattern.permute.xlu0 2
        %1385 = vperm.xlu0 %1384, %v1223
        %v1386 = vpop.permute.xlu0 %1385
        %v1388 = vperm.slane %v1368, 2
        %v1389 = vmul.f32 %v1386, %v1388
        %v1390 = vadd.f32 %v1383, %v1389
        %1391 = vset.pattern.permute.xlu0 3
        %1392 = vperm.xlu0 %1391, %v1223
        %v1393 = vpop.permute.xlu0 %1392
        %v1395 = vperm.slane %v1368, 3
        %v1396 = vmul.f32 %v1393, %v1395
        %v1397 = vadd.f32 %v1390, %v1396
        %1399 = vset.pattern.permute.xlu0 0
        %1400 = vperm.xlu0 %1399, %v1370
        %v1401 = vpop.permute.xlu0 %1400
        %v1403 = vperm.slane %v1397, 0
        %v1404 = vmul.f32 %v1401, %v1403
        %1405 = vset.pattern.permute.xlu0 1
        %1406 = vperm.xlu0 %1405, %v1370
        %v1407 = vpop.permute.xlu0 %1406
        %v1409 = vperm.slane %v1397, 1
        %v1410 = vmul.f32 %v1407, %v1409
        %v1411 = vadd.f32 %v1404, %v1410
        %1412 = vset.pattern.permute.xlu0 2
        %1413 = vperm.xlu0 %1412, %v1370
        %v1414 = vpop.permute.xlu0 %1413
        %v1416 = vperm.slane %v1397, 2
        %v1417 = vmul.f32 %v1414, %v1416
        %v1418 = vadd.f32 %v1411, %v1417
        %1419 = vset.pattern.permute.xlu0 3
        %1420 = vperm.xlu0 %1419, %v1370
        %v1421 = vpop.permute.xlu0 %1420
        %v1423 = vperm.slane %v1397, 3
        %v1424 = vmul.f32 %v1421, %v1423
        %v1425 = vadd.f32 %v1418, %v1424
        %1427 = vset.pattern.permute.xlu0 0
        %1428 = vperm.xlu0 %1427, %v1247
        %v1429 = vpop.permute.xlu0 %1428
        %v1431 = vmul.f32 %v1429, %v1375
        %1432 = vset.pattern.permute.xlu0 1
        %1433 = vperm.xlu0 %1432, %v1247
        %v1434 = vpop.permute.xlu0 %1433
        %v1436 = vmul.f32 %v1434, %v1381
        %v1437 = vadd.f32 %v1431, %v1436
        %1438 = vset.pattern.permute.xlu0 2
        %1439 = vperm.xlu0 %1438, %v1247
        %v1440 = vpop.permute.xlu0 %1439
        %v1442 = vmul.f32 %v1440, %v1388
        %v1443 = vadd.f32 %v1437, %v1442
        %1444 = vset.pattern.permute.xlu0 3
        %1445 = vperm.xlu0 %1444, %v1247
        %v1446 = vpop.permute.xlu0 %1445
        %v1448 = vmul.f32 %v1446, %v1395
        %v1449 = vadd.f32 %v1443, %v1448
        %v1450 = vperm.slane %v1258, 0
        %v1451 = vmul.f32 %v1401, %v1450
        %v1452 = vperm.slane %v1258, 1
        %v1453 = vmul.f32 %v1407, %v1452
        %v1454 = vadd.f32 %v1451, %v1453
        %v1455 = vperm.slane %v1258, 2
        %v1456 = vmul.f32 %v1414, %v1455
        %v1457 = vadd.f32 %v1454, %v1456
        %v1458 = vperm.slane %v1258, 3
        %v1459 = vmul.f32 %v1421, %v1458
        %v1460 = vadd.f32 %v1457, %v1459
      $region25: #{hf_energy.1} parent=17 // loop_footer
        %s231 = sadd.s32 1, %s227
      $region26: #{hf_energy.1} parent=17 // loop_footer_branch
        %226 = sbr.rel target = $region22
      $region27: #{hf_energy.1} parent=17 // loop_exit
        _
      %vm1461 = vcmp.eq.s32.totalorder %v20, 0
      %v1462 = vsel %vm1461, 1, 0
      %v1463 = vcvt.s32.f32 %v1462
      %1465 = vset.pattern.permute.xlu0 0
      %1466 = vperm.xlu0 %1465, %v232
      %v1467 = vpop.permute.xlu0 %1466
      %v1469 = vmul.f32 %v1467, %v1463
      %vm1470 = vcmp.eq.s32.totalorder %v20, 1
      %v1471 = vsel %vm1470, 1, 0
      %v1472 = vcvt.s32.f32 %v1471
      %1473 = vset.pattern.permute.xlu0 1
      %1474 = vperm.xlu0 %1473, %v232
      %v1475 = vpop.permute.xlu0 %1474
      %v1477 = vmul.f32 %v1475, %v1472
      %v1479 = vrot.slane %v1477, 1
      %v1481 = vadd.f32 %v1469, %v1479
      %vm1482 = vcmp.eq.s32.totalorder %v20, 2
      %v1483 = vsel %vm1482, 1, 0
      %v1484 = vcvt.s32.f32 %v1483
      %1485 = vset.pattern.permute.xlu0 2
      %1486 = vperm.xlu0 %1485, %v232
      %v1487 = vpop.permute.xlu0 %1486
      %v1489 = vmul.f32 %v1487, %v1484
      %v1491 = vrot.slane %v1489, 2
      %v1493 = vadd.f32 %v1481, %v1491
      %vm1494 = vcmp.eq.s32.totalorder %v20, 3
      %v1495 = vsel %vm1494, 1, 0
      %v1496 = vcvt.s32.f32 %v1495
      %1497 = vset.pattern.permute.xlu0 3
      %1498 = vperm.xlu0 %1497, %v232
      %v1499 = vpop.permute.xlu0 %1498
      %v1501 = vmul.f32 %v1499, %v1496
      %v1503 = vrot.slane %v1501, 3
      %v1505 = vadd.f32 %v1493, %v1503
      %vm1506 = vcmp.lt.f32.partialorder %v1467, %v1505
      %v1507 = vsel %vm1506, 1, 0
      %v1508 = vcvt.s32.f32 %v1507
      %v1509 = vadd.f32 %v1508, 0.0
      %vm1510 = vcmp.eq.f32.partialorder %v1467, %v1505
      %vm1511 = vcmp.gt.s32.totalorder %v20, 0
      %vm1512 = vmand %vm1510, %vm1511
      %v1513 = vsel %vm1512, 1, 0
      %v1514 = vcvt.s32.f32 %v1513
      %v1515 = vadd.f32 %v1509, %v1514
      %v1517 = vrot.slane %v1505, 7
      %vm1519 = vcmp.lt.f32.partialorder %v1475, %v1517
      %v1520 = vsel %vm1519, 1, 0
      %v1521 = vcvt.s32.f32 %v1520
      %v1523 = vrot.slane %v1521, 1
      %v1525 = vadd.f32 %v1515, %v1523
      %vm1526 = vcmp.eq.f32.partialorder %v1475, %v1517
      %vm1527 = vcmp.gt.s32.totalorder %v20, 1
      %vm1528 = vmand %vm1526, %vm1527
      %v1529 = vsel %vm1528, 1, 0
      %v1530 = vcvt.s32.f32 %v1529
      %v1532 = vrot.slane %v1530, 1
      %v1534 = vadd.f32 %v1525, %v1532
      %v1535 = vrot.slane %v1505, 6
      %vm1537 = vcmp.lt.f32.partialorder %v1487, %v1535
      %v1538 = vsel %vm1537, 1, 0
      %v1539 = vcvt.s32.f32 %v1538
      %v1541 = vrot.slane %v1539, 2
      %v1543 = vadd.f32 %v1534, %v1541
      %vm1544 = vcmp.eq.f32.partialorder %v1487, %v1535
      %vm1545 = vcmp.gt.s32.totalorder %v20, 2
      %vm1546 = vmand %vm1544, %vm1545
      %v1547 = vsel %vm1546, 1, 0
      %v1548 = vcvt.s32.f32 %v1547
      %v1550 = vrot.slane %v1548, 2
      %v1552 = vadd.f32 %v1543, %v1550
      %v1553 = vrot.slane %v1505, 5
      %vm1555 = vcmp.lt.f32.partialorder %v1499, %v1553
      %v1556 = vsel %vm1555, 1, 0
      %v1557 = vcvt.s32.f32 %v1556
      %v1559 = vrot.slane %v1557, 3
      %v1561 = vadd.f32 %v1552, %v1559
      %vm1562 = vcmp.eq.f32.partialorder %v1499, %v1553
      %vm1563 = vcmp.gt.s32.totalorder %v20, 3
      %vm1564 = vmand %vm1562, %vm1563
      %v1565 = vsel %vm1564, 1, 0
      %v1566 = vcvt.s32.f32 %v1565
      %v1568 = vrot.slane %v1566, 3
      %v1570 = vadd.f32 %v1561, %v1568
      %vm1571 = vcmp.lt.f32.partialorder %v1570, 1.0
      %v1572 = vsel %vm1571, 1, 0
      %v1573 = vcvt.s32.f32 %v1572
      %v1574 = vmul.f32 %v1573, 2.0
      %v1575 = vperm.slane %v233, 0
      %v1576 = vmul.f32 %v201, %v1575
      %v1577 = vperm.slane %v233, 1
      %v1578 = vmul.f32 %v207, %v1577
      %v1579 = vadd.f32 %v1576, %v1578
      %v1580 = vperm.slane %v233, 2
      %v1581 = vmul.f32 %v214, %v1580
      %v1582 = vadd.f32 %v1579, %v1581
      %v1583 = vperm.slane %v233, 3
      %v1584 = vmul.f32 %v221, %v1583
      %v1585 = vadd.f32 %v1582, %v1584
      %1587 = vset.pattern.permute.xlu0 0
      %1588 = vperm.xlu0 %1587, %v234
      %v1589 = vpop.permute.xlu0 %1588
      %v1591 = vmul.f32 %v1589, %v175
      %1592 = vset.pattern.permute.xlu0 1
      %1593 = vperm.xlu0 %1592, %v234
      %v1594 = vpop.permute.xlu0 %1593
      %v1596 = vmul.f32 %v1594, %v181
      %v1597 = vadd.f32 %v1591, %v1596
      %1598 = vset.pattern.permute.xlu0 2
      %1599 = vperm.xlu0 %1598, %v234
      %v1600 = vpop.permute.xlu0 %1599
      %v1602 = vmul.f32 %v1600, %v188
      %v1603 = vadd.f32 %v1597, %v1602
      %1604 = vset.pattern.permute.xlu0 3
      %1605 = vperm.xlu0 %1604, %v234
      %v1606 = vpop.permute.xlu0 %1605
      %v1608 = vmul.f32 %v1606, %v195
      %v1609 = vadd.f32 %v1603, %v1608
      %v1610 = vperm.slane %v1574, 0
      %v1611 = vmul.f32 %v1585, %v1610
      %1613 = vset.pattern.permute.xlu0 0
      %1614 = vperm.xlu0 %1613, %v1611
      %v1615 = vpop.permute.xlu0 %1614
      %v1617 = vperm.slane %v1609, 0
      %v1618 = vmul.f32 %v1615, %v1617
      %1619 = vset.pattern.permute.xlu0 1
      %1620 = vperm.xlu0 %1619, %v1611
      %v1621 = vpop.permute.xlu0 %1620
      %v1623 = vperm.slane %v1609, 1
      %v1624 = vmul.f32 %v1621, %v1623
      %v1625 = vadd.f32 %v1618, %v1624
      %1626 = vset.pattern.permute.xlu0 2
      %1627 = vperm.xlu0 %1626, %v1611
      %v1628 = vpop.permute.xlu0 %1627
      %v1630 = vperm.slane %v1609, 2
      %v1631 = vmul.f32 %v1628, %v1630
      %v1632 = vadd.f32 %v1625, %v1631
      %1633 = vset.pattern.permute.xlu0 3
      %1634 = vperm.xlu0 %1633, %v1611
      %v1635 = vpop.permute.xlu0 %1634
      %v1637 = vperm.slane %v1609, 3
      %v1638 = vmul.f32 %v1635, %v1637
      %v1639 = vadd.f32 %v1632, %v1638
    $region18: #{hf_energy.1} parent=1 // loop_footer
      %s29 = sadd.s32 1, %s25
    $region19: #{hf_energy.1} parent=1 // loop_footer_branch
      %24 = sbr.rel target = $region15
    $region20: #{hf_energy.1} parent=1 // loop_exit
      _
    %v1640 = vld [vmem:[%s0] sm:$0xf]
    %s1642 = vtos %v30
    %v1643 = vstv %s1642
    %v1645 = vmul.f32 %v1643, %v1640
    %s1646 = scalar_lea.vmem %s0, 4
    %v1647 = vld [vmem:[%s1646] sm:$0xf]
    %1648 = vrot.lane.b32.xlu0 %v30, 127
    %v1649 = vpop.permute.xlu0 %1648
    %s1650 = vtos %v1649
    %v1651 = vstv %s1650
    %v1653 = vmul.f32 %v1651, %v1647
    %v1654 = vadd.f32 %v1645, %v1653
    %s1655 = scalar_lea.vmem %s0, 8
    %v1656 = vld [vmem:[%s1655] sm:$0xf]
    %1657 = vrot.lane.b32.xlu0 %v30, 126
    %v1658 = vpop.permute.xlu0 %1657
    %s1659 = vtos %v1658
    %v1660 = vstv %s1659
    %v1662 = vmul.f32 %v1660, %v1656
    %v1663 = vadd.f32 %v1654, %v1662
    %s1664 = scalar_lea.vmem %s0, 12
    %v1665 = vld [vmem:[%s1664] sm:$0xf]
    %1666 = vrot.lane.b32.xlu0 %v30, 125
    %v1667 = vpop.permute.xlu0 %1666
    %s1668 = vtos %v1667
    %v1669 = vstv %s1668
    %v1671 = vmul.f32 %v1669, %v1665
    %v1672 = vadd.f32 %v1663, %v1671
    %s1673 = scalar_lea.vmem %s0, 16
    %v1674 = vld [vmem:[%s1673] sm:$0xf]
    %v1675 = vrot.slane %v30, 1
    %s1676 = vtos %v1675
    %v1677 = vstv %s1676
    %v1679 = vmul.f32 %v1677, %v1674
    %v1680 = vadd.f32 %v1672, %v1679
    %s1681 = scalar_lea.vmem %s0, 20
    %v1682 = vld [vmem:[%s1681] sm:$0xf]
    %1683 = vrot.lane.b32.xlu0 %v1675, 127
    %v1684 = vpop.permute.xlu0 %1683
    %s1685 = vtos %v1684
    %v1686 = vstv %s1685
    %v1688 = vmul.f32 %v1686, %v1682
    %v1689 = vadd.f32 %v1680, %v1688
    %s1690 = scalar_lea.vmem %s0, 24
    %v1691 = vld [vmem:[%s1690] sm:$0xf]
    %1692 = vrot.lane.b32.xlu0 %v1675, 126
    %v1693 = vpop.permute.xlu0 %1692
    %s1694 = vtos %v1693
    %v1695 = vstv %s1694
    %v1697 = vmul.f32 %v1695, %v1691
    %v1698 = vadd.f32 %v1689, %v1697
    %s1699 = scalar_lea.vmem %s0, 28
    %v1700 = vld [vmem:[%s1699] sm:$0xf]
    %1701 = vrot.lane.b32.xlu0 %v1675, 125
    %v1702 = vpop.permute.xlu0 %1701
    %s1703 = vtos %v1702
    %v1704 = vstv %s1703
    %v1706 = vmul.f32 %v1704, %v1700
    %v1707 = vadd.f32 %v1698, %v1706
    %s1708 = scalar_lea.vmem %s0, 32
    %v1709 = vld [vmem:[%s1708] sm:$0xf]
    %v1710 = vrot.slane %v30, 2
    %s1711 = vtos %v1710
    %v1712 = vstv %s1711
    %v1714 = vmul.f32 %v1712, %v1709
    %v1715 = vadd.f32 %v1707, %v1714
    %s1716 = scalar_lea.vmem %s0, 36
    %v1717 = vld [vmem:[%s1716] sm:$0xf]
    %1718 = vrot.lane.b32.xlu0 %v1710, 127
    %v1719 = vpop.permute.xlu0 %1718
    %s1720 = vtos %v1719
    %v1721 = vstv %s1720
    %v1723 = vmul.f32 %v1721, %v1717
    %v1724 = vadd.f32 %v1715, %v1723
    %s1725 = scalar_lea.vmem %s0, 40
    %v1726 = vld [vmem:[%s1725] sm:$0xf]
    %1727 = vrot.lane.b32.xlu0 %v1710, 126
    %v1728 = vpop.permute.xlu0 %1727
    %s1729 = vtos %v1728
    %v1730 = vstv %s1729
    %v1732 = vmul.f32 %v1730, %v1726
    %v1733 = vadd.f32 %v1724, %v1732
    %s1734 = scalar_lea.vmem %s0, 44
    %v1735 = vld [vmem:[%s1734] sm:$0xf]
    %1736 = vrot.lane.b32.xlu0 %v1710, 125
    %v1737 = vpop.permute.xlu0 %1736
    %s1738 = vtos %v1737
    %v1739 = vstv %s1738
    %v1741 = vmul.f32 %v1739, %v1735
    %v1742 = vadd.f32 %v1733, %v1741
    %s1743 = scalar_lea.vmem %s0, 48
    %v1744 = vld [vmem:[%s1743] sm:$0xf]
    %v1745 = vrot.slane %v30, 3
    %s1746 = vtos %v1745
    %v1747 = vstv %s1746
    %v1749 = vmul.f32 %v1747, %v1744
    %v1750 = vadd.f32 %v1742, %v1749
    %s1751 = scalar_lea.vmem %s0, 52
    %v1752 = vld [vmem:[%s1751] sm:$0xf]
    %1753 = vrot.lane.b32.xlu0 %v1745, 127
    %v1754 = vpop.permute.xlu0 %1753
    %s1755 = vtos %v1754
    %v1756 = vstv %s1755
    %v1758 = vmul.f32 %v1756, %v1752
    %v1759 = vadd.f32 %v1750, %v1758
    %s1760 = scalar_lea.vmem %s0, 56
    %v1761 = vld [vmem:[%s1760] sm:$0xf]
    %1762 = vrot.lane.b32.xlu0 %v1745, 126
    %v1763 = vpop.permute.xlu0 %1762
    %s1764 = vtos %v1763
    %v1765 = vstv %s1764
    %v1767 = vmul.f32 %v1765, %v1761
    %v1768 = vadd.f32 %v1759, %v1767
    %s1769 = scalar_lea.vmem %s0, 60
    %v1770 = vld [vmem:[%s1769] sm:$0xf]
    %1771 = vrot.lane.b32.xlu0 %v1745, 125
    %v1772 = vpop.permute.xlu0 %1771
    %s1773 = vtos %v1772
    %v1774 = vstv %s1773
    %v1776 = vmul.f32 %v1774, %v1770
    %v1777 = vadd.f32 %v1768, %v1776
    %v1778 = vadd.f32 %v15, %v1777
    %v1779 = vadd.f32 %v15, %v1778
    %v1780 = vmul.f32 %v30, %v1779
    %vm1781 = vcmask 27648
    %v1782 = vsel %vm1781, %v1780, 0.0
    %1783 = vadd.xlane.f32.xlu0 %v1782
    %v1784 = vpop.xlane.xlu0 %1783
    %v1785 = vrot.slane %v1784, 4
    %v1786 = vadd.f32 %v1784, %v1785
    %v1787 = vrot.slane %v1786, 2
    %v1788 = vadd.f32 %v1786, %v1787
    %v1789 = vrot.slane %v1788, 1
    %v1790 = vadd.f32 %v1788, %v1789
    %s1791 = vtos %v1790
    %s1792 = smul.f32 %s1791, 0.5
    %s1793 = scalar_lea.smem [#allocation2], 0
    %1794 = sst [smem:[%s1793]] %s1792
    // Predicated region
    $region28: #{hf_energy.1} parent=1 // pred_check
      _
    $region29: #{hf_energy.1} parent=1 // pred_check_branch
      %1796 = sbr.rel (0) target = $region31
    $region30: #{hf_energy.1} parent=1 // pred_region
      %1798 = vsyncadd [#allocation3], 0
      %s1800 = sshll.u32 %s3, 4
      %s1801 = int_to_ptr.hbm [resolvable:$true] %s1800
      %1803 = dma.smem_to_hbm [#allocation2], 16, %s1801, [#allocation3]
    $region31: #{hf_energy.1} parent=1 // pred_fallthru
      _
    // Predicated region
    $region32: #{hf_energy.1} parent=1 // pred_check
      _
    $region33: #{hf_energy.1} parent=1 // pred_check_branch
      %1805 = sbr.rel (0) target = $region35
    $region34: #{hf_energy.1} parent=1 // pred_region
      %1807 = dma.done [#allocation3], 16
    $region35: #{hf_energy.1} parent=1 // pred_fallthru
      _
    %1808 = sfence
    %1809 = vsyncpa [#allocation3], 1

</llo_original>
